<compile_context>
chip_gen: v7x
topology: tpu7x:2x2x1
jax: 0.10.0
libtpu: 0.0.40
codegen_flags: <defaults>
</compile_context>

<pallas_src>
import math

import jax
import jax.numpy as jnp
from jax import lax
from jax.experimental import pallas as pl
from jax.experimental.pallas import tpu as pltpu

# ---- small, deterministic hyper-parameters (mirror the `opt` object) ----
BATCH = 2          # batch size
NUM_FRAMES = 8     # T, number of video frames
FRAME_SIZE = 32    # per-frame feature size
PROJECTED = 16     # opt.projected_size
HIDDEN = 32        # opt.hidden_size
NUM_WORDS = 8      # opt.num_words
VOCAB = 16         # len(vocab)
START_ID = 1       # vocab('<start>')


def lm_kernel(video_ref,
              enc_w_ref, enc_b_ref, key_w_ref, key_b_ref,
              init_w1_ref, init_b1_ref, init_w2_ref, init_b2_ref,
              ah_w_ref, ah_b_ref, aa_w_ref, aa_b_ref,
              gate_w_ref, gate_b_ref,
              embed_ref, out_w_ref, out_b_ref,
              logits_ref, atten_ref):
    B, T, F = BATCH, NUM_FRAMES, FRAME_SIZE
    P, H, Vv, W = PROJECTED, HIDDEN, VOCAB, NUM_WORDS
    f32 = jnp.float32

    # -------- Encoder: per-frame projection + attention keys (vs_) --------
    vid = video_ref[...]                                            # (B*T, F), reshaped in wrapper
    v = jnp.tanh(jnp.dot(vid, enc_w_ref[...], preferred_element_type=f32) + enc_b_ref[...])
    vs = jnp.dot(v, key_w_ref[...], preferred_element_type=f32) + key_b_ref[...]
    v3 = v.reshape(B, T, P)
    vs3 = vs.reshape(B, T, P)

    # -------- _init_lstm_state: fused (h0 | c0) triple-tanh MLP --------
    # layer 1: column-concatenated [ih_w1 | ic_w1]; layer 2: block-diag [ih_w2, ic_w2].
    mean_v = jnp.mean(v3, axis=1)                                   # (B, P)
    hc = jnp.tanh(jnp.dot(mean_v, init_w1_ref[...], preferred_element_type=f32) + init_b1_ref[...])
    hc = jnp.tanh(jnp.dot(hc, init_w2_ref[...], preferred_element_type=f32) + init_b2_ref[...])
    hc = jnp.tanh(hc)                                               # outer F.tanh
    h = hc[:, :H]
    c = hc[:, H:]

    # -------- hoist all loop-invariant weight/bias loads out of the decode loop --------
    ah_w = ah_w_ref[...]                                            # (H, P)
    ah_b = ah_b_ref[...]                                            # (1, P)
    aa_w = aa_w_ref[...].reshape(1, 1, P)                           # (1,1,P) for VPU broadcast
    aa_b = aa_b_ref[...]                                            # (1, 1)
    gate_w = gate_w_ref[...]                                        # (P+H, 4H) fused [w_ih; w_hh]
    gate_b = gate_b_ref[...]                                        # (1, 4H)   = b_ih + b_hh
    out_w = out_w_ref[...]                                          # (H, Vocab)
    out_b = out_b_ref[...]                                          # (1, Vocab)
    embed = embed_ref[...]                                          # (Vocab, P)

    word = jnp.broadcast_to(embed[START_ID][None, :], (B, P))       # <start> embedding
    iota_v = lax.broadcasted_iota(jnp.int32, (B, Vv), 1)

    # -------- fully unrolled greedy decode (W = 8 steps) --------
    for i in range(W):
        # ---- AttentionLayer: additive attention over frames ----
        # scoring matvec done as VPU multiply + lane reduce (no N=1 MXU matmul, no reshape)
        q = jnp.dot(h, ah_w, preferred_element_type=f32) + ah_b     # (B, P)
        scores = jnp.tanh(q[:, None, :] + vs3)                      # (B, T, P)
        e = jnp.sum(scores * aa_w, axis=-1) + aa_b                  # (B, T)
        e = e - jnp.max(e, axis=-1, keepdims=True)
        pexp = jnp.exp(e)
        a = pexp / jnp.sum(pexp, axis=-1, keepdims=True)            # softmax
        atten_ref[i] = a
        ctx = jnp.sum(a[:, :, None] * v3, axis=1)                   # bmm(a.unsqueeze(1), v)

        # ---- torch.nn.LSTMCell, fused single matmul, gate order [i, f, g, o] ----
        th = jnp.concatenate([word + ctx, h], axis=-1)              # (B, P+H)
        gates = jnp.dot(th, gate_w, preferred_element_type=f32) + gate_b
        ig = jax.nn.sigmoid(gates[:, 0:H])
        fg = jax.nn.sigmoid(gates[:, H:2 * H])
        gg = jnp.tanh(gates[:, 2 * H:3 * H])
        og = jax.nn.sigmoid(gates[:, 3 * H:4 * H])
        c = fg * c + ig * gg
        h = og * jnp.tanh(c)

        # ---- vocab logits + greedy next word (ss_prob = 0.0 => never teacher-force) ----
        logits = jnp.dot(h, out_w, preferred_element_type=f32) + out_b
        logits_ref[i] = logits
        maxv = jnp.max(logits, axis=-1, keepdims=True)
        wid = jnp.min(jnp.where(logits == maxv, iota_v, Vv), axis=-1, keepdims=True)  # first argmax
        onehot = (iota_v == wid).astype(f32)
        word = jnp.dot(onehot, embed, preferred_element_type=f32)   # embedding gather


@jax.jit
def language_model_forward(video_feats, params, captions=None):
    # captions only influence the data-dependent early break / teacher forcing in PyTorch;
    # with ss_prob = 0.0 they do not affect the computed logits.
    # TODO(synk): data-dependent loop break on `captions[:, i].sum() == 0` has no static
    # Pallas equivalent; we always run num_words steps.
    del captions
    B, T, F = video_feats.shape
    H = HIDDEN
    zeros_hh = jnp.zeros((H, H), jnp.float32)

    # ---- XLA-side (metadata-cheap) weight fusion / reshapes ----
    video2d = video_feats.reshape(B * T, F)
    init_w1 = jnp.concatenate([params["ih_w1"], params["ic_w1"]], axis=1)       # (P, 2H)
    init_b1 = jnp.concatenate([params["ih_b1"], params["ic_b1"]], axis=1)       # (1, 2H)
    init_w2 = jnp.concatenate(
        [jnp.concatenate([params["ih_w2"], zeros_hh], axis=1),
         jnp.concatenate([zeros_hh, params["ic_w2"]], axis=1)], axis=0)         # (2H, 2H) block-diag
    init_b2 = jnp.concatenate([params["ih_b2"], params["ic_b2"]], axis=1)       # (1, 2H)
    aa_w_row = params["aa_w"].reshape(1, PROJECTED)                             # (1, P)
    gate_w = jnp.concatenate([params["w_ih"], params["w_hh"]], axis=0)          # (P+H, 4H)
    gate_b = params["b_ih"] + params["b_hh"]                                    # (1, 4H)

    args = [
        video2d,
        params["enc_w"], params["enc_b"], params["key_w"], params["key_b"],
        init_w1, init_b1, init_w2, init_b2,
        params["ah_w"], params["ah_b"], aa_w_row, params["aa_b"],
        gate_w, gate_b,
        params["embed"], params["out_w"], params["out_b"],
    ]
    logits_wbv, atten_wbt = pl.pallas_call(
        lm_kernel,
        out_shape=(
            jax.ShapeDtypeStruct((NUM_WORDS, BATCH, VOCAB), jnp.float32),
            jax.ShapeDtypeStruct((NUM_WORDS, BATCH, NUM_FRAMES), jnp.float32),
        ),
        in_specs=[pl.BlockSpec(memory_space=pltpu.MemorySpace.VMEM)] * len(args),
        out_specs=(
            pl.BlockSpec(memory_space=pltpu.MemorySpace.VMEM),
            pl.BlockSpec(memory_space=pltpu.MemorySpace.VMEM),
        ),
    )(*args)
    # kernel writes time-major (W, B, ...) so each per-step store is a static leading-axis
    # slice; transpose back to the PyTorch (B, num_words, ...) convention here (glue).
    return jnp.transpose(logits_wbv, (1, 0, 2)), jnp.transpose(atten_wbt, (1, 0, 2))


def init_params(key):
    P, H, F, Vv = PROJECTED, HIDDEN, FRAME_SIZE, VOCAB
    ks = jax.random.split(key, 23)

    def u(k, shape, a):
        return jax.random.uniform(k, shape, jnp.float32, -a, a)

    sF, sP, sH = 1.0 / math.sqrt(F), 1.0 / math.sqrt(P), 1.0 / math.sqrt(H)
    return dict(
        enc_w=u(ks[0], (F, P), sF),   enc_b=u(ks[1], (1, P), sF),
        key_w=u(ks[2], (P, P), sP),   key_b=u(ks[3], (1, P), sP),
        ih_w1=u(ks[4], (P, H), sP),   ih_b1=u(ks[5], (1, H), sP),
        ih_w2=u(ks[6], (H, H), sH),   ih_b2=u(ks[7], (1, H), sH),
        ic_w1=u(ks[8], (P, H), sP),   ic_b1=u(ks[9], (1, H), sP),
        ic_w2=u(ks[10], (H, H), sH),  ic_b2=u(ks[11], (1, H), sH),
        ah_w=u(ks[12], (H, P), sH),   ah_b=u(ks[13], (1, P), sH),
        aa_w=u(ks[14], (P, 1), sP),   aa_b=u(ks[15], (1, 1), sP),
        w_ih=u(ks[16], (P, 4 * H), sH), w_hh=u(ks[17], (H, 4 * H), sH),
        b_ih=u(ks[18], (1, 4 * H), sH), b_hh=u(ks[19], (1, 4 * H), sH),
        embed=u(ks[20], (Vv, P), 1.73),        # word_embed.weight.uniform_(-1.73, 1.73)
        out_w=u(ks[21], (H, Vv), 0.08),        # linear.weight.uniform_(-0.08, 0.08)
        out_b=jnp.zeros((1, Vv), jnp.float32), # linear.bias.zero_()
    )


def reference_forward(video_feats, p):
    """Pure-JAX reference implementing the same math (for verification)."""
    B, T, F = video_feats.shape
    P, H, Vv, W = PROJECTED, HIDDEN, VOCAB, NUM_WORDS
    v = jnp.tanh(video_feats.reshape(B * T, F) @ p["enc_w"] + p["enc_b"])
    vs = v @ p["key_w"] + p["key_b"]
    v3, vs3 = v.reshape(B, T, P), vs.reshape(B, T, P)
    mean_v = jnp.mean(v3, axis=1)

    def init_mlp(x, w1, b1, w2, b2):
        return jnp.tanh(jnp.tanh(jnp.tanh(x @ w1 + b1) @ w2 + b2))

    h = init_mlp(mean_v, p["ih_w1"], p["ih_b1"], p["ih_w2"], p["ih_b2"])
    c = init_mlp(mean_v, p["ic_w1"], p["ic_b1"], p["ic_w2"], p["ic_b2"])
    word = jnp.broadcast_to(p["embed"][START_ID][None, :], (B, P))
    iota = jnp.arange(Vv)[None, :]
    all_logits, all_att = [], []
    for _ in range(W):
        q = h @ p["ah_w"] + p["ah_b"]
        e = (jnp.tanh(q[:, None, :] + vs3).reshape(B * T, P) @ p["aa_w"]).reshape(B, T) + p["aa_b"]
        a = jax.nn.softmax(e, axis=-1)
        ctx = jnp.sum(a[:, :, None] * v3, axis=1)
        t = word + ctx
        gates = t @ p["w_ih"] + p["b_ih"] + h @ p["w_hh"] + p["b_hh"]
        ig, fg = jax.nn.sigmoid(gates[:, :H]), jax.nn.sigmoid(gates[:, H:2 * H])
        gg, og = jnp.tanh(gates[:, 2 * H:3 * H]), jax.nn.sigmoid(gates[:, 3 * H:])
        c = fg * c + ig * gg
        h = og * jnp.tanh(c)
        logits = h @ p["out_w"] + p["out_b"]
        maxv = jnp.max(logits, axis=-1, keepdims=True)
        wid = jnp.min(jnp.where(logits == maxv, iota, Vv), axis=-1, keepdims=True)
        word = ((iota == wid).astype(jnp.float32)) @ p["embed"]
        all_logits.append(logits)
        all_att.append(a)
    return jnp.stack(all_logits, axis=1), jnp.stack(all_att, axis=1)


if __name__ == "__main__":
    key = jax.random.PRNGKey(0)
    pkey, vkey, ckey = jax.random.split(key, 3)
    params = init_params(pkey)
    video_feats = jax.random.normal(vkey, (BATCH, NUM_FRAMES, FRAME_SIZE), jnp.float32)
    captions = jax.random.randint(ckey, (BATCH, NUM_WORDS), 1, VOCAB)  # API parity only

    logits, attens = language_model_forward(video_feats, params, captions)
    jax.block_until_ready((logits, attens))

    assert logits.shape == (BATCH, NUM_WORDS, VOCAB)
    assert attens.shape == (BATCH, NUM_WORDS, NUM_FRAMES)

    ref_logits, ref_attens = reference_forward(video_feats, params)
    assert jnp.allclose(logits, ref_logits, atol=1e-3, rtol=1e-3), "logits mismatch vs reference"
    assert jnp.allclose(attens, ref_attens, atol=1e-3, rtol=1e-3), "attention mismatch vs reference"

    print("KERNEL_OK")
</pallas_src>

<mosaic_0001>
module attributes {stable_mosaic.version = 11 : i64} {
  func.func @lm_kernel(%arg0: memref<16x32xf32, #tpu.memory_space<vmem>>, %arg1: memref<32x16xf32, #tpu.memory_space<vmem>>, %arg2: memref<1x16xf32, #tpu.memory_space<vmem>>, %arg3: memref<16x16xf32, #tpu.memory_space<vmem>>, %arg4: memref<1x16xf32, #tpu.memory_space<vmem>>, %arg5: memref<16x64xf32, #tpu.memory_space<vmem>>, %arg6: memref<1x64xf32, #tpu.memory_space<vmem>>, %arg7: memref<64x64xf32, #tpu.memory_space<vmem>>, %arg8: memref<1x64xf32, #tpu.memory_space<vmem>>, %arg9: memref<32x16xf32, #tpu.memory_space<vmem>>, %arg10: memref<1x16xf32, #tpu.memory_space<vmem>>, %arg11: memref<1x16xf32, #tpu.memory_space<vmem>>, %arg12: memref<1x1xf32, #tpu.memory_space<vmem>>, %arg13: memref<48x128xf32, #tpu.memory_space<vmem>>, %arg14: memref<1x128xf32, #tpu.memory_space<vmem>>, %arg15: memref<16x16xf32, #tpu.memory_space<vmem>>, %arg16: memref<32x16xf32, #tpu.memory_space<vmem>>, %arg17: memref<1x16xf32, #tpu.memory_space<vmem>>, %arg18: memref<8x2x16xf32, #tpu.memory_space<vmem>>, %arg19: memref<8x2x8xf32, #tpu.memory_space<vmem>>) attributes {dimension_semantics = [], scalar_prefetch = 0 : i64, scratch_operands = 0 : i64, tpu.core_type = #tpu.core_type<tc>} {
    %c0 = arith.constant 0 : index
    %c0_0 = arith.constant 0 : index
    %0 = vector.load %arg0[%c0, %c0_0] : memref<16x32xf32, #tpu.memory_space<vmem>>, vector<16x32xf32>
    %c0_1 = arith.constant 0 : index
    %c0_2 = arith.constant 0 : index
    %1 = vector.load %arg1[%c0_1, %c0_2] : memref<32x16xf32, #tpu.memory_space<vmem>>, vector<32x16xf32>
    %cst = arith.constant dense<0.000000e+00> : vector<16x16xf32>
    %2 = tpu.matmul %0, %1, %cst {dimension_numbers = #tpu.dot_dimension_numbers<[1], [0], [0], [1], [0, 0, 1, 1], [], []>} : vector<16x32xf32>, vector<32x16xf32>, vector<16x16xf32> -> vector<16x16xf32>
    %c0_3 = arith.constant 0 : index
    %c0_4 = arith.constant 0 : index
    %3 = vector.load %arg2[%c0_3, %c0_4] : memref<1x16xf32, #tpu.memory_space<vmem>>, vector<1x16xf32>
    %4 = vector.broadcast %3 : vector<1x16xf32> to vector<16x16xf32>
    %5 = arith.addf %2, %4 : vector<16x16xf32>
    %6 = math.tanh %5 : vector<16x16xf32>
    %c0_5 = arith.constant 0 : index
    %c0_6 = arith.constant 0 : index
    %7 = vector.load %arg3[%c0_5, %c0_6] : memref<16x16xf32, #tpu.memory_space<vmem>>, vector<16x16xf32>
    %cst_7 = arith.constant dense<0.000000e+00> : vector<16x16xf32>
    %8 = tpu.matmul %6, %7, %cst_7 {dimension_numbers = #tpu.dot_dimension_numbers<[1], [0], [0], [1], [0, 0, 1, 1], [], []>} : vector<16x16xf32>, vector<16x16xf32>, vector<16x16xf32> -> vector<16x16xf32>
    %c0_8 = arith.constant 0 : index
    %c0_9 = arith.constant 0 : index
    %9 = vector.load %arg4[%c0_8, %c0_9] : memref<1x16xf32, #tpu.memory_space<vmem>>, vector<1x16xf32>
    %10 = vector.broadcast %9 : vector<1x16xf32> to vector<16x16xf32>
    %11 = arith.addf %8, %10 : vector<16x16xf32>
    %12 = vector.shape_cast %6 : vector<16x16xf32> to vector<2x8x16xf32>
    %13 = vector.shape_cast %11 : vector<16x16xf32> to vector<2x8x16xf32>
    %cst_10 = arith.constant dense<0.000000e+00> : vector<2x16xf32>
    %14 = vector.multi_reduction <add>, %12, %cst_10 [1] : vector<2x8x16xf32> to vector<2x16xf32>
    %cst_11 = arith.constant 8.000000e+00 : f32
    %15 = vector.broadcast %cst_11 : f32 to vector<2x16xf32>
    %16 = arith.divf %14, %15 : vector<2x16xf32>
    %c0_12 = arith.constant 0 : index
    %c0_13 = arith.constant 0 : index
    %17 = vector.load %arg5[%c0_12, %c0_13] : memref<16x64xf32, #tpu.memory_space<vmem>>, vector<16x64xf32>
    %cst_14 = arith.constant dense<0.000000e+00> : vector<2x64xf32>
    %18 = tpu.matmul %16, %17, %cst_14 {dimension_numbers = #tpu.dot_dimension_numbers<[1], [0], [0], [1], [0, 0, 1, 1], [], []>} : vector<2x16xf32>, vector<16x64xf32>, vector<2x64xf32> -> vector<2x64xf32>
    %c0_15 = arith.constant 0 : index
    %c0_16 = arith.constant 0 : index
    %19 = vector.load %arg6[%c0_15, %c0_16] : memref<1x64xf32, #tpu.memory_space<vmem>>, vector<1x64xf32>
    %20 = vector.broadcast %19 : vector<1x64xf32> to vector<2x64xf32>
    %21 = arith.addf %18, %20 : vector<2x64xf32>
    %22 = math.tanh %21 : vector<2x64xf32>
    %c0_17 = arith.constant 0 : index
    %c0_18 = arith.constant 0 : index
    %23 = vector.load %arg7[%c0_17, %c0_18] : memref<64x64xf32, #tpu.memory_space<vmem>>, vector<64x64xf32>
    %cst_19 = arith.constant dense<0.000000e+00> : vector<2x64xf32>
    %24 = tpu.matmul %22, %23, %cst_19 {dimension_numbers = #tpu.dot_dimension_numbers<[1], [0], [0], [1], [0, 0, 1, 1], [], []>} : vector<2x64xf32>, vector<64x64xf32>, vector<2x64xf32> -> vector<2x64xf32>
    %c0_20 = arith.constant 0 : index
    %c0_21 = arith.constant 0 : index
    %25 = vector.load %arg8[%c0_20, %c0_21] : memref<1x64xf32, #tpu.memory_space<vmem>>, vector<1x64xf32>
    %26 = vector.broadcast %25 : vector<1x64xf32> to vector<2x64xf32>
    %27 = arith.addf %24, %26 : vector<2x64xf32>
    %28 = math.tanh %27 : vector<2x64xf32>
    %29 = math.tanh %28 : vector<2x64xf32>
    %30 = vector.extract_strided_slice %29 {offsets = [0, 0], sizes = [2, 32], strides = [1, 1]} : vector<2x64xf32> to vector<2x32xf32>
    %31 = vector.extract_strided_slice %29 {offsets = [0, 32], sizes = [2, 32], strides = [1, 1]} : vector<2x64xf32> to vector<2x32xf32>
    %c0_22 = arith.constant 0 : index
    %c0_23 = arith.constant 0 : index
    %32 = vector.load %arg9[%c0_22, %c0_23] : memref<32x16xf32, #tpu.memory_space<vmem>>, vector<32x16xf32>
    %c0_24 = arith.constant 0 : index
    %c0_25 = arith.constant 0 : index
    %33 = vector.load %arg10[%c0_24, %c0_25] : memref<1x16xf32, #tpu.memory_space<vmem>>, vector<1x16xf32>
    %c0_26 = arith.constant 0 : index
    %c0_27 = arith.constant 0 : index
    %34 = vector.load %arg11[%c0_26, %c0_27] : memref<1x16xf32, #tpu.memory_space<vmem>>, vector<1x16xf32>
    %35 = vector.shape_cast %34 : vector<1x16xf32> to vector<1x1x16xf32>
    %c0_28 = arith.constant 0 : index
    %c0_29 = arith.constant 0 : index
    %36 = vector.load %arg12[%c0_28, %c0_29] : memref<1x1xf32, #tpu.memory_space<vmem>>, vector<1x1xf32>
    %c0_30 = arith.constant 0 : index
    %c0_31 = arith.constant 0 : index
    %37 = vector.load %arg13[%c0_30, %c0_31] : memref<48x128xf32, #tpu.memory_space<vmem>>, vector<48x128xf32>
    %c0_32 = arith.constant 0 : index
    %c0_33 = arith.constant 0 : index
    %38 = vector.load %arg14[%c0_32, %c0_33] : memref<1x128xf32, #tpu.memory_space<vmem>>, vector<1x128xf32>
    %c0_34 = arith.constant 0 : index
    %c0_35 = arith.constant 0 : index
    %39 = vector.load %arg16[%c0_34, %c0_35] : memref<32x16xf32, #tpu.memory_space<vmem>>, vector<32x16xf32>
    %c0_36 = arith.constant 0 : index
    %c0_37 = arith.constant 0 : index
    %40 = vector.load %arg17[%c0_36, %c0_37] : memref<1x16xf32, #tpu.memory_space<vmem>>, vector<1x16xf32>
    %c0_38 = arith.constant 0 : index
    %c0_39 = arith.constant 0 : index
    %41 = vector.load %arg15[%c0_38, %c0_39] : memref<16x16xf32, #tpu.memory_space<vmem>>, vector<16x16xf32>
    %42 = vector.extract_strided_slice %41 {offsets = [1, 0], sizes = [1, 16], strides = [1, 1]} : vector<16x16xf32> to vector<1x16xf32>
    %43 = vector.shape_cast %42 : vector<1x16xf32> to vector<16xf32>
    %44 = vector.shape_cast %43 : vector<16xf32> to vector<1x16xf32>
    %45 = vector.shape_cast %44 : vector<1x16xf32> to vector<1x16xf32>
    %46 = vector.broadcast %45 : vector<1x16xf32> to vector<2x16xf32>
    %47 = tpu.iota {dimensions = array<i32: 1>} : vector<2x16xi32>
    %cst_40 = arith.constant dense<0.000000e+00> : vector<2x16xf32>
    %48 = tpu.matmul %30, %32, %cst_40 {dimension_numbers = #tpu.dot_dimension_numbers<[1], [0], [0], [1], [0, 0, 1, 1], [], []>} : vector<2x32xf32>, vector<32x16xf32>, vector<2x16xf32> -> vector<2x16xf32>
    %49 = vector.broadcast %33 : vector<1x16xf32> to vector<2x16xf32>
    %50 = arith.addf %48, %49 : vector<2x16xf32>
    %51 = vector.shape_cast %50 : vector<2x16xf32> to vector<2x1x16xf32>
    %52 = vector.broadcast %51 : vector<2x1x16xf32> to vector<2x8x16xf32>
    %53 = arith.addf %52, %13 : vector<2x8x16xf32>
    %54 = math.tanh %53 : vector<2x8x16xf32>
    %55 = vector.broadcast %35 : vector<1x1x16xf32> to vector<2x8x16xf32>
    %56 = arith.mulf %54, %55 : vector<2x8x16xf32>
    %cst_41 = arith.constant dense<0.000000e+00> : vector<2x8xf32>
    %57 = vector.multi_reduction <add>, %56, %cst_41 [2] : vector<2x8x16xf32> to vector<2x8xf32>
    %58 = vector.broadcast %36 : vector<1x1xf32> to vector<2x8xf32>
    %59 = arith.addf %57, %58 : vector<2x8xf32>
    %cst_42 = arith.constant dense<0xFF800000> : vector<2xf32>
    %60 = vector.multi_reduction <maximumf>, %59, %cst_42 [1] : vector<2x8xf32> to vector<2xf32>
    %61 = vector.shape_cast %60 : vector<2xf32> to vector<2x1xf32>
    %62 = vector.broadcast %61 : vector<2x1xf32> to vector<2x8xf32>
    %63 = arith.subf %59, %62 : vector<2x8xf32>
    %64 = math.exp %63 : vector<2x8xf32>
    %cst_43 = arith.constant dense<0.000000e+00> : vector<2xf32>
    %65 = vector.multi_reduction <add>, %64, %cst_43 [1] : vector<2x8xf32> to vector<2xf32>
    %66 = vector.shape_cast %65 : vector<2xf32> to vector<2x1xf32>
    %67 = vector.broadcast %66 : vector<2x1xf32> to vector<2x8xf32>
    %68 = arith.divf %64, %67 : vector<2x8xf32>
    %c0_44 = arith.constant 0 : index
    %c0_45 = arith.constant 0 : index
    %c0_46 = arith.constant 0 : index
    %69 = vector.load %arg19[%c0_44, %c0_45, %c0_46] : memref<8x2x8xf32, #tpu.memory_space<vmem>>, vector<1x2x8xf32>
    %70 = vector.shape_cast %69 : vector<1x2x8xf32> to vector<2x8xf32>
    %71 = vector.shape_cast %68 : vector<2x8xf32> to vector<1x2x8xf32>
    tpu.vector_store %arg19[%c0_44, %c0_45, %c0_46], %71 {strides = array<i32>} : memref<8x2x8xf32, #tpu.memory_space<vmem>>, vector<1x2x8xf32>,
    %72 = vector.shape_cast %68 : vector<2x8xf32> to vector<2x8x1xf32>
    %73 = vector.broadcast %72 : vector<2x8x1xf32> to vector<2x8x16xf32>
    %74 = arith.mulf %73, %12 : vector<2x8x16xf32>
    %cst_47 = arith.constant dense<0.000000e+00> : vector<2x16xf32>
    %75 = vector.multi_reduction <add>, %74, %cst_47 [1] : vector<2x8x16xf32> to vector<2x16xf32>
    %76 = arith.addf %46, %75 : vector<2x16xf32>
    %77 = tpu.concatenate %76, %30 in 1 : vector<2x16xf32>, vector<2x32xf32> -> vector<2x48xf32>
    %cst_48 = arith.constant dense<0.000000e+00> : vector<2x128xf32>
    %78 = tpu.matmul %77, %37, %cst_48 {dimension_numbers = #tpu.dot_dimension_numbers<[1], [0], [0], [1], [0, 0, 1, 1], [], []>} : vector<2x48xf32>, vector<48x128xf32>, vector<2x128xf32> -> vector<2x128xf32>
    %79 = vector.broadcast %38 : vector<1x128xf32> to vector<2x128xf32>
    %80 = arith.addf %78, %79 : vector<2x128xf32>
    %81 = vector.extract_strided_slice %80 {offsets = [0, 0], sizes = [2, 32], strides = [1, 1]} : vector<2x128xf32> to vector<2x32xf32>
    %82 = arith.negf %81 : vector<2x32xf32>
    %83 = math.exp %82 : vector<2x32xf32>
    %cst_49 = arith.constant 1.000000e+00 : f32
    %84 = vector.broadcast %cst_49 : f32 to vector<2x32xf32>
    %85 = arith.addf %84, %83 : vector<2x32xf32>
    %86 = arith.divf %84, %85 : vector<2x32xf32>
    %87 = vector.extract_strided_slice %80 {offsets = [0, 32], sizes = [2, 32], strides = [1, 1]} : vector<2x128xf32> to vector<2x32xf32>
    %88 = arith.negf %87 : vector<2x32xf32>
    %89 = math.exp %88 : vector<2x32xf32>
    %cst_50 = arith.constant 1.000000e+00 : f32
    %90 = vector.broadcast %cst_50 : f32 to vector<2x32xf32>
    %91 = arith.addf %90, %89 : vector<2x32xf32>
    %92 = arith.divf %90, %91 : vector<2x32xf32>
    %93 = vector.extract_strided_slice %80 {offsets = [0, 64], sizes = [2, 32], strides = [1, 1]} : vector<2x128xf32> to vector<2x32xf32>
    %94 = math.tanh %93 : vector<2x32xf32>
    %95 = vector.extract_strided_slice %80 {offsets = [0, 96], sizes = [2, 32], strides = [1, 1]} : vector<2x128xf32> to vector<2x32xf32>
    %96 = arith.negf %95 : vector<2x32xf32>
    %97 = math.exp %96 : vector<2x32xf32>
    %cst_51 = arith.constant 1.000000e+00 : f32
    %98 = vector.broadcast %cst_51 : f32 to vector<2x32xf32>
    %99 = arith.addf %98, %97 : vector<2x32xf32>
    %100 = arith.divf %98, %99 : vector<2x32xf32>
    %101 = arith.mulf %92, %31 : vector<2x32xf32>
    %102 = arith.mulf %86, %94 : vector<2x32xf32>
    %103 = arith.addf %101, %102 : vector<2x32xf32>
    %104 = math.tanh %103 : vector<2x32xf32>
    %105 = arith.mulf %100, %104 : vector<2x32xf32>
    %cst_52 = arith.constant dense<0.000000e+00> : vector<2x16xf32>
    %106 = tpu.matmul %105, %39, %cst_52 {dimension_numbers = #tpu.dot_dimension_numbers<[1], [0], [0], [1], [0, 0, 1, 1], [], []>} : vector<2x32xf32>, vector<32x16xf32>, vector<2x16xf32> -> vector<2x16xf32>
    %107 = vector.broadcast %40 : vector<1x16xf32> to vector<2x16xf32>
    %108 = arith.addf %106, %107 : vector<2x16xf32>
    %c0_53 = arith.constant 0 : index
    %c0_54 = arith.constant 0 : index
    %c0_55 = arith.constant 0 : index
    %109 = vector.load %arg18[%c0_53, %c0_54, %c0_55] : memref<8x2x16xf32, #tpu.memory_space<vmem>>, vector<1x2x16xf32>
    %110 = vector.shape_cast %109 : vector<1x2x16xf32> to vector<2x16xf32>
    %111 = vector.shape_cast %108 : vector<2x16xf32> to vector<1x2x16xf32>
    tpu.vector_store %arg18[%c0_53, %c0_54, %c0_55], %111 {strides = array<i32>} : memref<8x2x16xf32, #tpu.memory_space<vmem>>, vector<1x2x16xf32>,
    %cst_56 = arith.constant dense<0xFF800000> : vector<2xf32>
    %112 = vector.multi_reduction <maximumf>, %108, %cst_56 [1] : vector<2x16xf32> to vector<2xf32>
    %113 = vector.shape_cast %112 : vector<2xf32> to vector<2x1xf32>
    %114 = vector.broadcast %113 : vector<2x1xf32> to vector<2x16xf32>
    %115 = arith.cmpf oeq, %108, %114 : vector<2x16xf32>
    %c16_i32 = arith.constant 16 : i32
    %116 = vector.broadcast %c16_i32 : i32 to vector<2x16xi32>
    %117 = arith.select %115, %47, %116 : vector<2x16xi1>, vector<2x16xi32>
    %cst_57 = arith.constant dense<2147483647> : vector<2xi32>
    %118 = vector.multi_reduction <minsi>, %117, %cst_57 [1] : vector<2x16xi32> to vector<2xi32>
    %119 = vector.shape_cast %118 : vector<2xi32> to vector<2x1xi32>
    %120 = vector.broadcast %119 : vector<2x1xi32> to vector<2x16xi32>
    %121 = arith.cmpi eq, %47, %120 : vector<2x16xi32>
    %122 = arith.extui %121 : vector<2x16xi1> to vector<2x16xi32>
    %123 = arith.sitofp %122 : vector<2x16xi32> to vector<2x16xf32>
    %cst_58 = arith.constant dense<0.000000e+00> : vector<2x16xf32>
    %124 = tpu.matmul %123, %41, %cst_58 {dimension_numbers = #tpu.dot_dimension_numbers<[1], [0], [0], [1], [0, 0, 1, 1], [], []>} : vector<2x16xf32>, vector<16x16xf32>, vector<2x16xf32> -> vector<2x16xf32>
    %cst_59 = arith.constant dense<0.000000e+00> : vector<2x16xf32>
    %125 = tpu.matmul %105, %32, %cst_59 {dimension_numbers = #tpu.dot_dimension_numbers<[1], [0], [0], [1], [0, 0, 1, 1], [], []>} : vector<2x32xf32>, vector<32x16xf32>, vector<2x16xf32> -> vector<2x16xf32>
    %126 = vector.broadcast %33 : vector<1x16xf32> to vector<2x16xf32>
    %127 = arith.addf %125, %126 : vector<2x16xf32>
    %128 = vector.shape_cast %127 : vector<2x16xf32> to vector<2x1x16xf32>
    %129 = vector.broadcast %128 : vector<2x1x16xf32> to vector<2x8x16xf32>
    %130 = arith.addf %129, %13 : vector<2x8x16xf32>
    %131 = math.tanh %130 : vector<2x8x16xf32>
    %132 = vector.broadcast %35 : vector<1x1x16xf32> to vector<2x8x16xf32>
    %133 = arith.mulf %131, %132 : vector<2x8x16xf32>
    %cst_60 = arith.constant dense<0.000000e+00> : vector<2x8xf32>
    %134 = vector.multi_reduction <add>, %133, %cst_60 [2] : vector<2x8x16xf32> to vector<2x8xf32>
    %135 = vector.broadcast %36 : vector<1x1xf32> to vector<2x8xf32>
    %136 = arith.addf %134, %135 : vector<2x8xf32>
    %cst_61 = arith.constant dense<0xFF800000> : vector<2xf32>
    %137 = vector.multi_reduction <maximumf>, %136, %cst_61 [1] : vector<2x8xf32> to vector<2xf32>
    %138 = vector.shape_cast %137 : vector<2xf32> to vector<2x1xf32>
    %139 = vector.broadcast %138 : vector<2x1xf32> to vector<2x8xf32>
    %140 = arith.subf %136, %139 : vector<2x8xf32>
    %141 = math.exp %140 : vector<2x8xf32>
    %cst_62 = arith.constant dense<0.000000e+00> : vector<2xf32>
    %142 = vector.multi_reduction <add>, %141, %cst_62 [1] : vector<2x8xf32> to vector<2xf32>
    %143 = vector.shape_cast %142 : vector<2xf32> to vector<2x1xf32>
    %144 = vector.broadcast %143 : vector<2x1xf32> to vector<2x8xf32>
    %145 = arith.divf %141, %144 : vector<2x8xf32>
    %c1 = arith.constant 1 : index
    %c0_63 = arith.constant 0 : index
    %c0_64 = arith.constant 0 : index
    %146 = vector.load %arg19[%c1, %c0_63, %c0_64] : memref<8x2x8xf32, #tpu.memory_space<vmem>>, vector<1x2x8xf32>
    %147 = vector.shape_cast %146 : vector<1x2x8xf32> to vector<2x8xf32>
    %148 = vector.shape_cast %145 : vector<2x8xf32> to vector<1x2x8xf32>
    tpu.vector_store %arg19[%c1, %c0_63, %c0_64], %148 {strides = array<i32>} : memref<8x2x8xf32, #tpu.memory_space<vmem>>, vector<1x2x8xf32>,
    %149 = vector.shape_cast %145 : vector<2x8xf32> to vector<2x8x1xf32>
    %150 = vector.broadcast %149 : vector<2x8x1xf32> to vector<2x8x16xf32>
    %151 = arith.mulf %150, %12 : vector<2x8x16xf32>
    %cst_65 = arith.constant dense<0.000000e+00> : vector<2x16xf32>
    %152 = vector.multi_reduction <add>, %151, %cst_65 [1] : vector<2x8x16xf32> to vector<2x16xf32>
    %153 = arith.addf %124, %152 : vector<2x16xf32>
    %154 = tpu.concatenate %153, %105 in 1 : vector<2x16xf32>, vector<2x32xf32> -> vector<2x48xf32>
    %cst_66 = arith.constant dense<0.000000e+00> : vector<2x128xf32>
    %155 = tpu.matmul %154, %37, %cst_66 {dimension_numbers = #tpu.dot_dimension_numbers<[1], [0], [0], [1], [0, 0, 1, 1], [], []>} : vector<2x48xf32>, vector<48x128xf32>, vector<2x128xf32> -> vector<2x128xf32>
    %156 = vector.broadcast %38 : vector<1x128xf32> to vector<2x128xf32>
    %157 = arith.addf %155, %156 : vector<2x128xf32>
    %158 = vector.extract_strided_slice %157 {offsets = [0, 0], sizes = [2, 32], strides = [1, 1]} : vector<2x128xf32> to vector<2x32xf32>
    %159 = arith.negf %158 : vector<2x32xf32>
    %160 = math.exp %159 : vector<2x32xf32>
    %cst_67 = arith.constant 1.000000e+00 : f32
    %161 = vector.broadcast %cst_67 : f32 to vector<2x32xf32>
    %162 = arith.addf %161, %160 : vector<2x32xf32>
    %163 = arith.divf %161, %162 : vector<2x32xf32>
    %164 = vector.extract_strided_slice %157 {offsets = [0, 32], sizes = [2, 32], strides = [1, 1]} : vector<2x128xf32> to vector<2x32xf32>
    %165 = arith.negf %164 : vector<2x32xf32>
    %166 = math.exp %165 : vector<2x32xf32>
    %cst_68 = arith.constant 1.000000e+00 : f32
    %167 = vector.broadcast %cst_68 : f32 to vector<2x32xf32>
    %168 = arith.addf %167, %166 : vector<2x32xf32>
    %169 = arith.divf %167, %168 : vector<2x32xf32>
    %170 = vector.extract_strided_slice %157 {offsets = [0, 64], sizes = [2, 32], strides = [1, 1]} : vector<2x128xf32> to vector<2x32xf32>
    %171 = math.tanh %170 : vector<2x32xf32>
    %172 = vector.extract_strided_slice %157 {offsets = [0, 96], sizes = [2, 32], strides = [1, 1]} : vector<2x128xf32> to vector<2x32xf32>
    %173 = arith.negf %172 : vector<2x32xf32>
    %174 = math.exp %173 : vector<2x32xf32>
    %cst_69 = arith.constant 1.000000e+00 : f32
    %175 = vector.broadcast %cst_69 : f32 to vector<2x32xf32>
    %176 = arith.addf %175, %174 : vector<2x32xf32>
    %177 = arith.divf %175, %176 : vector<2x32xf32>
    %178 = arith.mulf %169, %103 : vector<2x32xf32>
    %179 = arith.mulf %163, %171 : vector<2x32xf32>
    %180 = arith.addf %178, %179 : vector<2x32xf32>
    %181 = math.tanh %180 : vector<2x32xf32>
    %182 = arith.mulf %177, %181 : vector<2x32xf32>
    %cst_70 = arith.constant dense<0.000000e+00> : vector<2x16xf32>
    %183 = tpu.matmul %182, %39, %cst_70 {dimension_numbers = #tpu.dot_dimension_numbers<[1], [0], [0], [1], [0, 0, 1, 1], [], []>} : vector<2x32xf32>, vector<32x16xf32>, vector<2x16xf32> -> vector<2x16xf32>
    %184 = vector.broadcast %40 : vector<1x16xf32> to vector<2x16xf32>
    %185 = arith.addf %183, %184 : vector<2x16xf32>
    %c1_71 = arith.constant 1 : index
    %c0_72 = arith.constant 0 : index
    %c0_73 = arith.constant 0 : index
    %186 = vector.load %arg18[%c1_71, %c0_72, %c0_73] : memref<8x2x16xf32, #tpu.memory_space<vmem>>, vector<1x2x16xf32>
    %187 = vector.shape_cast %186 : vector<1x2x16xf32> to vector<2x16xf32>
    %188 = vector.shape_cast %185 : vector<2x16xf32> to vector<1x2x16xf32>
    tpu.vector_store %arg18[%c1_71, %c0_72, %c0_73], %188 {strides = array<i32>} : memref<8x2x16xf32, #tpu.memory_space<vmem>>, vector<1x2x16xf32>,
    %cst_74 = arith.constant dense<0xFF800000> : vector<2xf32>
    %189 = vector.multi_reduction <maximumf>, %185, %cst_74 [1] : vector<2x16xf32> to vector<2xf32>
    %190 = vector.shape_cast %189 : vector<2xf32> to vector<2x1xf32>
    %191 = vector.broadcast %190 : vector<2x1xf32> to vector<2x16xf32>
    %192 = arith.cmpf oeq, %185, %191 : vector<2x16xf32>
    %c16_i32_75 = arith.constant 16 : i32
    %193 = vector.broadcast %c16_i32_75 : i32 to vector<2x16xi32>
    %194 = arith.select %192, %47, %193 : vector<2x16xi1>, vector<2x16xi32>
    %cst_76 = arith.constant dense<2147483647> : vector<2xi32>
    %195 = vector.multi_reduction <minsi>, %194, %cst_76 [1] : vector<2x16xi32> to vector<2xi32>
    %196 = vector.shape_cast %195 : vector<2xi32> to vector<2x1xi32>
    %197 = vector.broadcast %196 : vector<2x1xi32> to vector<2x16xi32>
    %198 = arith.cmpi eq, %47, %197 : vector<2x16xi32>
    %199 = arith.extui %198 : vector<2x16xi1> to vector<2x16xi32>
    %200 = arith.sitofp %199 : vector<2x16xi32> to vector<2x16xf32>
    %cst_77 = arith.constant dense<0.000000e+00> : vector<2x16xf32>
    %201 = tpu.matmul %200, %41, %cst_77 {dimension_numbers = #tpu.dot_dimension_numbers<[1], [0], [0], [1], [0, 0, 1, 1], [], []>} : vector<2x16xf32>, vector<16x16xf32>, vector<2x16xf32> -> vector<2x16xf32>
    %cst_78 = arith.constant dense<0.000000e+00> : vector<2x16xf32>
    %202 = tpu.matmul %182, %32, %cst_78 {dimension_numbers = #tpu.dot_dimension_numbers<[1], [0], [0], [1], [0, 0, 1, 1], [], []>} : vector<2x32xf32>, vector<32x16xf32>, vector<2x16xf32> -> vector<2x16xf32>
    %203 = vector.broadcast %33 : vector<1x16xf32> to vector<2x16xf32>
    %204 = arith.addf %202, %203 : vector<2x16xf32>
    %205 = vector.shape_cast %204 : vector<2x16xf32> to vector<2x1x16xf32>
    %206 = vector.broadcast %205 : vector<2x1x16xf32> to vector<2x8x16xf32>
    %207 = arith.addf %206, %13 : vector<2x8x16xf32>
    %208 = math.tanh %207 : vector<2x8x16xf32>
    %209 = vector.broadcast %35 : vector<1x1x16xf32> to vector<2x8x16xf32>
    %210 = arith.mulf %208, %209 : vector<2x8x16xf32>
    %cst_79 = arith.constant dense<0.000000e+00> : vector<2x8xf32>
    %211 = vector.multi_reduction <add>, %210, %cst_79 [2] : vector<2x8x16xf32> to vector<2x8xf32>
    %212 = vector.broadcast %36 : vector<1x1xf32> to vector<2x8xf32>
    %213 = arith.addf %211, %212 : vector<2x8xf32>
    %cst_80 = arith.constant dense<0xFF800000> : vector<2xf32>
    %214 = vector.multi_reduction <maximumf>, %213, %cst_80 [1] : vector<2x8xf32> to vector<2xf32>
    %215 = vector.shape_cast %214 : vector<2xf32> to vector<2x1xf32>
    %216 = vector.broadcast %215 : vector<2x1xf32> to vector<2x8xf32>
    %217 = arith.subf %213, %216 : vector<2x8xf32>
    %218 = math.exp %217 : vector<2x8xf32>
    %cst_81 = arith.constant dense<0.000000e+00> : vector<2xf32>
    %219 = vector.multi_reduction <add>, %218, %cst_81 [1] : vector<2x8xf32> to vector<2xf32>
    %220 = vector.shape_cast %219 : vector<2xf32> to vector<2x1xf32>
    %221 = vector.broadcast %220 : vector<2x1xf32> to vector<2x8xf32>
    %222 = arith.divf %218, %221 : vector<2x8xf32>
    %c2 = arith.constant 2 : index
    %c0_82 = arith.constant 0 : index
    %c0_83 = arith.constant 0 : index
    %223 = vector.load %arg19[%c2, %c0_82, %c0_83] : memref<8x2x8xf32, #tpu.memory_space<vmem>>, vector<1x2x8xf32>
    %224 = vector.shape_cast %223 : vector<1x2x8xf32> to vector<2x8xf32>
    %225 = vector.shape_cast %222 : vector<2x8xf32> to vector<1x2x8xf32>
    tpu.vector_store %arg19[%c2, %c0_82, %c0_83], %225 {strides = array<i32>} : memref<8x2x8xf32, #tpu.memory_space<vmem>>, vector<1x2x8xf32>,
    %226 = vector.shape_cast %222 : vector<2x8xf32> to vector<2x8x1xf32>
    %227 = vector.broadcast %226 : vector<2x8x1xf32> to vector<2x8x16xf32>
    %228 = arith.mulf %227, %12 : vector<2x8x16xf32>
    %cst_84 = arith.constant dense<0.000000e+00> : vector<2x16xf32>
    %229 = vector.multi_reduction <add>, %228, %cst_84 [1] : vector<2x8x16xf32> to vector<2x16xf32>
    %230 = arith.addf %201, %229 : vector<2x16xf32>
    %231 = tpu.concatenate %230, %182 in 1 : vector<2x16xf32>, vector<2x32xf32> -> vector<2x48xf32>
    %cst_85 = arith.constant dense<0.000000e+00> : vector<2x128xf32>
    %232 = tpu.matmul %231, %37, %cst_85 {dimension_numbers = #tpu.dot_dimension_numbers<[1], [0], [0], [1], [0, 0, 1, 1], [], []>} : vector<2x48xf32>, vector<48x128xf32>, vector<2x128xf32> -> vector<2x128xf32>
    %233 = vector.broadcast %38 : vector<1x128xf32> to vector<2x128xf32>
    %234 = arith.addf %232, %233 : vector<2x128xf32>
    %235 = vector.extract_strided_slice %234 {offsets = [0, 0], sizes = [2, 32], strides = [1, 1]} : vector<2x128xf32> to vector<2x32xf32>
    %236 = arith.negf %235 : vector<2x32xf32>
    %237 = math.exp %236 : vector<2x32xf32>
    %cst_86 = arith.constant 1.000000e+00 : f32
    %238 = vector.broadcast %cst_86 : f32 to vector<2x32xf32>
    %239 = arith.addf %238, %237 : vector<2x32xf32>
    %240 = arith.divf %238, %239 : vector<2x32xf32>
    %241 = vector.extract_strided_slice %234 {offsets = [0, 32], sizes = [2, 32], strides = [1, 1]} : vector<2x128xf32> to vector<2x32xf32>
    %242 = arith.negf %241 : vector<2x32xf32>
    %243 = math.exp %242 : vector<2x32xf32>
    %cst_87 = arith.constant 1.000000e+00 : f32
    %244 = vector.broadcast %cst_87 : f32 to vector<2x32xf32>
    %245 = arith.addf %244, %243 : vector<2x32xf32>
    %246 = arith.divf %244, %245 : vector<2x32xf32>
    %247 = vector.extract_strided_slice %234 {offsets = [0, 64], sizes = [2, 32], strides = [1, 1]} : vector<2x128xf32> to vector<2x32xf32>
    %248 = math.tanh %247 : vector<2x32xf32>
    %249 = vector.extract_strided_slice %234 {offsets = [0, 96], sizes = [2, 32], strides = [1, 1]} : vector<2x128xf32> to vector<2x32xf32>
    %250 = arith.negf %249 : vector<2x32xf32>
    %251 = math.exp %250 : vector<2x32xf32>
    %cst_88 = arith.constant 1.000000e+00 : f32
    %252 = vector.broadcast %cst_88 : f32 to vector<2x32xf32>
    %253 = arith.addf %252, %251 : vector<2x32xf32>
    %254 = arith.divf %252, %253 : vector<2x32xf32>
    %255 = arith.mulf %246, %180 : vector<2x32xf32>
    %256 = arith.mulf %240, %248 : vector<2x32xf32>
    %257 = arith.addf %255, %256 : vector<2x32xf32>
    %258 = math.tanh %257 : vector<2x32xf32>
    %259 = arith.mulf %254, %258 : vector<2x32xf32>
    %cst_89 = arith.constant dense<0.000000e+00> : vector<2x16xf32>
    %260 = tpu.matmul %259, %39, %cst_89 {dimension_numbers = #tpu.dot_dimension_numbers<[1], [0], [0], [1], [0, 0, 1, 1], [], []>} : vector<2x32xf32>, vector<32x16xf32>, vector<2x16xf32> -> vector<2x16xf32>
    %261 = vector.broadcast %40 : vector<1x16xf32> to vector<2x16xf32>
    %262 = arith.addf %260, %261 : vector<2x16xf32>
    %c2_90 = arith.constant 2 : index
    %c0_91 = arith.constant 0 : index
    %c0_92 = arith.constant 0 : index
    %263 = vector.load %arg18[%c2_90, %c0_91, %c0_92] : memref<8x2x16xf32, #tpu.memory_space<vmem>>, vector<1x2x16xf32>
    %264 = vector.shape_cast %263 : vector<1x2x16xf32> to vector<2x16xf32>
    %265 = vector.shape_cast %262 : vector<2x16xf32> to vector<1x2x16xf32>
    tpu.vector_store %arg18[%c2_90, %c0_91, %c0_92], %265 {strides = array<i32>} : memref<8x2x16xf32, #tpu.memory_space<vmem>>, vector<1x2x16xf32>,
    %cst_93 = arith.constant dense<0xFF800000> : vector<2xf32>
    %266 = vector.multi_reduction <maximumf>, %262, %cst_93 [1] : vector<2x16xf32> to vector<2xf32>
    %267 = vector.shape_cast %266 : vector<2xf32> to vector<2x1xf32>
    %268 = vector.broadcast %267 : vector<2x1xf32> to vector<2x16xf32>
    %269 = arith.cmpf oeq, %262, %268 : vector<2x16xf32>
    %c16_i32_94 = arith.constant 16 : i32
    %270 = vector.broadcast %c16_i32_94 : i32 to vector<2x16xi32>
    %271 = arith.select %269, %47, %270 : vector<2x16xi1>, vector<2x16xi32>
    %cst_95 = arith.constant dense<2147483647> : vector<2xi32>
    %272 = vector.multi_reduction <minsi>, %271, %cst_95 [1] : vector<2x16xi32> to vector<2xi32>
    %273 = vector.shape_cast %272 : vector<2xi32> to vector<2x1xi32>
    %274 = vector.broadcast %273 : vector<2x1xi32> to vector<2x16xi32>
    %275 = arith.cmpi eq, %47, %274 : vector<2x16xi32>
    %276 = arith.extui %275 : vector<2x16xi1> to vector<2x16xi32>
    %277 = arith.sitofp %276 : vector<2x16xi32> to vector<2x16xf32>
    %cst_96 = arith.constant dense<0.000000e+00> : vector<2x16xf32>
    %278 = tpu.matmul %277, %41, %cst_96 {dimension_numbers = #tpu.dot_dimension_numbers<[1], [0], [0], [1], [0, 0, 1, 1], [], []>} : vector<2x16xf32>, vector<16x16xf32>, vector<2x16xf32> -> vector<2x16xf32>
    %cst_97 = arith.constant dense<0.000000e+00> : vector<2x16xf32>
    %279 = tpu.matmul %259, %32, %cst_97 {dimension_numbers = #tpu.dot_dimension_numbers<[1], [0], [0], [1], [0, 0, 1, 1], [], []>} : vector<2x32xf32>, vector<32x16xf32>, vector<2x16xf32> -> vector<2x16xf32>
    %280 = vector.broadcast %33 : vector<1x16xf32> to vector<2x16xf32>
    %281 = arith.addf %279, %280 : vector<2x16xf32>
    %282 = vector.shape_cast %281 : vector<2x16xf32> to vector<2x1x16xf32>
    %283 = vector.broadcast %282 : vector<2x1x16xf32> to vector<2x8x16xf32>
    %284 = arith.addf %283, %13 : vector<2x8x16xf32>
    %285 = math.tanh %284 : vector<2x8x16xf32>
    %286 = vector.broadcast %35 : vector<1x1x16xf32> to vector<2x8x16xf32>
    %287 = arith.mulf %285, %286 : vector<2x8x16xf32>
    %cst_98 = arith.constant dense<0.000000e+00> : vector<2x8xf32>
    %288 = vector.multi_reduction <add>, %287, %cst_98 [2] : vector<2x8x16xf32> to vector<2x8xf32>
    %289 = vector.broadcast %36 : vector<1x1xf32> to vector<2x8xf32>
    %290 = arith.addf %288, %289 : vector<2x8xf32>
    %cst_99 = arith.constant dense<0xFF800000> : vector<2xf32>
    %291 = vector.multi_reduction <maximumf>, %290, %cst_99 [1] : vector<2x8xf32> to vector<2xf32>
    %292 = vector.shape_cast %291 : vector<2xf32> to vector<2x1xf32>
    %293 = vector.broadcast %292 : vector<2x1xf32> to vector<2x8xf32>
    %294 = arith.subf %290, %293 : vector<2x8xf32>
    %295 = math.exp %294 : vector<2x8xf32>
    %cst_100 = arith.constant dense<0.000000e+00> : vector<2xf32>
    %296 = vector.multi_reduction <add>, %295, %cst_100 [1] : vector<2x8xf32> to vector<2xf32>
    %297 = vector.shape_cast %296 : vector<2xf32> to vector<2x1xf32>
    %298 = vector.broadcast %297 : vector<2x1xf32> to vector<2x8xf32>
    %299 = arith.divf %295, %298 : vector<2x8xf32>
    %c3 = arith.constant 3 : index
    %c0_101 = arith.constant 0 : index
    %c0_102 = arith.constant 0 : index
    %300 = vector.load %arg19[%c3, %c0_101, %c0_102] : memref<8x2x8xf32, #tpu.memory_space<vmem>>, vector<1x2x8xf32>
    %301 = vector.shape_cast %300 : vector<1x2x8xf32> to vector<2x8xf32>
    %302 = vector.shape_cast %299 : vector<2x8xf32> to vector<1x2x8xf32>
    tpu.vector_store %arg19[%c3, %c0_101, %c0_102], %302 {strides = array<i32>} : memref<8x2x8xf32, #tpu.memory_space<vmem>>, vector<1x2x8xf32>,
    %303 = vector.shape_cast %299 : vector<2x8xf32> to vector<2x8x1xf32>
    %304 = vector.broadcast %303 : vector<2x8x1xf32> to vector<2x8x16xf32>
    %305 = arith.mulf %304, %12 : vector<2x8x16xf32>
    %cst_103 = arith.constant dense<0.000000e+00> : vector<2x16xf32>
    %306 = vector.multi_reduction <add>, %305, %cst_103 [1] : vector<2x8x16xf32> to vector<2x16xf32>
    %307 = arith.addf %278, %306 : vector<2x16xf32>
    %308 = tpu.concatenate %307, %259 in 1 : vector<2x16xf32>, vector<2x32xf32> -> vector<2x48xf32>
    %cst_104 = arith.constant dense<0.000000e+00> : vector<2x128xf32>
    %309 = tpu.matmul %308, %37, %cst_104 {dimension_numbers = #tpu.dot_dimension_numbers<[1], [0], [0], [1], [0, 0, 1, 1], [], []>} : vector<2x48xf32>, vector<48x128xf32>, vector<2x128xf32> -> vector<2x128xf32>
    %310 = vector.broadcast %38 : vector<1x128xf32> to vector<2x128xf32>
    %311 = arith.addf %309, %310 : vector<2x128xf32>
    %312 = vector.extract_strided_slice %311 {offsets = [0, 0], sizes = [2, 32], strides = [1, 1]} : vector<2x128xf32> to vector<2x32xf32>
    %313 = arith.negf %312 : vector<2x32xf32>
    %314 = math.exp %313 : vector<2x32xf32>
    %cst_105 = arith.constant 1.000000e+00 : f32
    %315 = vector.broadcast %cst_105 : f32 to vector<2x32xf32>
    %316 = arith.addf %315, %314 : vector<2x32xf32>
    %317 = arith.divf %315, %316 : vector<2x32xf32>
    %318 = vector.extract_strided_slice %311 {offsets = [0, 32], sizes = [2, 32], strides = [1, 1]} : vector<2x128xf32> to vector<2x32xf32>
    %319 = arith.negf %318 : vector<2x32xf32>
    %320 = math.exp %319 : vector<2x32xf32>
    %cst_106 = arith.constant 1.000000e+00 : f32
    %321 = vector.broadcast %cst_106 : f32 to vector<2x32xf32>
    %322 = arith.addf %321, %320 : vector<2x32xf32>
    %323 = arith.divf %321, %322 : vector<2x32xf32>
    %324 = vector.extract_strided_slice %311 {offsets = [0, 64], sizes = [2, 32], strides = [1, 1]} : vector<2x128xf32> to vector<2x32xf32>
    %325 = math.tanh %324 : vector<2x32xf32>
    %326 = vector.extract_strided_slice %311 {offsets = [0, 96], sizes = [2, 32], strides = [1, 1]} : vector<2x128xf32> to vector<2x32xf32>
    %327 = arith.negf %326 : vector<2x32xf32>
    %328 = math.exp %327 : vector<2x32xf32>
    %cst_107 = arith.constant 1.000000e+00 : f32
    %329 = vector.broadcast %cst_107 : f32 to vector<2x32xf32>
    %330 = arith.addf %329, %328 : vector<2x32xf32>
    %331 = arith.divf %329, %330 : vector<2x32xf32>
    %332 = arith.mulf %323, %257 : vector<2x32xf32>
    %333 = arith.mulf %317, %325 : vector<2x32xf32>
    %334 = arith.addf %332, %333 : vector<2x32xf32>
    %335 = math.tanh %334 : vector<2x32xf32>
    %336 = arith.mulf %331, %335 : vector<2x32xf32>
    %cst_108 = arith.constant dense<0.000000e+00> : vector<2x16xf32>
    %337 = tpu.matmul %336, %39, %cst_108 {dimension_numbers = #tpu.dot_dimension_numbers<[1], [0], [0], [1], [0, 0, 1, 1], [], []>} : vector<2x32xf32>, vector<32x16xf32>, vector<2x16xf32> -> vector<2x16xf32>
    %338 = vector.broadcast %40 : vector<1x16xf32> to vector<2x16xf32>
    %339 = arith.addf %337, %338 : vector<2x16xf32>
    %c3_109 = arith.constant 3 : index
    %c0_110 = arith.constant 0 : index
    %c0_111 = arith.constant 0 : index
    %340 = vector.load %arg18[%c3_109, %c0_110, %c0_111] : memref<8x2x16xf32, #tpu.memory_space<vmem>>, vector<1x2x16xf32>
    %341 = vector.shape_cast %340 : vector<1x2x16xf32> to vector<2x16xf32>
    %342 = vector.shape_cast %339 : vector<2x16xf32> to vector<1x2x16xf32>
    tpu.vector_store %arg18[%c3_109, %c0_110, %c0_111], %342 {strides = array<i32>} : memref<8x2x16xf32, #tpu.memory_space<vmem>>, vector<1x2x16xf32>,
    %cst_112 = arith.constant dense<0xFF800000> : vector<2xf32>
    %343 = vector.multi_reduction <maximumf>, %339, %cst_112 [1] : vector<2x16xf32> to vector<2xf32>
    %344 = vector.shape_cast %343 : vector<2xf32> to vector<2x1xf32>
    %345 = vector.broadcast %344 : vector<2x1xf32> to vector<2x16xf32>
    %346 = arith.cmpf oeq, %339, %345 : vector<2x16xf32>
    %c16_i32_113 = arith.constant 16 : i32
    %347 = vector.broadcast %c16_i32_113 : i32 to vector<2x16xi32>
    %348 = arith.select %346, %47, %347 : vector<2x16xi1>, vector<2x16xi32>
    %cst_114 = arith.constant dense<2147483647> : vector<2xi32>
    %349 = vector.multi_reduction <minsi>, %348, %cst_114 [1] : vector<2x16xi32> to vector<2xi32>
    %350 = vector.shape_cast %349 : vector<2xi32> to vector<2x1xi32>
    %351 = vector.broadcast %350 : vector<2x1xi32> to vector<2x16xi32>
    %352 = arith.cmpi eq, %47, %351 : vector<2x16xi32>
    %353 = arith.extui %352 : vector<2x16xi1> to vector<2x16xi32>
    %354 = arith.sitofp %353 : vector<2x16xi32> to vector<2x16xf32>
    %cst_115 = arith.constant dense<0.000000e+00> : vector<2x16xf32>
    %355 = tpu.matmul %354, %41, %cst_115 {dimension_numbers = #tpu.dot_dimension_numbers<[1], [0], [0], [1], [0, 0, 1, 1], [], []>} : vector<2x16xf32>, vector<16x16xf32>, vector<2x16xf32> -> vector<2x16xf32>
    %cst_116 = arith.constant dense<0.000000e+00> : vector<2x16xf32>
    %356 = tpu.matmul %336, %32, %cst_116 {dimension_numbers = #tpu.dot_dimension_numbers<[1], [0], [0], [1], [0, 0, 1, 1], [], []>} : vector<2x32xf32>, vector<32x16xf32>, vector<2x16xf32> -> vector<2x16xf32>
    %357 = vector.broadcast %33 : vector<1x16xf32> to vector<2x16xf32>
    %358 = arith.addf %356, %357 : vector<2x16xf32>
    %359 = vector.shape_cast %358 : vector<2x16xf32> to vector<2x1x16xf32>
    %360 = vector.broadcast %359 : vector<2x1x16xf32> to vector<2x8x16xf32>
    %361 = arith.addf %360, %13 : vector<2x8x16xf32>
    %362 = math.tanh %361 : vector<2x8x16xf32>
    %363 = vector.broadcast %35 : vector<1x1x16xf32> to vector<2x8x16xf32>
    %364 = arith.mulf %362, %363 : vector<2x8x16xf32>
    %cst_117 = arith.constant dense<0.000000e+00> : vector<2x8xf32>
    %365 = vector.multi_reduction <add>, %364, %cst_117 [2] : vector<2x8x16xf32> to vector<2x8xf32>
    %366 = vector.broadcast %36 : vector<1x1xf32> to vector<2x8xf32>
    %367 = arith.addf %365, %366 : vector<2x8xf32>
    %cst_118 = arith.constant dense<0xFF800000> : vector<2xf32>
    %368 = vector.multi_reduction <maximumf>, %367, %cst_118 [1] : vector<2x8xf32> to vector<2xf32>
    %369 = vector.shape_cast %368 : vector<2xf32> to vector<2x1xf32>
    %370 = vector.broadcast %369 : vector<2x1xf32> to vector<2x8xf32>
    %371 = arith.subf %367, %370 : vector<2x8xf32>
    %372 = math.exp %371 : vector<2x8xf32>
    %cst_119 = arith.constant dense<0.000000e+00> : vector<2xf32>
    %373 = vector.multi_reduction <add>, %372, %cst_119 [1] : vector<2x8xf32> to vector<2xf32>
    %374 = vector.shape_cast %373 : vector<2xf32> to vector<2x1xf32>
    %375 = vector.broadcast %374 : vector<2x1xf32> to vector<2x8xf32>
    %376 = arith.divf %372, %375 : vector<2x8xf32>
    %c4 = arith.constant 4 : index
    %c0_120 = arith.constant 0 : index
    %c0_121 = arith.constant 0 : index
    %377 = vector.load %arg19[%c4, %c0_120, %c0_121] : memref<8x2x8xf32, #tpu.memory_space<vmem>>, vector<1x2x8xf32>
    %378 = vector.shape_cast %377 : vector<1x2x8xf32> to vector<2x8xf32>
    %379 = vector.shape_cast %376 : vector<2x8xf32> to vector<1x2x8xf32>
    tpu.vector_store %arg19[%c4, %c0_120, %c0_121], %379 {strides = array<i32>} : memref<8x2x8xf32, #tpu.memory_space<vmem>>, vector<1x2x8xf32>,
    %380 = vector.shape_cast %376 : vector<2x8xf32> to vector<2x8x1xf32>
    %381 = vector.broadcast %380 : vector<2x8x1xf32> to vector<2x8x16xf32>
    %382 = arith.mulf %381, %12 : vector<2x8x16xf32>
    %cst_122 = arith.constant dense<0.000000e+00> : vector<2x16xf32>
    %383 = vector.multi_reduction <add>, %382, %cst_122 [1] : vector<2x8x16xf32> to vector<2x16xf32>
    %384 = arith.addf %355, %383 : vector<2x16xf32>
    %385 = tpu.concatenate %384, %336 in 1 : vector<2x16xf32>, vector<2x32xf32> -> vector<2x48xf32>
    %cst_123 = arith.constant dense<0.000000e+00> : vector<2x128xf32>
    %386 = tpu.matmul %385, %37, %cst_123 {dimension_numbers = #tpu.dot_dimension_numbers<[1], [0], [0], [1], [0, 0, 1, 1], [], []>} : vector<2x48xf32>, vector<48x128xf32>, vector<2x128xf32> -> vector<2x128xf32>
    %387 = vector.broadcast %38 : vector<1x128xf32> to vector<2x128xf32>
    %388 = arith.addf %386, %387 : vector<2x128xf32>
    %389 = vector.extract_strided_slice %388 {offsets = [0, 0], sizes = [2, 32], strides = [1, 1]} : vector<2x128xf32> to vector<2x32xf32>
    %390 = arith.negf %389 : vector<2x32xf32>
    %391 = math.exp %390 : vector<2x32xf32>
    %cst_124 = arith.constant 1.000000e+00 : f32
    %392 = vector.broadcast %cst_124 : f32 to vector<2x32xf32>
    %393 = arith.addf %392, %391 : vector<2x32xf32>
    %394 = arith.divf %392, %393 : vector<2x32xf32>
    %395 = vector.extract_strided_slice %388 {offsets = [0, 32], sizes = [2, 32], strides = [1, 1]} : vector<2x128xf32> to vector<2x32xf32>
    %396 = arith.negf %395 : vector<2x32xf32>
    %397 = math.exp %396 : vector<2x32xf32>
    %cst_125 = arith.constant 1.000000e+00 : f32
    %398 = vector.broadcast %cst_125 : f32 to vector<2x32xf32>
    %399 = arith.addf %398, %397 : vector<2x32xf32>
    %400 = arith.divf %398, %399 : vector<2x32xf32>
    %401 = vector.extract_strided_slice %388 {offsets = [0, 64], sizes = [2, 32], strides = [1, 1]} : vector<2x128xf32> to vector<2x32xf32>
    %402 = math.tanh %401 : vector<2x32xf32>
    %403 = vector.extract_strided_slice %388 {offsets = [0, 96], sizes = [2, 32], strides = [1, 1]} : vector<2x128xf32> to vector<2x32xf32>
    %404 = arith.negf %403 : vector<2x32xf32>
    %405 = math.exp %404 : vector<2x32xf32>
    %cst_126 = arith.constant 1.000000e+00 : f32
    %406 = vector.broadcast %cst_126 : f32 to vector<2x32xf32>
    %407 = arith.addf %406, %405 : vector<2x32xf32>
    %408 = arith.divf %406, %407 : vector<2x32xf32>
    %409 = arith.mulf %400, %334 : vector<2x32xf32>
    %410 = arith.mulf %394, %402 : vector<2x32xf32>
    %411 = arith.addf %409, %410 : vector<2x32xf32>
    %412 = math.tanh %411 : vector<2x32xf32>
    %413 = arith.mulf %408, %412 : vector<2x32xf32>
    %cst_127 = arith.constant dense<0.000000e+00> : vector<2x16xf32>
    %414 = tpu.matmul %413, %39, %cst_127 {dimension_numbers = #tpu.dot_dimension_numbers<[1], [0], [0], [1], [0, 0, 1, 1], [], []>} : vector<2x32xf32>, vector<32x16xf32>, vector<2x16xf32> -> vector<2x16xf32>
    %415 = vector.broadcast %40 : vector<1x16xf32> to vector<2x16xf32>
    %416 = arith.addf %414, %415 : vector<2x16xf32>
    %c4_128 = arith.constant 4 : index
    %c0_129 = arith.constant 0 : index
    %c0_130 = arith.constant 0 : index
    %417 = vector.load %arg18[%c4_128, %c0_129, %c0_130] : memref<8x2x16xf32, #tpu.memory_space<vmem>>, vector<1x2x16xf32>
    %418 = vector.shape_cast %417 : vector<1x2x16xf32> to vector<2x16xf32>
    %419 = vector.shape_cast %416 : vector<2x16xf32> to vector<1x2x16xf32>
    tpu.vector_store %arg18[%c4_128, %c0_129, %c0_130], %419 {strides = array<i32>} : memref<8x2x16xf32, #tpu.memory_space<vmem>>, vector<1x2x16xf32>,
    %cst_131 = arith.constant dense<0xFF800000> : vector<2xf32>
    %420 = vector.multi_reduction <maximumf>, %416, %cst_131 [1] : vector<2x16xf32> to vector<2xf32>
    %421 = vector.shape_cast %420 : vector<2xf32> to vector<2x1xf32>
    %422 = vector.broadcast %421 : vector<2x1xf32> to vector<2x16xf32>
    %423 = arith.cmpf oeq, %416, %422 : vector<2x16xf32>
    %c16_i32_132 = arith.constant 16 : i32
    %424 = vector.broadcast %c16_i32_132 : i32 to vector<2x16xi32>
    %425 = arith.select %423, %47, %424 : vector<2x16xi1>, vector<2x16xi32>
    %cst_133 = arith.constant dense<2147483647> : vector<2xi32>
    %426 = vector.multi_reduction <minsi>, %425, %cst_133 [1] : vector<2x16xi32> to vector<2xi32>
    %427 = vector.shape_cast %426 : vector<2xi32> to vector<2x1xi32>
    %428 = vector.broadcast %427 : vector<2x1xi32> to vector<2x16xi32>
    %429 = arith.cmpi eq, %47, %428 : vector<2x16xi32>
    %430 = arith.extui %429 : vector<2x16xi1> to vector<2x16xi32>
    %431 = arith.sitofp %430 : vector<2x16xi32> to vector<2x16xf32>
    %cst_134 = arith.constant dense<0.000000e+00> : vector<2x16xf32>
    %432 = tpu.matmul %431, %41, %cst_134 {dimension_numbers = #tpu.dot_dimension_numbers<[1], [0], [0], [1], [0, 0, 1, 1], [], []>} : vector<2x16xf32>, vector<16x16xf32>, vector<2x16xf32> -> vector<2x16xf32>
    %cst_135 = arith.constant dense<0.000000e+00> : vector<2x16xf32>
    %433 = tpu.matmul %413, %32, %cst_135 {dimension_numbers = #tpu.dot_dimension_numbers<[1], [0], [0], [1], [0, 0, 1, 1], [], []>} : vector<2x32xf32>, vector<32x16xf32>, vector<2x16xf32> -> vector<2x16xf32>
    %434 = vector.broadcast %33 : vector<1x16xf32> to vector<2x16xf32>
    %435 = arith.addf %433, %434 : vector<2x16xf32>
    %436 = vector.shape_cast %435 : vector<2x16xf32> to vector<2x1x16xf32>
    %437 = vector.broadcast %436 : vector<2x1x16xf32> to vector<2x8x16xf32>
    %438 = arith.addf %437, %13 : vector<2x8x16xf32>
    %439 = math.tanh %438 : vector<2x8x16xf32>
    %440 = vector.broadcast %35 : vector<1x1x16xf32> to vector<2x8x16xf32>
    %441 = arith.mulf %439, %440 : vector<2x8x16xf32>
    %cst_136 = arith.constant dense<0.000000e+00> : vector<2x8xf32>
    %442 = vector.multi_reduction <add>, %441, %cst_136 [2] : vector<2x8x16xf32> to vector<2x8xf32>
    %443 = vector.broadcast %36 : vector<1x1xf32> to vector<2x8xf32>
    %444 = arith.addf %442, %443 : vector<2x8xf32>
    %cst_137 = arith.constant dense<0xFF800000> : vector<2xf32>
    %445 = vector.multi_reduction <maximumf>, %444, %cst_137 [1] : vector<2x8xf32> to vector<2xf32>
    %446 = vector.shape_cast %445 : vector<2xf32> to vector<2x1xf32>
    %447 = vector.broadcast %446 : vector<2x1xf32> to vector<2x8xf32>
    %448 = arith.subf %444, %447 : vector<2x8xf32>
    %449 = math.exp %448 : vector<2x8xf32>
    %cst_138 = arith.constant dense<0.000000e+00> : vector<2xf32>
    %450 = vector.multi_reduction <add>, %449, %cst_138 [1] : vector<2x8xf32> to vector<2xf32>
    %451 = vector.shape_cast %450 : vector<2xf32> to vector<2x1xf32>
    %452 = vector.broadcast %451 : vector<2x1xf32> to vector<2x8xf32>
    %453 = arith.divf %449, %452 : vector<2x8xf32>
    %c5 = arith.constant 5 : index
    %c0_139 = arith.constant 0 : index
    %c0_140 = arith.constant 0 : index
    %454 = vector.load %arg19[%c5, %c0_139, %c0_140] : memref<8x2x8xf32, #tpu.memory_space<vmem>>, vector<1x2x8xf32>
    %455 = vector.shape_cast %454 : vector<1x2x8xf32> to vector<2x8xf32>
    %456 = vector.shape_cast %453 : vector<2x8xf32> to vector<1x2x8xf32>
    tpu.vector_store %arg19[%c5, %c0_139, %c0_140], %456 {strides = array<i32>} : memref<8x2x8xf32, #tpu.memory_space<vmem>>, vector<1x2x8xf32>,
    %457 = vector.shape_cast %453 : vector<2x8xf32> to vector<2x8x1xf32>
    %458 = vector.broadcast %457 : vector<2x8x1xf32> to vector<2x8x16xf32>
    %459 = arith.mulf %458, %12 : vector<2x8x16xf32>
    %cst_141 = arith.constant dense<0.000000e+00> : vector<2x16xf32>
    %460 = vector.multi_reduction <add>, %459, %cst_141 [1] : vector<2x8x16xf32> to vector<2x16xf32>
    %461 = arith.addf %432, %460 : vector<2x16xf32>
    %462 = tpu.concatenate %461, %413 in 1 : vector<2x16xf32>, vector<2x32xf32> -> vector<2x48xf32>
    %cst_142 = arith.constant dense<0.000000e+00> : vector<2x128xf32>
    %463 = tpu.matmul %462, %37, %cst_142 {dimension_numbers = #tpu.dot_dimension_numbers<[1], [0], [0], [1], [0, 0, 1, 1], [], []>} : vector<2x48xf32>, vector<48x128xf32>, vector<2x128xf32> -> vector<2x128xf32>
    %464 = vector.broadcast %38 : vector<1x128xf32> to vector<2x128xf32>
    %465 = arith.addf %463, %464 : vector<2x128xf32>
    %466 = vector.extract_strided_slice %465 {offsets = [0, 0], sizes = [2, 32], strides = [1, 1]} : vector<2x128xf32> to vector<2x32xf32>
    %467 = arith.negf %466 : vector<2x32xf32>
    %468 = math.exp %467 : vector<2x32xf32>
    %cst_143 = arith.constant 1.000000e+00 : f32
    %469 = vector.broadcast %cst_143 : f32 to vector<2x32xf32>
    %470 = arith.addf %469, %468 : vector<2x32xf32>
    %471 = arith.divf %469, %470 : vector<2x32xf32>
    %472 = vector.extract_strided_slice %465 {offsets = [0, 32], sizes = [2, 32], strides = [1, 1]} : vector<2x128xf32> to vector<2x32xf32>
    %473 = arith.negf %472 : vector<2x32xf32>
    %474 = math.exp %473 : vector<2x32xf32>
    %cst_144 = arith.constant 1.000000e+00 : f32
    %475 = vector.broadcast %cst_144 : f32 to vector<2x32xf32>
    %476 = arith.addf %475, %474 : vector<2x32xf32>
    %477 = arith.divf %475, %476 : vector<2x32xf32>
    %478 = vector.extract_strided_slice %465 {offsets = [0, 64], sizes = [2, 32], strides = [1, 1]} : vector<2x128xf32> to vector<2x32xf32>
    %479 = math.tanh %478 : vector<2x32xf32>
    %480 = vector.extract_strided_slice %465 {offsets = [0, 96], sizes = [2, 32], strides = [1, 1]} : vector<2x128xf32> to vector<2x32xf32>
    %481 = arith.negf %480 : vector<2x32xf32>
    %482 = math.exp %481 : vector<2x32xf32>
    %cst_145 = arith.constant 1.000000e+00 : f32
    %483 = vector.broadcast %cst_145 : f32 to vector<2x32xf32>
    %484 = arith.addf %483, %482 : vector<2x32xf32>
    %485 = arith.divf %483, %484 : vector<2x32xf32>
    %486 = arith.mulf %477, %411 : vector<2x32xf32>
    %487 = arith.mulf %471, %479 : vector<2x32xf32>
    %488 = arith.addf %486, %487 : vector<2x32xf32>
    %489 = math.tanh %488 : vector<2x32xf32>
    %490 = arith.mulf %485, %489 : vector<2x32xf32>
    %cst_146 = arith.constant dense<0.000000e+00> : vector<2x16xf32>
    %491 = tpu.matmul %490, %39, %cst_146 {dimension_numbers = #tpu.dot_dimension_numbers<[1], [0], [0], [1], [0, 0, 1, 1], [], []>} : vector<2x32xf32>, vector<32x16xf32>, vector<2x16xf32> -> vector<2x16xf32>
    %492 = vector.broadcast %40 : vector<1x16xf32> to vector<2x16xf32>
    %493 = arith.addf %491, %492 : vector<2x16xf32>
    %c5_147 = arith.constant 5 : index
    %c0_148 = arith.constant 0 : index
    %c0_149 = arith.constant 0 : index
    %494 = vector.load %arg18[%c5_147, %c0_148, %c0_149] : memref<8x2x16xf32, #tpu.memory_space<vmem>>, vector<1x2x16xf32>
    %495 = vector.shape_cast %494 : vector<1x2x16xf32> to vector<2x16xf32>
    %496 = vector.shape_cast %493 : vector<2x16xf32> to vector<1x2x16xf32>
    tpu.vector_store %arg18[%c5_147, %c0_148, %c0_149], %496 {strides = array<i32>} : memref<8x2x16xf32, #tpu.memory_space<vmem>>, vector<1x2x16xf32>,
    %cst_150 = arith.constant dense<0xFF800000> : vector<2xf32>
    %497 = vector.multi_reduction <maximumf>, %493, %cst_150 [1] : vector<2x16xf32> to vector<2xf32>
    %498 = vector.shape_cast %497 : vector<2xf32> to vector<2x1xf32>
    %499 = vector.broadcast %498 : vector<2x1xf32> to vector<2x16xf32>
    %500 = arith.cmpf oeq, %493, %499 : vector<2x16xf32>
    %c16_i32_151 = arith.constant 16 : i32
    %501 = vector.broadcast %c16_i32_151 : i32 to vector<2x16xi32>
    %502 = arith.select %500, %47, %501 : vector<2x16xi1>, vector<2x16xi32>
    %cst_152 = arith.constant dense<2147483647> : vector<2xi32>
    %503 = vector.multi_reduction <minsi>, %502, %cst_152 [1] : vector<2x16xi32> to vector<2xi32>
    %504 = vector.shape_cast %503 : vector<2xi32> to vector<2x1xi32>
    %505 = vector.broadcast %504 : vector<2x1xi32> to vector<2x16xi32>
    %506 = arith.cmpi eq, %47, %505 : vector<2x16xi32>
    %507 = arith.extui %506 : vector<2x16xi1> to vector<2x16xi32>
    %508 = arith.sitofp %507 : vector<2x16xi32> to vector<2x16xf32>
    %cst_153 = arith.constant dense<0.000000e+00> : vector<2x16xf32>
    %509 = tpu.matmul %508, %41, %cst_153 {dimension_numbers = #tpu.dot_dimension_numbers<[1], [0], [0], [1], [0, 0, 1, 1], [], []>} : vector<2x16xf32>, vector<16x16xf32>, vector<2x16xf32> -> vector<2x16xf32>
    %cst_154 = arith.constant dense<0.000000e+00> : vector<2x16xf32>
    %510 = tpu.matmul %490, %32, %cst_154 {dimension_numbers = #tpu.dot_dimension_numbers<[1], [0], [0], [1], [0, 0, 1, 1], [], []>} : vector<2x32xf32>, vector<32x16xf32>, vector<2x16xf32> -> vector<2x16xf32>
    %511 = vector.broadcast %33 : vector<1x16xf32> to vector<2x16xf32>
    %512 = arith.addf %510, %511 : vector<2x16xf32>
    %513 = vector.shape_cast %512 : vector<2x16xf32> to vector<2x1x16xf32>
    %514 = vector.broadcast %513 : vector<2x1x16xf32> to vector<2x8x16xf32>
    %515 = arith.addf %514, %13 : vector<2x8x16xf32>
    %516 = math.tanh %515 : vector<2x8x16xf32>
    %517 = vector.broadcast %35 : vector<1x1x16xf32> to vector<2x8x16xf32>
    %518 = arith.mulf %516, %517 : vector<2x8x16xf32>
    %cst_155 = arith.constant dense<0.000000e+00> : vector<2x8xf32>
    %519 = vector.multi_reduction <add>, %518, %cst_155 [2] : vector<2x8x16xf32> to vector<2x8xf32>
    %520 = vector.broadcast %36 : vector<1x1xf32> to vector<2x8xf32>
    %521 = arith.addf %519, %520 : vector<2x8xf32>
    %cst_156 = arith.constant dense<0xFF800000> : vector<2xf32>
    %522 = vector.multi_reduction <maximumf>, %521, %cst_156 [1] : vector<2x8xf32> to vector<2xf32>
    %523 = vector.shape_cast %522 : vector<2xf32> to vector<2x1xf32>
    %524 = vector.broadcast %523 : vector<2x1xf32> to vector<2x8xf32>
    %525 = arith.subf %521, %524 : vector<2x8xf32>
    %526 = math.exp %525 : vector<2x8xf32>
    %cst_157 = arith.constant dense<0.000000e+00> : vector<2xf32>
    %527 = vector.multi_reduction <add>, %526, %cst_157 [1] : vector<2x8xf32> to vector<2xf32>
    %528 = vector.shape_cast %527 : vector<2xf32> to vector<2x1xf32>
    %529 = vector.broadcast %528 : vector<2x1xf32> to vector<2x8xf32>
    %530 = arith.divf %526, %529 : vector<2x8xf32>
    %c6 = arith.constant 6 : index
    %c0_158 = arith.constant 0 : index
    %c0_159 = arith.constant 0 : index
    %531 = vector.load %arg19[%c6, %c0_158, %c0_159] : memref<8x2x8xf32, #tpu.memory_space<vmem>>, vector<1x2x8xf32>
    %532 = vector.shape_cast %531 : vector<1x2x8xf32> to vector<2x8xf32>
    %533 = vector.shape_cast %530 : vector<2x8xf32> to vector<1x2x8xf32>
    tpu.vector_store %arg19[%c6, %c0_158, %c0_159], %533 {strides = array<i32>} : memref<8x2x8xf32, #tpu.memory_space<vmem>>, vector<1x2x8xf32>,
    %534 = vector.shape_cast %530 : vector<2x8xf32> to vector<2x8x1xf32>
    %535 = vector.broadcast %534 : vector<2x8x1xf32> to vector<2x8x16xf32>
    %536 = arith.mulf %535, %12 : vector<2x8x16xf32>
    %cst_160 = arith.constant dense<0.000000e+00> : vector<2x16xf32>
    %537 = vector.multi_reduction <add>, %536, %cst_160 [1] : vector<2x8x16xf32> to vector<2x16xf32>
    %538 = arith.addf %509, %537 : vector<2x16xf32>
    %539 = tpu.concatenate %538, %490 in 1 : vector<2x16xf32>, vector<2x32xf32> -> vector<2x48xf32>
    %cst_161 = arith.constant dense<0.000000e+00> : vector<2x128xf32>
    %540 = tpu.matmul %539, %37, %cst_161 {dimension_numbers = #tpu.dot_dimension_numbers<[1], [0], [0], [1], [0, 0, 1, 1], [], []>} : vector<2x48xf32>, vector<48x128xf32>, vector<2x128xf32> -> vector<2x128xf32>
    %541 = vector.broadcast %38 : vector<1x128xf32> to vector<2x128xf32>
    %542 = arith.addf %540, %541 : vector<2x128xf32>
    %543 = vector.extract_strided_slice %542 {offsets = [0, 0], sizes = [2, 32], strides = [1, 1]} : vector<2x128xf32> to vector<2x32xf32>
    %544 = arith.negf %543 : vector<2x32xf32>
    %545 = math.exp %544 : vector<2x32xf32>
    %cst_162 = arith.constant 1.000000e+00 : f32
    %546 = vector.broadcast %cst_162 : f32 to vector<2x32xf32>
    %547 = arith.addf %546, %545 : vector<2x32xf32>
    %548 = arith.divf %546, %547 : vector<2x32xf32>
    %549 = vector.extract_strided_slice %542 {offsets = [0, 32], sizes = [2, 32], strides = [1, 1]} : vector<2x128xf32> to vector<2x32xf32>
    %550 = arith.negf %549 : vector<2x32xf32>
    %551 = math.exp %550 : vector<2x32xf32>
    %cst_163 = arith.constant 1.000000e+00 : f32
    %552 = vector.broadcast %cst_163 : f32 to vector<2x32xf32>
    %553 = arith.addf %552, %551 : vector<2x32xf32>
    %554 = arith.divf %552, %553 : vector<2x32xf32>
    %555 = vector.extract_strided_slice %542 {offsets = [0, 64], sizes = [2, 32], strides = [1, 1]} : vector<2x128xf32> to vector<2x32xf32>
    %556 = math.tanh %555 : vector<2x32xf32>
    %557 = vector.extract_strided_slice %542 {offsets = [0, 96], sizes = [2, 32], strides = [1, 1]} : vector<2x128xf32> to vector<2x32xf32>
    %558 = arith.negf %557 : vector<2x32xf32>
    %559 = math.exp %558 : vector<2x32xf32>
    %cst_164 = arith.constant 1.000000e+00 : f32
    %560 = vector.broadcast %cst_164 : f32 to vector<2x32xf32>
    %561 = arith.addf %560, %559 : vector<2x32xf32>
    %562 = arith.divf %560, %561 : vector<2x32xf32>
    %563 = arith.mulf %554, %488 : vector<2x32xf32>
    %564 = arith.mulf %548, %556 : vector<2x32xf32>
    %565 = arith.addf %563, %564 : vector<2x32xf32>
    %566 = math.tanh %565 : vector<2x32xf32>
    %567 = arith.mulf %562, %566 : vector<2x32xf32>
    %cst_165 = arith.constant dense<0.000000e+00> : vector<2x16xf32>
    %568 = tpu.matmul %567, %39, %cst_165 {dimension_numbers = #tpu.dot_dimension_numbers<[1], [0], [0], [1], [0, 0, 1, 1], [], []>} : vector<2x32xf32>, vector<32x16xf32>, vector<2x16xf32> -> vector<2x16xf32>
    %569 = vector.broadcast %40 : vector<1x16xf32> to vector<2x16xf32>
    %570 = arith.addf %568, %569 : vector<2x16xf32>
    %c6_166 = arith.constant 6 : index
    %c0_167 = arith.constant 0 : index
    %c0_168 = arith.constant 0 : index
    %571 = vector.load %arg18[%c6_166, %c0_167, %c0_168] : memref<8x2x16xf32, #tpu.memory_space<vmem>>, vector<1x2x16xf32>
    %572 = vector.shape_cast %571 : vector<1x2x16xf32> to vector<2x16xf32>
    %573 = vector.shape_cast %570 : vector<2x16xf32> to vector<1x2x16xf32>
    tpu.vector_store %arg18[%c6_166, %c0_167, %c0_168], %573 {strides = array<i32>} : memref<8x2x16xf32, #tpu.memory_space<vmem>>, vector<1x2x16xf32>,
    %cst_169 = arith.constant dense<0xFF800000> : vector<2xf32>
    %574 = vector.multi_reduction <maximumf>, %570, %cst_169 [1] : vector<2x16xf32> to vector<2xf32>
    %575 = vector.shape_cast %574 : vector<2xf32> to vector<2x1xf32>
    %576 = vector.broadcast %575 : vector<2x1xf32> to vector<2x16xf32>
    %577 = arith.cmpf oeq, %570, %576 : vector<2x16xf32>
    %c16_i32_170 = arith.constant 16 : i32
    %578 = vector.broadcast %c16_i32_170 : i32 to vector<2x16xi32>
    %579 = arith.select %577, %47, %578 : vector<2x16xi1>, vector<2x16xi32>
    %cst_171 = arith.constant dense<2147483647> : vector<2xi32>
    %580 = vector.multi_reduction <minsi>, %579, %cst_171 [1] : vector<2x16xi32> to vector<2xi32>
    %581 = vector.shape_cast %580 : vector<2xi32> to vector<2x1xi32>
    %582 = vector.broadcast %581 : vector<2x1xi32> to vector<2x16xi32>
    %583 = arith.cmpi eq, %47, %582 : vector<2x16xi32>
    %584 = arith.extui %583 : vector<2x16xi1> to vector<2x16xi32>
    %585 = arith.sitofp %584 : vector<2x16xi32> to vector<2x16xf32>
    %cst_172 = arith.constant dense<0.000000e+00> : vector<2x16xf32>
    %586 = tpu.matmul %585, %41, %cst_172 {dimension_numbers = #tpu.dot_dimension_numbers<[1], [0], [0], [1], [0, 0, 1, 1], [], []>} : vector<2x16xf32>, vector<16x16xf32>, vector<2x16xf32> -> vector<2x16xf32>
    %cst_173 = arith.constant dense<0.000000e+00> : vector<2x16xf32>
    %587 = tpu.matmul %567, %32, %cst_173 {dimension_numbers = #tpu.dot_dimension_numbers<[1], [0], [0], [1], [0, 0, 1, 1], [], []>} : vector<2x32xf32>, vector<32x16xf32>, vector<2x16xf32> -> vector<2x16xf32>
    %588 = vector.broadcast %33 : vector<1x16xf32> to vector<2x16xf32>
    %589 = arith.addf %587, %588 : vector<2x16xf32>
    %590 = vector.shape_cast %589 : vector<2x16xf32> to vector<2x1x16xf32>
    %591 = vector.broadcast %590 : vector<2x1x16xf32> to vector<2x8x16xf32>
    %592 = arith.addf %591, %13 : vector<2x8x16xf32>
    %593 = math.tanh %592 : vector<2x8x16xf32>
    %594 = vector.broadcast %35 : vector<1x1x16xf32> to vector<2x8x16xf32>
    %595 = arith.mulf %593, %594 : vector<2x8x16xf32>
    %cst_174 = arith.constant dense<0.000000e+00> : vector<2x8xf32>
    %596 = vector.multi_reduction <add>, %595, %cst_174 [2] : vector<2x8x16xf32> to vector<2x8xf32>
    %597 = vector.broadcast %36 : vector<1x1xf32> to vector<2x8xf32>
    %598 = arith.addf %596, %597 : vector<2x8xf32>
    %cst_175 = arith.constant dense<0xFF800000> : vector<2xf32>
    %599 = vector.multi_reduction <maximumf>, %598, %cst_175 [1] : vector<2x8xf32> to vector<2xf32>
    %600 = vector.shape_cast %599 : vector<2xf32> to vector<2x1xf32>
    %601 = vector.broadcast %600 : vector<2x1xf32> to vector<2x8xf32>
    %602 = arith.subf %598, %601 : vector<2x8xf32>
    %603 = math.exp %602 : vector<2x8xf32>
    %cst_176 = arith.constant dense<0.000000e+00> : vector<2xf32>
    %604 = vector.multi_reduction <add>, %603, %cst_176 [1] : vector<2x8xf32> to vector<2xf32>
    %605 = vector.shape_cast %604 : vector<2xf32> to vector<2x1xf32>
    %606 = vector.broadcast %605 : vector<2x1xf32> to vector<2x8xf32>
    %607 = arith.divf %603, %606 : vector<2x8xf32>
    %c7 = arith.constant 7 : index
    %c0_177 = arith.constant 0 : index
    %c0_178 = arith.constant 0 : index
    %608 = vector.load %arg19[%c7, %c0_177, %c0_178] : memref<8x2x8xf32, #tpu.memory_space<vmem>>, vector<1x2x8xf32>
    %609 = vector.shape_cast %608 : vector<1x2x8xf32> to vector<2x8xf32>
    %610 = vector.shape_cast %607 : vector<2x8xf32> to vector<1x2x8xf32>
    tpu.vector_store %arg19[%c7, %c0_177, %c0_178], %610 {strides = array<i32>} : memref<8x2x8xf32, #tpu.memory_space<vmem>>, vector<1x2x8xf32>,
    %611 = vector.shape_cast %607 : vector<2x8xf32> to vector<2x8x1xf32>
    %612 = vector.broadcast %611 : vector<2x8x1xf32> to vector<2x8x16xf32>
    %613 = arith.mulf %612, %12 : vector<2x8x16xf32>
    %cst_179 = arith.constant dense<0.000000e+00> : vector<2x16xf32>
    %614 = vector.multi_reduction <add>, %613, %cst_179 [1] : vector<2x8x16xf32> to vector<2x16xf32>
    %615 = arith.addf %586, %614 : vector<2x16xf32>
    %616 = tpu.concatenate %615, %567 in 1 : vector<2x16xf32>, vector<2x32xf32> -> vector<2x48xf32>
    %cst_180 = arith.constant dense<0.000000e+00> : vector<2x128xf32>
    %617 = tpu.matmul %616, %37, %cst_180 {dimension_numbers = #tpu.dot_dimension_numbers<[1], [0], [0], [1], [0, 0, 1, 1], [], []>} : vector<2x48xf32>, vector<48x128xf32>, vector<2x128xf32> -> vector<2x128xf32>
    %618 = vector.broadcast %38 : vector<1x128xf32> to vector<2x128xf32>
    %619 = arith.addf %617, %618 : vector<2x128xf32>
    %620 = vector.extract_strided_slice %619 {offsets = [0, 0], sizes = [2, 32], strides = [1, 1]} : vector<2x128xf32> to vector<2x32xf32>
    %621 = arith.negf %620 : vector<2x32xf32>
    %622 = math.exp %621 : vector<2x32xf32>
    %cst_181 = arith.constant 1.000000e+00 : f32
    %623 = vector.broadcast %cst_181 : f32 to vector<2x32xf32>
    %624 = arith.addf %623, %622 : vector<2x32xf32>
    %625 = arith.divf %623, %624 : vector<2x32xf32>
    %626 = vector.extract_strided_slice %619 {offsets = [0, 32], sizes = [2, 32], strides = [1, 1]} : vector<2x128xf32> to vector<2x32xf32>
    %627 = arith.negf %626 : vector<2x32xf32>
    %628 = math.exp %627 : vector<2x32xf32>
    %cst_182 = arith.constant 1.000000e+00 : f32
    %629 = vector.broadcast %cst_182 : f32 to vector<2x32xf32>
    %630 = arith.addf %629, %628 : vector<2x32xf32>
    %631 = arith.divf %629, %630 : vector<2x32xf32>
    %632 = vector.extract_strided_slice %619 {offsets = [0, 64], sizes = [2, 32], strides = [1, 1]} : vector<2x128xf32> to vector<2x32xf32>
    %633 = math.tanh %632 : vector<2x32xf32>
    %634 = vector.extract_strided_slice %619 {offsets = [0, 96], sizes = [2, 32], strides = [1, 1]} : vector<2x128xf32> to vector<2x32xf32>
    %635 = arith.negf %634 : vector<2x32xf32>
    %636 = math.exp %635 : vector<2x32xf32>
    %cst_183 = arith.constant 1.000000e+00 : f32
    %637 = vector.broadcast %cst_183 : f32 to vector<2x32xf32>
    %638 = arith.addf %637, %636 : vector<2x32xf32>
    %639 = arith.divf %637, %638 : vector<2x32xf32>
    %640 = arith.mulf %631, %565 : vector<2x32xf32>
    %641 = arith.mulf %625, %633 : vector<2x32xf32>
    %642 = arith.addf %640, %641 : vector<2x32xf32>
    %643 = math.tanh %642 : vector<2x32xf32>
    %644 = arith.mulf %639, %643 : vector<2x32xf32>
    %cst_184 = arith.constant dense<0.000000e+00> : vector<2x16xf32>
    %645 = tpu.matmul %644, %39, %cst_184 {dimension_numbers = #tpu.dot_dimension_numbers<[1], [0], [0], [1], [0, 0, 1, 1], [], []>} : vector<2x32xf32>, vector<32x16xf32>, vector<2x16xf32> -> vector<2x16xf32>
    %646 = vector.broadcast %40 : vector<1x16xf32> to vector<2x16xf32>
    %647 = arith.addf %645, %646 : vector<2x16xf32>
    %c7_185 = arith.constant 7 : index
    %c0_186 = arith.constant 0 : index
    %c0_187 = arith.constant 0 : index
    %648 = vector.load %arg18[%c7_185, %c0_186, %c0_187] : memref<8x2x16xf32, #tpu.memory_space<vmem>>, vector<1x2x16xf32>
    %649 = vector.shape_cast %648 : vector<1x2x16xf32> to vector<2x16xf32>
    %650 = vector.shape_cast %647 : vector<2x16xf32> to vector<1x2x16xf32>
    tpu.vector_store %arg18[%c7_185, %c0_186, %c0_187], %650 {strides = array<i32>} : memref<8x2x16xf32, #tpu.memory_space<vmem>>, vector<1x2x16xf32>,
    return
  }
}

</mosaic_0001>

<llo_original>
// kernel: language_model_forward.1
$region0: #{language_model_forward.1}
  #allocation0 [shape = 'u32[]', space=smem, size = 0x4, offset = 0x4, fixed_abs, tag = 'smem constant byte address 0x4 - core index']
  #allocation1 [shape = 'u32[144,128]{1,0:T(1,128)}', space=vmem, size = 0x12000, scoped, tag = 'internal scratch']
  #allocation2 [shape = 'f32[1,1]{1,0:T(1,128)S(1)}', space=vmem, size = 0x200, scoped, tag = 'scoped memory for language_model_forward.1']
  %s0 = inlined_call_operand.vmem [shape: f32[16,32], index: 0, kind: input, shape index: {}]
  %s1 = inlined_call_operand.vmem [shape: f32[32,16], index: 1, kind: input, shape index: {}]
  %s2 = inlined_call_operand.vmem [shape: f32[1,16], index: 2, kind: input, shape index: {}]
  %s3 = inlined_call_operand.vmem [shape: f32[16,16], index: 3, kind: input, shape index: {}]
  %s4 = inlined_call_operand.vmem [shape: f32[1,16], index: 4, kind: input, shape index: {}]
  %s5 = inlined_call_operand.vmem [shape: f32[16,64], index: 5, kind: input, shape index: {}]
  %s6 = inlined_call_operand.vmem [shape: f32[1,64], index: 6, kind: input, shape index: {}]
  %s7 = inlined_call_operand.vmem [shape: f32[64,64], index: 7, kind: input, shape index: {}]
  %s8 = inlined_call_operand.vmem [shape: f32[1,64], index: 8, kind: input, shape index: {}]
  %s9 = inlined_call_operand.vmem [shape: f32[32,16], index: 9, kind: input, shape index: {}]
  %s10 = inlined_call_operand.vmem [shape: f32[1,16], index: 10, kind: input, shape index: {}]
  %s11 = inlined_call_operand.vmem [shape: f32[1,16], index: 11, kind: input, shape index: {}]
  %s12 = inlined_call_operand.<no memory space> [shape: f32[1,1], index: 12, kind: input, shape index: {}]
  %s13 = inlined_call_operand.vmem [shape: f32[48,128], index: 13, kind: input, shape index: {}]
  %s14 = inlined_call_operand.vmem [shape: f32[1,128], index: 14, kind: input, shape index: {}]
  %s15 = inlined_call_operand.vmem [shape: f32[16,16], index: 15, kind: input, shape index: {}]
  %s16 = inlined_call_operand.vmem [shape: f32[32,16], index: 16, kind: input, shape index: {}]
  %s17 = inlined_call_operand.vmem [shape: f32[1,16], index: 17, kind: input, shape index: {}]
  %s18 = inlined_call_operand.vmem [shape: f32[8,2,16], index: 18, kind: output, shape index: {0}]
  %s19 = inlined_call_operand.vmem [shape: f32[8,2,8], index: 19, kind: output, shape index: {1}]
  %20 = xla_tuple %s18, %s19
  %s21 = sld [smem:[#allocation0]]
  $region90: #{language_model_forward.1} parent=0
    _
  %s23 = ssub.s32 1, %s21
  %s24 = scalar_select 0, %s23, %s21
  %v25 = vstv %s12
  %26 = vst [vmem:[#allocation2] sm:$0x1] %v25
  // Predicated region
  $region2: #{language_model_forward.1} parent=0 // pred_check
    _
  $region3: #{language_model_forward.1} parent=0 // pred_check_branch
    %28 = sbr.rel (0) target = $region5
  $region4: #{language_model_forward.1} parent=0 // pred_region
    _
  $region5: #{language_model_forward.1} parent=0 // pred_fallthru
    _
  // Predicated region
  $region6: #{language_model_forward.1} parent=0 // pred_check
    _
  $region7: #{language_model_forward.1} parent=0 // pred_check_branch
    %30 = sbr.rel (0) target = $region9
  $region8: #{language_model_forward.1} parent=0 // pred_region
    _
  $region9: #{language_model_forward.1} parent=0 // pred_fallthru
    _
  // Predicated region
  $region10: #{language_model_forward.1} parent=0 // pred_check
    _
  $region11: #{language_model_forward.1} parent=0 // pred_check_branch
    %32 = sbr.rel (0) target = $region13
  $region12: #{language_model_forward.1} parent=0 // pred_region
    _
  $region13: #{language_model_forward.1} parent=0 // pred_fallthru
    _
  // Predicated region
  $region14: #{language_model_forward.1} parent=0 // pred_check
    _
  $region15: #{language_model_forward.1} parent=0 // pred_check_branch
    %34 = sbr.rel (0) target = $region17
  $region16: #{language_model_forward.1} parent=0 // pred_region
    _
  $region17: #{language_model_forward.1} parent=0 // pred_fallthru
    _
  // Predicated region
  $region18: #{language_model_forward.1} parent=0 // pred_check
    _
  $region19: #{language_model_forward.1} parent=0 // pred_check_branch
    %36 = sbr.rel (0) target = $region21
  $region20: #{language_model_forward.1} parent=0 // pred_region
    _
  $region21: #{language_model_forward.1} parent=0 // pred_fallthru
    _
  // Predicated region
  $region22: #{language_model_forward.1} parent=0 // pred_check
    _
  $region23: #{language_model_forward.1} parent=0 // pred_check_branch
    %38 = sbr.rel (0) target = $region25
  $region24: #{language_model_forward.1} parent=0 // pred_region
    _
  $region25: #{language_model_forward.1} parent=0 // pred_fallthru
    _
  // Predicated region
  $region26: #{language_model_forward.1} parent=0 // pred_check
    _
  $region27: #{language_model_forward.1} parent=0 // pred_check_branch
    %40 = sbr.rel (0) target = $region29
  $region28: #{language_model_forward.1} parent=0 // pred_region
    _
  $region29: #{language_model_forward.1} parent=0 // pred_fallthru
    _
  // Predicated region
  $region30: #{language_model_forward.1} parent=0 // pred_check
    _
  $region31: #{language_model_forward.1} parent=0 // pred_check_branch
    %42 = sbr.rel (0) target = $region33
  $region32: #{language_model_forward.1} parent=0 // pred_region
    _
  $region33: #{language_model_forward.1} parent=0 // pred_fallthru
    _
  // Predicated region
  $region34: #{language_model_forward.1} parent=0 // pred_check
    _
  $region35: #{language_model_forward.1} parent=0 // pred_check_branch
    %44 = sbr.rel (0) target = $region37
  $region36: #{language_model_forward.1} parent=0 // pred_region
    _
  $region37: #{language_model_forward.1} parent=0 // pred_fallthru
    _
  // Predicated region
  $region38: #{language_model_forward.1} parent=0 // pred_check
    _
  $region39: #{language_model_forward.1} parent=0 // pred_check_branch
    %46 = sbr.rel (0) target = $region41
  $region40: #{language_model_forward.1} parent=0 // pred_region
    _
  $region41: #{language_model_forward.1} parent=0 // pred_fallthru
    _
  // Predicated region
  $region42: #{language_model_forward.1} parent=0 // pred_check
    _
  $region43: #{language_model_forward.1} parent=0 // pred_check_branch
    %48 = sbr.rel (0) target = $region45
  $region44: #{language_model_forward.1} parent=0 // pred_region
    _
  $region45: #{language_model_forward.1} parent=0 // pred_fallthru
    _
  // Predicated region
  $region46: #{language_model_forward.1} parent=0 // pred_check
    _
  $region47: #{language_model_forward.1} parent=0 // pred_check_branch
    %50 = sbr.rel (0) target = $region49
  $region48: #{language_model_forward.1} parent=0 // pred_region
    _
  $region49: #{language_model_forward.1} parent=0 // pred_fallthru
    _
  // Predicated region
  $region50: #{language_model_forward.1} parent=0 // pred_check
    _
  $region51: #{language_model_forward.1} parent=0 // pred_check_branch
    %52 = sbr.rel (0) target = $region53
  $region52: #{language_model_forward.1} parent=0 // pred_region
    _
  $region53: #{language_model_forward.1} parent=0 // pred_fallthru
    _
  // Predicated region
  $region54: #{language_model_forward.1} parent=0 // pred_check
    _
  $region55: #{language_model_forward.1} parent=0 // pred_check_branch
    %54 = sbr.rel (0) target = $region57
  $region56: #{language_model_forward.1} parent=0 // pred_region
    _
  $region57: #{language_model_forward.1} parent=0 // pred_fallthru
    _
  // Predicated region
  $region58: #{language_model_forward.1} parent=0 // pred_check
    _
  $region59: #{language_model_forward.1} parent=0 // pred_check_branch
    %56 = sbr.rel (0) target = $region61
  $region60: #{language_model_forward.1} parent=0 // pred_region
    _
  $region61: #{language_model_forward.1} parent=0 // pred_fallthru
    _
  // Predicated region
  $region62: #{language_model_forward.1} parent=0 // pred_check
    _
  $region63: #{language_model_forward.1} parent=0 // pred_check_branch
    %58 = sbr.rel (0) target = $region65
  $region64: #{language_model_forward.1} parent=0 // pred_region
    _
  $region65: #{language_model_forward.1} parent=0 // pred_fallthru
    _
  // Predicated region
  $region66: #{language_model_forward.1} parent=0 // pred_check
    _
  $region67: #{language_model_forward.1} parent=0 // pred_check_branch
    %60 = sbr.rel (0) target = $region69
  $region68: #{language_model_forward.1} parent=0 // pred_region
    _
  $region69: #{language_model_forward.1} parent=0 // pred_fallthru
    _
  // Predicated region
  $region70: #{language_model_forward.1} parent=0 // pred_check
    _
  $region71: #{language_model_forward.1} parent=0 // pred_check_branch
    %62 = sbr.rel (0) target = $region73
  $region72: #{language_model_forward.1} parent=0 // pred_region
    _
  $region73: #{language_model_forward.1} parent=0 // pred_fallthru
    _
  %v63 = vld [vmem:[%s0] sm:$0xff]
  %v64 = vld [vmem:[%s0 + $0x8] sm:$0xff]
  %v65 = vld [vmem:[%s1] sm:$0xff]
  %v66 = vld [vmem:[%s1 + $0x8] sm:$0xff]
  %v67 = vld [vmem:[%s1 + $0x10] sm:$0xff]
  %v68 = vld [vmem:[%s1 + $0x18] sm:$0xff]
  %v69 = vld [vmem:[%s2] sm:$0x1]
  %v71 = vlaneseq
  %v72 = vshrl.u32 %v71, 7
  %v73 = vsub.s32 0, %v72
  %v74 = vrot.slane %v69, %v73
  %vm76 = vcmask 261120
  %v78 = vsel %vm76, %v63, 0
  %v81 = vsel %vm76, %v64, 0
  %83 = vmatprep.subr.mxu0 0.0
  %84 = vmatpush1.msra.mxu0 %v65
  %85 = vmatprep.subr.mxu0 0.0
  %86 = vmatpush1.msra.mxu0 %v66
  %87 = vmatprep.subr.mxu0 0.0
  %88 = vmatpush1.msra.mxu0 %v67
  %89 = vmatprep.subr.mxu0 0.0
  %90 = vmatpush1.msra.mxu0 %v68
  %91 = vmatprep.subr.mxu0 0.0
  %92 = vmatpush1.msra.mxu0 0.0
  %93 = vmatprep.subr.mxu0 0.0
  %94 = vmatpush1.msra.mxu0 0.0
  %95 = vmatprep.subr.mxu0 0.0
  %96 = vmatpush1.msra.mxu0 0.0
  %97 = vmatprep.subr.mxu0 0.0
  %98 = vmatpush1.msra.mxu0 0.0
  %99 = vmatprep.subr.mxu0 0.0
  %100 = vmatpush1.msra.mxu0 0.0
  %101 = vmatprep.subr.mxu0 0.0
  %102 = vmatpush1.msra.mxu0 0.0
  %103 = vmatprep.subr.mxu0 0.0
  %104 = vmatpush1.msra.mxu0 0.0
  %105 = vmatprep.subr.mxu0 0.0
  %106 = vmatpush1.msra.mxu0 0.0
  %107 = vmatprep.subr.mxu0 0.0
  %108 = vmatpush1.msra.mxu0 0.0
  %109 = vmatprep.subr.mxu0 0.0
  %110 = vmatpush1.msra.mxu0 0.0
  %111 = vmatprep.subr.mxu0 0.0
  %112 = vmatpush1.msra.mxu0 0.0
  %113 = vmatprep.subr.mxu0 0.0
  %114 = vmatpush1.msra.mxu0 0.0
  %115 = vmatprep.subr.mxu0 0.0
  %116 = vmatpush1.msra.mxu0 0.0
  %117 = vmatprep.subr.mxu0 0.0
  %118 = vmatpush1.msra.mxu0 0.0
  %119 = vmatprep.subr.mxu0 0.0
  %120 = vmatpush1.msra.mxu0 0.0
  %121 = vmatprep.subr.mxu0 0.0
  %122 = vmatpush1.msra.mxu0 0.0
  %123 = vmatprep.subr.mxu0 0.0
  %124 = vmatpush1.msra.mxu0 0.0
  %125 = vmatprep.subr.mxu0 0.0
  %126 = vmatpush1.msra.mxu0 0.0
  %127 = vmatprep.subr.mxu0 0.0
  %128 = vmatpush1.msra.mxu0 0.0
  %129 = vmatprep.subr.mxu0 0.0
  %130 = vmatpush1.msra.mxu0 0.0
  %131 = vmatprep.subr.mxu0 0.0
  %132 = vmatpush1.msra.mxu0 0.0
  %133 = vmatprep.subr.mxu0 0.0
  %134 = vmatpush1.msra.mxu0 0.0
  %135 = vmatprep.subr.mxu0 0.0
  %136 = vmatpush1.msra.mxu0 0.0
  %137 = vmatprep.subr.mxu0 0.0
  %138 = vmatpush1.msra.mxu0 0.0
  %139 = vmatprep.subr.mxu0 0.0
  %140 = vmatpush1.msra.mxu0 0.0
  %141 = vmatprep.subr.mxu0 0.0
  %142 = vmatpush1.msra.mxu0 0.0
  %143 = vmatprep.subr.mxu0 0.0
  %144 = vmatpush1.msra.mxu0 0.0
  %145 = vmatprep.subr.mxu0 0.0
  %146 = vmatpush1.msra.mxu0 0.0
  %147 = vmatprep.mubr.f32.mxu0 0.0
  %148 = vmatmul.mubr.f32.gmra.mrb[0].mxu0 %v78
  %v149 = vpop.f32.mrb[0].mxu0
  %v150 = vadd.f32 %v74, %v149
  %v151 = vpop.f32.mrb[0].mxu0
  %152 = vmatprep.mubr.f32.mxu0 0.0
  %153 = vmatmul.mubr.f32.gmra.mrb[0].mxu0 %v81
  %v154 = vpop.f32.mrb[0].mxu0
  %v155 = vadd.f32 %v74, %v154
  %v156 = vpop.f32.mrb[0].mxu0
  %157 = vdwg.mxu0
  %v158 = vtanh.pop %v150
  %v159 = vtanh.pop %v155
  %v160 = vld [vmem:[%s3] sm:$0xff]
  %v161 = vld [vmem:[%s3 + $0x8] sm:$0xff]
  %v162 = vld [vmem:[%s4] sm:$0x1]
  %v164 = vlaneseq
  %v165 = vshrl.u32 %v164, 7
  %v166 = vsub.s32 0, %v165
  %v167 = vrot.slane %v162, %v166
  %vm169 = vcmask 130048
  %v171 = vsel %vm169, %v158, 0
  %v174 = vsel %vm169, %v159, 0
  %176 = vmatprep.subr.mxu0 0.0
  %177 = vmatpush1.msra.mxu0 %v160
  %178 = vmatprep.subr.mxu0 0.0
  %179 = vmatpush1.msra.mxu0 %v161
  %180 = vmatprep.subr.mxu0 0.0
  %181 = vmatpush1.msra.mxu0 0.0
  %182 = vmatprep.subr.mxu0 0.0
  %183 = vmatpush1.msra.mxu0 0.0
  %184 = vmatprep.subr.mxu0 0.0
  %185 = vmatpush1.msra.mxu0 0.0
  %186 = vmatprep.subr.mxu0 0.0
  %187 = vmatpush1.msra.mxu0 0.0
  %188 = vmatprep.subr.mxu0 0.0
  %189 = vmatpush1.msra.mxu0 0.0
  %190 = vmatprep.subr.mxu0 0.0
  %191 = vmatpush1.msra.mxu0 0.0
  %192 = vmatprep.subr.mxu0 0.0
  %193 = vmatpush1.msra.mxu0 0.0
  %194 = vmatprep.subr.mxu0 0.0
  %195 = vmatpush1.msra.mxu0 0.0
  %196 = vmatprep.subr.mxu0 0.0
  %197 = vmatpush1.msra.mxu0 0.0
  %198 = vmatprep.subr.mxu0 0.0
  %199 = vmatpush1.msra.mxu0 0.0
  %200 = vmatprep.subr.mxu0 0.0
  %201 = vmatpush1.msra.mxu0 0.0
  %202 = vmatprep.subr.mxu0 0.0
  %203 = vmatpush1.msra.mxu0 0.0
  %204 = vmatprep.subr.mxu0 0.0
  %205 = vmatpush1.msra.mxu0 0.0
  %206 = vmatprep.subr.mxu0 0.0
  %207 = vmatpush1.msra.mxu0 0.0
  %208 = vmatprep.subr.mxu0 0.0
  %209 = vmatpush1.msra.mxu0 0.0
  %210 = vmatprep.subr.mxu0 0.0
  %211 = vmatpush1.msra.mxu0 0.0
  %212 = vmatprep.subr.mxu0 0.0
  %213 = vmatpush1.msra.mxu0 0.0
  %214 = vmatprep.subr.mxu0 0.0
  %215 = vmatpush1.msra.mxu0 0.0
  %216 = vmatprep.subr.mxu0 0.0
  %217 = vmatpush1.msra.mxu0 0.0
  %218 = vmatprep.subr.mxu0 0.0
  %219 = vmatpush1.msra.mxu0 0.0
  %220 = vmatprep.subr.mxu0 0.0
  %221 = vmatpush1.msra.mxu0 0.0
  %222 = vmatprep.subr.mxu0 0.0
  %223 = vmatpush1.msra.mxu0 0.0
  %224 = vmatprep.subr.mxu0 0.0
  %225 = vmatpush1.msra.mxu0 0.0
  %226 = vmatprep.subr.mxu0 0.0
  %227 = vmatpush1.msra.mxu0 0.0
  %228 = vmatprep.subr.mxu0 0.0
  %229 = vmatpush1.msra.mxu0 0.0
  %230 = vmatprep.subr.mxu0 0.0
  %231 = vmatpush1.msra.mxu0 0.0
  %232 = vmatprep.subr.mxu0 0.0
  %233 = vmatpush1.msra.mxu0 0.0
  %234 = vmatprep.subr.mxu0 0.0
  %235 = vmatpush1.msra.mxu0 0.0
  %236 = vmatprep.subr.mxu0 0.0
  %237 = vmatpush1.msra.mxu0 0.0
  %238 = vmatprep.subr.mxu0 0.0
  %239 = vmatpush1.msra.mxu0 0.0
  %240 = vmatprep.mubr.f32.mxu0 0.0
  %241 = vmatmul.mubr.f32.gmra.mrb[0].mxu0 %v171
  %v242 = vpop.f32.mrb[0].mxu0
  %v243 = vadd.f32 %v167, %v242
  %v244 = vpop.f32.mrb[0].mxu0
  %245 = vmatprep.mubr.f32.mxu0 0.0
  %246 = vmatmul.mubr.f32.gmra.mrb[0].mxu0 %v174
  %v247 = vpop.f32.mrb[0].mxu0
  %v248 = vadd.f32 %v167, %v247
  %v249 = vpop.f32.mrb[0].mxu0
  %250 = vdwg.mxu0
  %v251 = vsel %vm169, %v158, 0.0
  %v252 = vrot.slane %v251, 4
  %v253 = vadd.f32 %v251, %v252
  %v254 = vrot.slane %v253, 2
  %v255 = vadd.f32 %v253, %v254
  %v256 = vrot.slane %v255, 1
  %v257 = vadd.f32 %v255, %v256
  %v258 = vsel %vm169, %v159, 0.0
  %v259 = vrot.slane %v258, 4
  %v260 = vadd.f32 %v258, %v259
  %v261 = vrot.slane %v260, 2
  %v262 = vadd.f32 %v260, %v261
  %v263 = vrot.slane %v262, 1
  %v264 = vadd.f32 %v262, %v263
  %v265 = vrcp.pop 8.0
  %v266 = vmul.f32 %v257, %v265
  %v267 = vmul.f32 %v264, %v265
  %v268 = vld [vmem:[%s5] sm:$0xff]
  %v269 = vld [vmem:[%s5 + $0x8] sm:$0xff]
  %v270 = vld [vmem:[%s6] sm:$0x1]
  %v272 = vlaneseq
  %v273 = vshrl.u32 %v272, 7
  %v274 = vsub.s32 0, %v273
  %v275 = vrot.slane %v270, %v274
  %vm279 = vcmask 1041409
  %v280 = vsel %vm279, %v267, %v266
  %v281 = vsel %vm169, %v280, 0
  %283 = vmatprep.subr.mxu0 0.0
  %284 = vmatpush1.msra.mxu0 %v268
  %285 = vmatprep.subr.mxu0 0.0
  %286 = vmatpush1.msra.mxu0 %v269
  %287 = vmatprep.subr.mxu0 0.0
  %288 = vmatpush1.msra.mxu0 0.0
  %289 = vmatprep.subr.mxu0 0.0
  %290 = vmatpush1.msra.mxu0 0.0
  %291 = vmatprep.subr.mxu0 0.0
  %292 = vmatpush1.msra.mxu0 0.0
  %293 = vmatprep.subr.mxu0 0.0
  %294 = vmatpush1.msra.mxu0 0.0
  %295 = vmatprep.subr.mxu0 0.0
  %296 = vmatpush1.msra.mxu0 0.0
  %297 = vmatprep.subr.mxu0 0.0
  %298 = vmatpush1.msra.mxu0 0.0
  %299 = vmatprep.subr.mxu0 0.0
  %300 = vmatpush1.msra.mxu0 0.0
  %301 = vmatprep.subr.mxu0 0.0
  %302 = vmatpush1.msra.mxu0 0.0
  %303 = vmatprep.subr.mxu0 0.0
  %304 = vmatpush1.msra.mxu0 0.0
  %305 = vmatprep.subr.mxu0 0.0
  %306 = vmatpush1.msra.mxu0 0.0
  %307 = vmatprep.subr.mxu0 0.0
  %308 = vmatpush1.msra.mxu0 0.0
  %309 = vmatprep.subr.mxu0 0.0
  %310 = vmatpush1.msra.mxu0 0.0
  %311 = vmatprep.subr.mxu0 0.0
  %312 = vmatpush1.msra.mxu0 0.0
  %313 = vmatprep.subr.mxu0 0.0
  %314 = vmatpush1.msra.mxu0 0.0
  %315 = vmatprep.subr.mxu0 0.0
  %316 = vmatpush1.msra.mxu0 0.0
  %317 = vmatprep.subr.mxu0 0.0
  %318 = vmatpush1.msra.mxu0 0.0
  %319 = vmatprep.subr.mxu0 0.0
  %320 = vmatpush1.msra.mxu0 0.0
  %321 = vmatprep.subr.mxu0 0.0
  %322 = vmatpush1.msra.mxu0 0.0
  %323 = vmatprep.subr.mxu0 0.0
  %324 = vmatpush1.msra.mxu0 0.0
  %325 = vmatprep.subr.mxu0 0.0
  %326 = vmatpush1.msra.mxu0 0.0
  %327 = vmatprep.subr.mxu0 0.0
  %328 = vmatpush1.msra.mxu0 0.0
  %329 = vmatprep.subr.mxu0 0.0
  %330 = vmatpush1.msra.mxu0 0.0
  %331 = vmatprep.subr.mxu0 0.0
  %332 = vmatpush1.msra.mxu0 0.0
  %333 = vmatprep.subr.mxu0 0.0
  %334 = vmatpush1.msra.mxu0 0.0
  %335 = vmatprep.subr.mxu0 0.0
  %336 = vmatpush1.msra.mxu0 0.0
  %337 = vmatprep.subr.mxu0 0.0
  %338 = vmatpush1.msra.mxu0 0.0
  %339 = vmatprep.subr.mxu0 0.0
  %340 = vmatpush1.msra.mxu0 0.0
  %341 = vmatprep.subr.mxu0 0.0
  %342 = vmatpush1.msra.mxu0 0.0
  %343 = vmatprep.subr.mxu0 0.0
  %344 = vmatpush1.msra.mxu0 0.0
  %345 = vmatprep.subr.mxu0 0.0
  %346 = vmatpush1.msra.mxu0 0.0
  %347 = vmatprep.mubr.f32.mxu0 0.0
  %348 = vmatmul.mubr.f32.gmra.mrb[0].mxu0 %v281
  %v349 = vpop.f32.mrb[0].mxu0
  %v350 = vadd.f32 %v275, %v349
  %v351 = vpop.f32.mrb[0].mxu0
  %352 = vdwg.mxu0
  %v353 = vtanh.pop %v350
  %v354 = vld [vmem:[%s7] sm:$0xff]
  %v355 = vld [vmem:[%s7 + $0x8] sm:$0xff]
  %v356 = vld [vmem:[%s7 + $0x10] sm:$0xff]
  %v357 = vld [vmem:[%s7 + $0x18] sm:$0xff]
  %v358 = vld [vmem:[%s7 + $0x20] sm:$0xff]
  %v359 = vld [vmem:[%s7 + $0x28] sm:$0xff]
  %v360 = vld [vmem:[%s7 + $0x30] sm:$0xff]
  %v361 = vld [vmem:[%s7 + $0x38] sm:$0xff]
  %v362 = vld [vmem:[%s8] sm:$0x1]
  %v364 = vlaneseq
  %v365 = vshrl.u32 %v364, 7
  %v366 = vsub.s32 0, %v365
  %v367 = vrot.slane %v362, %v366
  %vm369 = vcmask 523264
  %v371 = vsel %vm369, %v353, 0
  %373 = vmatprep.subr.mxu0 0.0
  %374 = vmatpush1.msra.mxu0 %v354
  %375 = vmatprep.subr.mxu0 0.0
  %376 = vmatpush1.msra.mxu0 %v355
  %377 = vmatprep.subr.mxu0 0.0
  %378 = vmatpush1.msra.mxu0 %v356
  %379 = vmatprep.subr.mxu0 0.0
  %380 = vmatpush1.msra.mxu0 %v357
  %381 = vmatprep.subr.mxu0 0.0
  %382 = vmatpush1.msra.mxu0 %v358
  %383 = vmatprep.subr.mxu0 0.0
  %384 = vmatpush1.msra.mxu0 %v359
  %385 = vmatprep.subr.mxu0 0.0
  %386 = vmatpush1.msra.mxu0 %v360
  %387 = vmatprep.subr.mxu0 0.0
  %388 = vmatpush1.msra.mxu0 %v361
  %389 = vmatprep.subr.mxu0 0.0
  %390 = vmatpush1.msra.mxu0 0.0
  %391 = vmatprep.subr.mxu0 0.0
  %392 = vmatpush1.msra.mxu0 0.0
  %393 = vmatprep.subr.mxu0 0.0
  %394 = vmatpush1.msra.mxu0 0.0
  %395 = vmatprep.subr.mxu0 0.0
  %396 = vmatpush1.msra.mxu0 0.0
  %397 = vmatprep.subr.mxu0 0.0
  %398 = vmatpush1.msra.mxu0 0.0
  %399 = vmatprep.subr.mxu0 0.0
  %400 = vmatpush1.msra.mxu0 0.0
  %401 = vmatprep.subr.mxu0 0.0
  %402 = vmatpush1.msra.mxu0 0.0
  %403 = vmatprep.subr.mxu0 0.0
  %404 = vmatpush1.msra.mxu0 0.0
  %405 = vmatprep.subr.mxu0 0.0
  %406 = vmatpush1.msra.mxu0 0.0
  %407 = vmatprep.subr.mxu0 0.0
  %408 = vmatpush1.msra.mxu0 0.0
  %409 = vmatprep.subr.mxu0 0.0
  %410 = vmatpush1.msra.mxu0 0.0
  %411 = vmatprep.subr.mxu0 0.0
  %412 = vmatpush1.msra.mxu0 0.0
  %413 = vmatprep.subr.mxu0 0.0
  %414 = vmatpush1.msra.mxu0 0.0
  %415 = vmatprep.subr.mxu0 0.0
  %416 = vmatpush1.msra.mxu0 0.0
  %417 = vmatprep.subr.mxu0 0.0
  %418 = vmatpush1.msra.mxu0 0.0
  %419 = vmatprep.subr.mxu0 0.0
  %420 = vmatpush1.msra.mxu0 0.0
  %421 = vmatprep.subr.mxu0 0.0
  %422 = vmatpush1.msra.mxu0 0.0
  %423 = vmatprep.subr.mxu0 0.0
  %424 = vmatpush1.msra.mxu0 0.0
  %425 = vmatprep.subr.mxu0 0.0
  %426 = vmatpush1.msra.mxu0 0.0
  %427 = vmatprep.subr.mxu0 0.0
  %428 = vmatpush1.msra.mxu0 0.0
  %429 = vmatprep.subr.mxu0 0.0
  %430 = vmatpush1.msra.mxu0 0.0
  %431 = vmatprep.subr.mxu0 0.0
  %432 = vmatpush1.msra.mxu0 0.0
  %433 = vmatprep.subr.mxu0 0.0
  %434 = vmatpush1.msra.mxu0 0.0
  %435 = vmatprep.subr.mxu0 0.0
  %436 = vmatpush1.msra.mxu0 0.0
  %437 = vmatprep.mubr.f32.mxu0 0.0
  %438 = vmatmul.mubr.f32.gmra.mrb[0].mxu0 %v371
  %v439 = vpop.f32.mrb[0].mxu0
  %v440 = vadd.f32 %v367, %v439
  %v441 = vpop.f32.mrb[0].mxu0
  %442 = vdwg.mxu0
  %v443 = vtanh.pop %v440
  %v444 = vtanh.pop %v443
  %v445 = vld [vmem:[%s9] sm:$0xff]
  %v446 = vld [vmem:[%s9 + $0x8] sm:$0xff]
  %v447 = vld [vmem:[%s9 + $0x10] sm:$0xff]
  %v448 = vld [vmem:[%s9 + $0x18] sm:$0xff]
  %v449 = vld [vmem:[%s10] sm:$0x1]
  %v450 = vld [vmem:[%s11] sm:$0x1]
  %v451 = vld [vmem:[#allocation2] sm:$0x1]
  %v452 = vld [vmem:[%s13] sm:$0xff]
  %v453 = vld [vmem:[%s13 + $0x8] sm:$0xff]
  %v454 = vld [vmem:[%s13 + $0x10] sm:$0xff]
  %v455 = vld [vmem:[%s13 + $0x18] sm:$0xff]
  %v456 = vld [vmem:[%s13 + $0x20] sm:$0xff]
  %v457 = vld [vmem:[%s13 + $0x28] sm:$0xff]
  %v458 = vld [vmem:[%s14] sm:$0x1]
  %v459 = vld [vmem:[%s16] sm:$0xff]
  %v460 = vld [vmem:[%s16 + $0x8] sm:$0xff]
  %v461 = vld [vmem:[%s16 + $0x10] sm:$0xff]
  %v462 = vld [vmem:[%s16 + $0x18] sm:$0xff]
  %v463 = vld [vmem:[%s17] sm:$0x1]
  %v464 = vld [vmem:[%s15] sm:$0xff]
  %v465 = vld [vmem:[%s15 + $0x8] sm:$0xff]
  %v466 = vlaneseq
  %v467 = vshrl.u32 %v466, 7
  %v468 = vsub.s32 1, %v467
  %v469 = vrot.slane %v464, %v468
  %v470 = vlaneseq
  %v471 = vand.u32 %v470, 127
  %v473 = vlaneseq
  %v474 = vshrl.u32 %v473, 7
  %v475 = vsub.s32 0, %v474
  %v476 = vrot.slane %v449, %v475
  %v479 = vsel %vm76, %v444, 0
  %481 = vmatprep.subr.mxu0 0.0
  %482 = vmatpush1.msra.mxu0 %v445
  %483 = vmatprep.subr.mxu0 0.0
  %484 = vmatpush1.msra.mxu0 %v446
  %485 = vmatprep.subr.mxu0 0.0
  %486 = vmatpush1.msra.mxu0 %v447
  %487 = vmatprep.subr.mxu0 0.0
  %488 = vmatpush1.msra.mxu0 %v448
  %489 = vmatprep.subr.mxu0 0.0
  %490 = vmatpush1.msra.mxu0 0.0
  %491 = vmatprep.subr.mxu0 0.0
  %492 = vmatpush1.msra.mxu0 0.0
  %493 = vmatprep.subr.mxu0 0.0
  %494 = vmatpush1.msra.mxu0 0.0
  %495 = vmatprep.subr.mxu0 0.0
  %496 = vmatpush1.msra.mxu0 0.0
  %497 = vmatprep.subr.mxu0 0.0
  %498 = vmatpush1.msra.mxu0 0.0
  %499 = vmatprep.subr.mxu0 0.0
  %500 = vmatpush1.msra.mxu0 0.0
  %501 = vmatprep.subr.mxu0 0.0
  %502 = vmatpush1.msra.mxu0 0.0
  %503 = vmatprep.subr.mxu0 0.0
  %504 = vmatpush1.msra.mxu0 0.0
  %505 = vmatprep.subr.mxu0 0.0
  %506 = vmatpush1.msra.mxu0 0.0
  %507 = vmatprep.subr.mxu0 0.0
  %508 = vmatpush1.msra.mxu0 0.0
  %509 = vmatprep.subr.mxu0 0.0
  %510 = vmatpush1.msra.mxu0 0.0
  %511 = vmatprep.subr.mxu0 0.0
  %512 = vmatpush1.msra.mxu0 0.0
  %513 = vmatprep.subr.mxu0 0.0
  %514 = vmatpush1.msra.mxu0 0.0
  %515 = vmatprep.subr.mxu0 0.0
  %516 = vmatpush1.msra.mxu0 0.0
  %517 = vmatprep.subr.mxu0 0.0
  %518 = vmatpush1.msra.mxu0 0.0
  %519 = vmatprep.subr.mxu0 0.0
  %520 = vmatpush1.msra.mxu0 0.0
  %521 = vmatprep.subr.mxu0 0.0
  %522 = vmatpush1.msra.mxu0 0.0
  %523 = vmatprep.subr.mxu0 0.0
  %524 = vmatpush1.msra.mxu0 0.0
  %525 = vmatprep.subr.mxu0 0.0
  %526 = vmatpush1.msra.mxu0 0.0
  %527 = vmatprep.subr.mxu0 0.0
  %528 = vmatpush1.msra.mxu0 0.0
  %529 = vmatprep.subr.mxu0 0.0
  %530 = vmatpush1.msra.mxu0 0.0
  %531 = vmatprep.subr.mxu0 0.0
  %532 = vmatpush1.msra.mxu0 0.0
  %533 = vmatprep.subr.mxu0 0.0
  %534 = vmatpush1.msra.mxu0 0.0
  %535 = vmatprep.subr.mxu0 0.0
  %536 = vmatpush1.msra.mxu0 0.0
  %537 = vmatprep.subr.mxu0 0.0
  %538 = vmatpush1.msra.mxu0 0.0
  %539 = vmatprep.subr.mxu0 0.0
  %540 = vmatpush1.msra.mxu0 0.0
  %541 = vmatprep.subr.mxu0 0.0
  %542 = vmatpush1.msra.mxu0 0.0
  %543 = vmatprep.subr.mxu0 0.0
  %544 = vmatpush1.msra.mxu0 0.0
  %545 = vmatprep.mubr.f32.mxu0 0.0
  %546 = vmatmul.mubr.f32.gmra.mrb[0].mxu0 %v479
  %v547 = vpop.f32.mrb[0].mxu0
  %v548 = vadd.f32 %v476, %v547
  %v549 = vpop.f32.mrb[0].mxu0
  %550 = vdwg.mxu0
  %v553 = vunpack.c.l.s4 1966171168
  %v554 = vunpack.c.0.s8 %v553
  %v555 = vlaneseq
  %v556 = vshrl.u32 %v555, 7
  %v557 = vsub.s32 %v554, %v556
  %v558 = vrot.slane %v548, %v557
  %v559 = vcombine.high %v558, %v558
  %v561 = vunpack.c.l.s4 1966171168
  %v562 = vunpack.c.0.s8 %v561
  %v563 = vlaneseq
  %v564 = vshrl.u32 %v563, 7
  %v565 = vsub.s32 %v562, %v564
  %v566 = vrot.slane %v558, %v565
  %v568 = vunpack.c.l.s4 1966171168
  %v569 = vunpack.c.0.s8 %v568
  %v570 = vlaneseq
  %v571 = vshrl.u32 %v570, 7
  %v572 = vsub.s32 %v569, %v571
  %v573 = vrot.slane %v559, %v572
  %v574 = vlaneseq
  %v575 = vshrl.u32 %v574, 7
  %v576 = vsub.s32 0, %v575
  %v577 = vrot.slane %v566, %v576
  %v578 = vlaneseq
  %v579 = vshrl.u32 %v578, 7
  %v580 = vsub.s32 0, %v579
  %v581 = vrot.slane %v573, %v580
  %v584 = vadd.f32 %v577, %v243
  %v585 = vadd.f32 %v581, %v248
  %v586 = vtanh.pop %v584
  %v587 = vtanh.pop %v585
  %v589 = vlaneseq
  %v590 = vshrl.u32 %v589, 7
  %v591 = vsub.s32 0, %v590
  %v592 = vrot.slane %v450, %v591
  %v594 = vmul.f32 %v586, %v592
  %v595 = vmul.f32 %v587, %v592
  %v596 = vsel %vm169, %v594, 0.0
  %597 = vadd.xlane.f32.xlu0 %v596
  %v598 = vpop.xlane.xlu0 %597
  %v599 = vsel %vm169, %v595, 0.0
  %600 = vadd.xlane.f32.xlu0 %v599
  %v601 = vpop.xlane.xlu0 %600
  %v603 = vlaneseq
  %v604 = vshrl.u32 %v603, 7
  %v605 = vsub.s32 0, %v604
  %v606 = vrot.slane %v451, %v605
  %607 = vset.pattern.permute.xlu0 0
  %608 = vperm.xlu0 %607, %v606
  %v609 = vpop.permute.xlu0 %608
  %v611 = vadd.f32 %v598, %v609
  %v612 = vadd.f32 %v601, %v609
  %v615 = vlaneseq
  %v616 = vshrl.u32 %v615, 7
  %v617 = vsub.s32 %v471, %v616
  %v618 = vrot.slane %v611, %v617
  %v619 = vlaneseq
  %v620 = vshrl.u32 %v619, 7
  %v621 = vsub.s32 %v471, %v620
  %v622 = vrot.slane %v612, %v621
  %v623 = vsel %vm279, %v622, %v618
  %vm625 = vcmask 58368
  %v626 = vsel %vm625, %v623, -inf
  %627 = vmax.xlane.f32.xlu0 %v626
  %v628 = vpop.xlane.xlu0 %627
  %v630 = vlaneseq
  %v631 = vshrl.u32 %v630, 7
  %v632 = vsub.s32 0, %v631
  %v633 = vrot.slane %v628, %v632
  %v634 = vlaneseq
  %v635 = vshrl.u32 %v634, 7
  %v636 = vsub.s32 1, %v635
  %v637 = vrot.slane %v628, %v636
  %v640 = vsub.f32 %v611, %v633
  %v641 = vsub.f32 %v612, %v637
  %v642 = vmul.f32 %v640, 1.442695
  %v643 = vpow.pop %v642
  %v644 = vmul.f32 %v641, 1.442695
  %v645 = vpow.pop %v644
  %648 = vset.pattern.permute.xlu0 0
  %649 = vperm.xlu0 %648, %v643
  %v650 = vpop.permute.xlu0 %649
  %651 = vset.pattern.permute.xlu0 0
  %652 = vperm.xlu0 %651, %v645
  %v653 = vpop.permute.xlu0 %652
  %v654 = vlaneseq
  %v655 = vshrl.u32 %v654, 7
  %v656 = vsub.s32 %v471, %v655
  %v657 = vrot.slane %v650, %v656
  %v658 = vlaneseq
  %v659 = vshrl.u32 %v658, 7
  %v660 = vsub.s32 %v471, %v659
  %v661 = vrot.slane %v653, %v660
  %v662 = vsel %vm279, %v661, %v657
  %v664 = vsel %vm625, %v662, 0.0
  %665 = vadd.xlane.f32.xlu0 %v664
  %v666 = vpop.xlane.xlu0 %665
  %v668 = vlaneseq
  %v669 = vshrl.u32 %v668, 7
  %v670 = vsub.s32 0, %v669
  %v671 = vrot.slane %v666, %v670
  %v672 = vlaneseq
  %v673 = vshrl.u32 %v672, 7
  %v674 = vsub.s32 1, %v673
  %v675 = vrot.slane %v666, %v674
  %v678 = vrcp.pop %v671
  %v679 = vmul.f32 %v643, %v678
  %v680 = vrcp.pop %v675
  %v681 = vmul.f32 %v645, %v680
  %684 = vset.pattern.permute.xlu0 0
  %685 = vperm.xlu0 %684, %v679
  %v686 = vpop.permute.xlu0 %685
  %687 = vset.pattern.permute.xlu0 0
  %688 = vperm.xlu0 %687, %v681
  %v689 = vpop.permute.xlu0 %688
  %v690 = vlaneseq
  %v691 = vshrl.u32 %v690, 7
  %v692 = vsub.s32 %v471, %v691
  %v693 = vrot.slane %v686, %v692
  %v694 = vlaneseq
  %v695 = vshrl.u32 %v694, 7
  %v696 = vsub.s32 %v471, %v695
  %v697 = vrot.slane %v689, %v696
  %v698 = vsel %vm279, %v697, %v693
  %700 = vst.msk [vmem:[%s19] sm:$0x3] %vm625, %v698
  %v703 = vmul.f32 %v686, %v158
  %v704 = vmul.f32 %v689, %v159
  %v705 = vsel %vm169, %v703, 0.0
  %v706 = vrot.slane %v705, 4
  %v707 = vadd.f32 %v705, %v706
  %v708 = vrot.slane %v707, 2
  %v709 = vadd.f32 %v707, %v708
  %v710 = vrot.slane %v709, 1
  %v711 = vadd.f32 %v709, %v710
  %v712 = vsel %vm169, %v704, 0.0
  %v713 = vrot.slane %v712, 4
  %v714 = vadd.f32 %v712, %v713
  %v715 = vrot.slane %v714, 2
  %v716 = vadd.f32 %v714, %v715
  %v717 = vrot.slane %v716, 1
  %v718 = vadd.f32 %v716, %v717
  %v721 = vsel %vm279, %v718, %v711
  %v723 = vadd.f32 %v469, %v721
  %724 = vrot.lane.b32.xlu0 %v444, 16
  %v725 = vpop.permute.xlu0 %724
  %v727 = vsel %vm169, %v723, %v725
  %v729 = vlaneseq
  %v730 = vshrl.u32 %v729, 7
  %v731 = vsub.s32 0, %v730
  %v732 = vrot.slane %v458, %v731
  %vm734 = vcmask 392192
  %v736 = vsel %vm734, %v727, 0
  %738 = vmatprep.subr.mxu0 0.0
  %739 = vmatpush1.msra.mxu0 %v452
  %740 = vmatprep.subr.mxu0 0.0
  %741 = vmatpush1.msra.mxu0 %v453
  %742 = vmatprep.subr.mxu0 0.0
  %743 = vmatpush1.msra.mxu0 %v454
  %744 = vmatprep.subr.mxu0 0.0
  %745 = vmatpush1.msra.mxu0 %v455
  %746 = vmatprep.subr.mxu0 0.0
  %747 = vmatpush1.msra.mxu0 %v456
  %748 = vmatprep.subr.mxu0 0.0
  %749 = vmatpush1.msra.mxu0 %v457
  %750 = vmatprep.subr.mxu0 0.0
  %751 = vmatpush1.msra.mxu0 0.0
  %752 = vmatprep.subr.mxu0 0.0
  %753 = vmatpush1.msra.mxu0 0.0
  %754 = vmatprep.subr.mxu0 0.0
  %755 = vmatpush1.msra.mxu0 0.0
  %756 = vmatprep.subr.mxu0 0.0
  %757 = vmatpush1.msra.mxu0 0.0
  %758 = vmatprep.subr.mxu0 0.0
  %759 = vmatpush1.msra.mxu0 0.0
  %760 = vmatprep.subr.mxu0 0.0
  %761 = vmatpush1.msra.mxu0 0.0
  %762 = vmatprep.subr.mxu0 0.0
  %763 = vmatpush1.msra.mxu0 0.0
  %764 = vmatprep.subr.mxu0 0.0
  %765 = vmatpush1.msra.mxu0 0.0
  %766 = vmatprep.subr.mxu0 0.0
  %767 = vmatpush1.msra.mxu0 0.0
  %768 = vmatprep.subr.mxu0 0.0
  %769 = vmatpush1.msra.mxu0 0.0
  %770 = vmatprep.subr.mxu0 0.0
  %771 = vmatpush1.msra.mxu0 0.0
  %772 = vmatprep.subr.mxu0 0.0
  %773 = vmatpush1.msra.mxu0 0.0
  %774 = vmatprep.subr.mxu0 0.0
  %775 = vmatpush1.msra.mxu0 0.0
  %776 = vmatprep.subr.mxu0 0.0
  %777 = vmatpush1.msra.mxu0 0.0
  %778 = vmatprep.subr.mxu0 0.0
  %779 = vmatpush1.msra.mxu0 0.0
  %780 = vmatprep.subr.mxu0 0.0
  %781 = vmatpush1.msra.mxu0 0.0
  %782 = vmatprep.subr.mxu0 0.0
  %783 = vmatpush1.msra.mxu0 0.0
  %784 = vmatprep.subr.mxu0 0.0
  %785 = vmatpush1.msra.mxu0 0.0
  %786 = vmatprep.subr.mxu0 0.0
  %787 = vmatpush1.msra.mxu0 0.0
  %788 = vmatprep.subr.mxu0 0.0
  %789 = vmatpush1.msra.mxu0 0.0
  %790 = vmatprep.subr.mxu0 0.0
  %791 = vmatpush1.msra.mxu0 0.0
  %792 = vmatprep.subr.mxu0 0.0
  %793 = vmatpush1.msra.mxu0 0.0
  %794 = vmatprep.subr.mxu0 0.0
  %795 = vmatpush1.msra.mxu0 0.0
  %796 = vmatprep.subr.mxu0 0.0
  %797 = vmatpush1.msra.mxu0 0.0
  %798 = vmatprep.subr.mxu0 0.0
  %799 = vmatpush1.msra.mxu0 0.0
  %800 = vmatprep.subr.mxu0 0.0
  %801 = vmatpush1.msra.mxu0 0.0
  %802 = vmatprep.mubr.f32.mxu0 0.0
  %803 = vmatmul.mubr.f32.gmra.mrb[0].mxu0 %v736
  %v804 = vpop.f32.mrb[0].mxu0
  %v805 = vadd.f32 %v732, %v804
  %v806 = vpop.f32.mrb[0].mxu0
  %807 = vdwg.mxu0
  %v808 = vxor.u32 %v805, 2147483648
  %v809 = vmul.f32 %v808, 1.442695
  %v810 = vpow.pop %v809
  %v811 = vadd.f32 %v810, 1.0
  %v812 = vrcp.pop %v811
  %v813 = vmul.f32 1.0, %v812
  %v814 = vtanh.pop %v805
  %v815 = vmul.f32 %v813, %v444
  %817 = vrot.lane.b32.xlu0 %v814, 64
  %v818 = vpop.permute.xlu0 %817
  %v820 = vmul.f32 %v813, %v818
  %822 = vrot.lane.b32.xlu0 %v820, 32
  %v823 = vpop.permute.xlu0 %822
  %v825 = vadd.f32 %v815, %v823
  %v826 = vtanh.pop %v825
  %828 = vrot.lane.b32.xlu0 %v826, 64
  %v829 = vpop.permute.xlu0 %828
  %v831 = vmul.f32 %v813, %v829
  %v833 = vlaneseq
  %v834 = vshrl.u32 %v833, 7
  %v835 = vsub.s32 0, %v834
  %v836 = vrot.slane %v463, %v835
  %839 = vrot.lane.b32.xlu0 %v831, 32
  %v840 = vpop.permute.xlu0 %839
  %v841 = vsel %vm76, %v840, 0
  %843 = vmatprep.subr.mxu0 0.0
  %844 = vmatpush1.msra.mxu0 %v459
  %845 = vmatprep.subr.mxu0 0.0
  %846 = vmatpush1.msra.mxu0 %v460
  %847 = vmatprep.subr.mxu0 0.0
  %848 = vmatpush1.msra.mxu0 %v461
  %849 = vmatprep.subr.mxu0 0.0
  %850 = vmatpush1.msra.mxu0 %v462
  %851 = vmatprep.subr.mxu0 0.0
  %852 = vmatpush1.msra.mxu0 0.0
  %853 = vmatprep.subr.mxu0 0.0
  %854 = vmatpush1.msra.mxu0 0.0
  %855 = vmatprep.subr.mxu0 0.0
  %856 = vmatpush1.msra.mxu0 0.0
  %857 = vmatprep.subr.mxu0 0.0
  %858 = vmatpush1.msra.mxu0 0.0
  %859 = vmatprep.subr.mxu0 0.0
  %860 = vmatpush1.msra.mxu0 0.0
  %861 = vmatprep.subr.mxu0 0.0
  %862 = vmatpush1.msra.mxu0 0.0
  %863 = vmatprep.subr.mxu0 0.0
  %864 = vmatpush1.msra.mxu0 0.0
  %865 = vmatprep.subr.mxu0 0.0
  %866 = vmatpush1.msra.mxu0 0.0
  %867 = vmatprep.subr.mxu0 0.0
  %868 = vmatpush1.msra.mxu0 0.0
  %869 = vmatprep.subr.mxu0 0.0
  %870 = vmatpush1.msra.mxu0 0.0
  %871 = vmatprep.subr.mxu0 0.0
  %872 = vmatpush1.msra.mxu0 0.0
  %873 = vmatprep.subr.mxu0 0.0
  %874 = vmatpush1.msra.mxu0 0.0
  %875 = vmatprep.subr.mxu0 0.0
  %876 = vmatpush1.msra.mxu0 0.0
  %877 = vmatprep.subr.mxu0 0.0
  %878 = vmatpush1.msra.mxu0 0.0
  %879 = vmatprep.subr.mxu0 0.0
  %880 = vmatpush1.msra.mxu0 0.0
  %881 = vmatprep.subr.mxu0 0.0
  %882 = vmatpush1.msra.mxu0 0.0
  %883 = vmatprep.subr.mxu0 0.0
  %884 = vmatpush1.msra.mxu0 0.0
  %885 = vmatprep.subr.mxu0 0.0
  %886 = vmatpush1.msra.mxu0 0.0
  %887 = vmatprep.subr.mxu0 0.0
  %888 = vmatpush1.msra.mxu0 0.0
  %889 = vmatprep.subr.mxu0 0.0
  %890 = vmatpush1.msra.mxu0 0.0
  %891 = vmatprep.subr.mxu0 0.0
  %892 = vmatpush1.msra.mxu0 0.0
  %893 = vmatprep.subr.mxu0 0.0
  %894 = vmatpush1.msra.mxu0 0.0
  %895 = vmatprep.subr.mxu0 0.0
  %896 = vmatpush1.msra.mxu0 0.0
  %897 = vmatprep.subr.mxu0 0.0
  %898 = vmatpush1.msra.mxu0 0.0
  %899 = vmatprep.subr.mxu0 0.0
  %900 = vmatpush1.msra.mxu0 0.0
  %901 = vmatprep.subr.mxu0 0.0
  %902 = vmatpush1.msra.mxu0 0.0
  %903 = vmatprep.subr.mxu0 0.0
  %904 = vmatpush1.msra.mxu0 0.0
  %905 = vmatprep.subr.mxu0 0.0
  %906 = vmatpush1.msra.mxu0 0.0
  %907 = vmatprep.mubr.f32.mxu0 0.0
  %908 = vmatmul.mubr.f32.gmra.mrb[0].mxu0 %v841
  %v909 = vpop.f32.mrb[0].mxu0
  %v910 = vadd.f32 %v836, %v909
  %v911 = vpop.f32.mrb[0].mxu0
  %912 = vdwg.mxu0
  %vm913 = vcmask 123904
  %914 = vst.msk [vmem:[%s18] sm:$0x3] %vm913, %v910
  %v915 = vsel %vm913, %v910, -inf
  %916 = vmax.xlane.f32.xlu0 %v915
  %v917 = vpop.xlane.xlu0 %916
  %vm918 = vcmp.eq.f32.partialorder %v910, %v917
  %v919 = vsel %vm918, %v471, 16
  %v920 = vsel %vm913, %v919, 2147483647
  %v921 = vand.u32 %v920, 65535
  %v922 = vshra.s32 %v920, 16
  %v923 = vcvt.s32.f32 %v921
  %v924 = vcvt.s32.f32 %v922
  %925 = vmin.xlane.f32.xlu0 %v924
  %v926 = vpop.xlane.xlu0 %925
  %vm927 = vcmp.eq.f32.partialorder %v924, %v926
  %v928 = vsel %vm927, %v923, inf
  %929 = vmin.xlane.f32.xlu0 %v928
  %v930 = vpop.xlane.xlu0 %929
  %v931 = vcvt.f32.s32 %v930
  %v932 = vcvt.f32.s32 %v926
  %v933 = vshll.u32 %v932, 16
  %v934 = vadd.s32 %v933, %v931
  %vm935 = vcmp.eq.s32.totalorder %v471, %v934
  %v936 = vsel %vm935, 1, 0
  %v937 = vcvt.s32.f32 %v936
  %938 = vmatprep.subr.mxu0 0.0
  %939 = vmatpush1.msra.mxu0 %v445
  %940 = vmatprep.subr.mxu0 0.0
  %941 = vmatpush1.msra.mxu0 %v446
  %942 = vmatprep.subr.mxu0 0.0
  %943 = vmatpush1.msra.mxu0 %v447
  %944 = vmatprep.subr.mxu0 0.0
  %945 = vmatpush1.msra.mxu0 %v448
  %946 = vmatprep.subr.mxu0 0.0
  %947 = vmatpush1.msra.mxu0 0.0
  %948 = vmatprep.subr.mxu0 0.0
  %949 = vmatpush1.msra.mxu0 0.0
  %950 = vmatprep.subr.mxu0 0.0
  %951 = vmatpush1.msra.mxu0 0.0
  %952 = vmatprep.subr.mxu0 0.0
  %953 = vmatpush1.msra.mxu0 0.0
  %954 = vmatprep.subr.mxu0 0.0
  %955 = vmatpush1.msra.mxu0 0.0
  %956 = vmatprep.subr.mxu0 0.0
  %957 = vmatpush1.msra.mxu0 0.0
  %958 = vmatprep.subr.mxu0 0.0
  %959 = vmatpush1.msra.mxu0 0.0
  %960 = vmatprep.subr.mxu0 0.0
  %961 = vmatpush1.msra.mxu0 0.0
  %962 = vmatprep.subr.mxu0 0.0
  %963 = vmatpush1.msra.mxu0 0.0
  %964 = vmatprep.subr.mxu0 0.0
  %965 = vmatpush1.msra.mxu0 0.0
  %966 = vmatprep.subr.mxu0 0.0
  %967 = vmatpush1.msra.mxu0 0.0
  %968 = vmatprep.subr.mxu0 0.0
  %969 = vmatpush1.msra.mxu0 0.0
  %970 = vmatprep.subr.mxu0 0.0
  %971 = vmatpush1.msra.mxu0 0.0
  %972 = vmatprep.subr.mxu0 0.0
  %973 = vmatpush1.msra.mxu0 0.0
  %974 = vmatprep.subr.mxu0 0.0
  %975 = vmatpush1.msra.mxu0 0.0
  %976 = vmatprep.subr.mxu0 0.0
  %977 = vmatpush1.msra.mxu0 0.0
  %978 = vmatprep.subr.mxu0 0.0
  %979 = vmatpush1.msra.mxu0 0.0
  %980 = vmatprep.subr.mxu0 0.0
  %981 = vmatpush1.msra.mxu0 0.0
  %982 = vmatprep.subr.mxu0 0.0
  %983 = vmatpush1.msra.mxu0 0.0
  %984 = vmatprep.subr.mxu0 0.0
  %985 = vmatpush1.msra.mxu0 0.0
  %986 = vmatprep.subr.mxu0 0.0
  %987 = vmatpush1.msra.mxu0 0.0
  %988 = vmatprep.subr.mxu0 0.0
  %989 = vmatpush1.msra.mxu0 0.0
  %990 = vmatprep.subr.mxu0 0.0
  %991 = vmatpush1.msra.mxu0 0.0
  %992 = vmatprep.subr.mxu0 0.0
  %993 = vmatpush1.msra.mxu0 0.0
  %994 = vmatprep.subr.mxu0 0.0
  %995 = vmatpush1.msra.mxu0 0.0
  %996 = vmatprep.subr.mxu0 0.0
  %997 = vmatpush1.msra.mxu0 0.0
  %998 = vmatprep.subr.mxu0 0.0
  %999 = vmatpush1.msra.mxu0 0.0
  %1000 = vmatprep.subr.mxu0 0.0
  %1001 = vmatpush1.msra.mxu0 0.0
  %1002 = vmatprep.mubr.f32.mxu0 0.0
  %1003 = vmatmul.mubr.f32.gmra.mrb[0].mxu0 %v841
  %v1004 = vpop.f32.mrb[0].mxu0
  %v1005 = vadd.f32 %v476, %v1004
  %v1006 = vpop.f32.mrb[0].mxu0
  %1007 = vdwg.mxu0
  %v1010 = vunpack.c.l.s4 1966171168
  %v1011 = vunpack.c.0.s8 %v1010
  %v1012 = vlaneseq
  %v1013 = vshrl.u32 %v1012, 7
  %v1014 = vsub.s32 %v1011, %v1013
  %v1015 = vrot.slane %v1005, %v1014
  %v1016 = vcombine.high %v1015, %v1015
  %v1018 = vunpack.c.l.s4 1966171168
  %v1019 = vunpack.c.0.s8 %v1018
  %v1020 = vlaneseq
  %v1021 = vshrl.u32 %v1020, 7
  %v1022 = vsub.s32 %v1019, %v1021
  %v1023 = vrot.slane %v1015, %v1022
  %v1025 = vunpack.c.l.s4 1966171168
  %v1026 = vunpack.c.0.s8 %v1025
  %v1027 = vlaneseq
  %v1028 = vshrl.u32 %v1027, 7
  %v1029 = vsub.s32 %v1026, %v1028
  %v1030 = vrot.slane %v1016, %v1029
  %v1031 = vlaneseq
  %v1032 = vshrl.u32 %v1031, 7
  %v1033 = vsub.s32 0, %v1032
  %v1034 = vrot.slane %v1023, %v1033
  %v1035 = vlaneseq
  %v1036 = vshrl.u32 %v1035, 7
  %v1037 = vsub.s32 0, %v1036
  %v1038 = vrot.slane %v1030, %v1037
  %v1041 = vadd.f32 %v1034, %v243
  %v1042 = vadd.f32 %v1038, %v248
  %v1043 = vtanh.pop %v1041
  %v1044 = vtanh.pop %v1042
  %v1045 = vmul.f32 %v1043, %v592
  %v1046 = vmul.f32 %v1044, %v592
  %v1047 = vsel %vm169, %v1045, 0.0
  %1048 = vadd.xlane.f32.xlu0 %v1047
  %v1049 = vpop.xlane.xlu0 %1048
  %v1050 = vsel %vm169, %v1046, 0.0
  %1051 = vadd.xlane.f32.xlu0 %v1050
  %v1052 = vpop.xlane.xlu0 %1051
  %v1053 = vadd.f32 %v1049, %v609
  %v1054 = vadd.f32 %v1052, %v609
  %v1057 = vlaneseq
  %v1058 = vshrl.u32 %v1057, 7
  %v1059 = vsub.s32 %v471, %v1058
  %v1060 = vrot.slane %v1053, %v1059
  %v1061 = vlaneseq
  %v1062 = vshrl.u32 %v1061, 7
  %v1063 = vsub.s32 %v471, %v1062
  %v1064 = vrot.slane %v1054, %v1063
  %v1065 = vsel %vm279, %v1064, %v1060
  %v1067 = vsel %vm625, %v1065, -inf
  %1068 = vmax.xlane.f32.xlu0 %v1067
  %v1069 = vpop.xlane.xlu0 %1068
  %v1071 = vlaneseq
  %v1072 = vshrl.u32 %v1071, 7
  %v1073 = vsub.s32 0, %v1072
  %v1074 = vrot.slane %v1069, %v1073
  %v1075 = vlaneseq
  %v1076 = vshrl.u32 %v1075, 7
  %v1077 = vsub.s32 1, %v1076
  %v1078 = vrot.slane %v1069, %v1077
  %v1081 = vsub.f32 %v1053, %v1074
  %v1082 = vsub.f32 %v1054, %v1078
  %v1083 = vmul.f32 %v1081, 1.442695
  %v1084 = vpow.pop %v1083
  %v1085 = vmul.f32 %v1082, 1.442695
  %v1086 = vpow.pop %v1085
  %1089 = vset.pattern.permute.xlu0 0
  %1090 = vperm.xlu0 %1089, %v1084
  %v1091 = vpop.permute.xlu0 %1090
  %1092 = vset.pattern.permute.xlu0 0
  %1093 = vperm.xlu0 %1092, %v1086
  %v1094 = vpop.permute.xlu0 %1093
  %v1095 = vlaneseq
  %v1096 = vshrl.u32 %v1095, 7
  %v1097 = vsub.s32 %v471, %v1096
  %v1098 = vrot.slane %v1091, %v1097
  %v1099 = vlaneseq
  %v1100 = vshrl.u32 %v1099, 7
  %v1101 = vsub.s32 %v471, %v1100
  %v1102 = vrot.slane %v1094, %v1101
  %v1103 = vsel %vm279, %v1102, %v1098
  %v1105 = vsel %vm625, %v1103, 0.0
  %1106 = vadd.xlane.f32.xlu0 %v1105
  %v1107 = vpop.xlane.xlu0 %1106
  %v1109 = vlaneseq
  %v1110 = vshrl.u32 %v1109, 7
  %v1111 = vsub.s32 0, %v1110
  %v1112 = vrot.slane %v1107, %v1111
  %v1113 = vlaneseq
  %v1114 = vshrl.u32 %v1113, 7
  %v1115 = vsub.s32 1, %v1114
  %v1116 = vrot.slane %v1107, %v1115
  %v1119 = vrcp.pop %v1112
  %v1120 = vmul.f32 %v1084, %v1119
  %v1121 = vrcp.pop %v1116
  %v1122 = vmul.f32 %v1086, %v1121
  %1125 = vset.pattern.permute.xlu0 0
  %1126 = vperm.xlu0 %1125, %v1120
  %v1127 = vpop.permute.xlu0 %1126
  %1128 = vset.pattern.permute.xlu0 0
  %1129 = vperm.xlu0 %1128, %v1122
  %v1130 = vpop.permute.xlu0 %1129
  %v1131 = vlaneseq
  %v1132 = vshrl.u32 %v1131, 7
  %v1133 = vsub.s32 %v471, %v1132
  %v1134 = vrot.slane %v1127, %v1133
  %v1135 = vlaneseq
  %v1136 = vshrl.u32 %v1135, 7
  %v1137 = vsub.s32 %v471, %v1136
  %v1138 = vrot.slane %v1130, %v1137
  %v1139 = vsel %vm279, %v1138, %v1134
  %s1141 = scalar_lea.vmem %s19, 2
  %1142 = vst.msk [vmem:[%s1141] sm:$0x3] %vm625, %v1139
  %v1145 = vmul.f32 %v1127, %v158
  %v1146 = vmul.f32 %v1130, %v159
  %v1147 = vsel %vm169, %v1145, 0.0
  %v1148 = vrot.slane %v1147, 4
  %v1149 = vadd.f32 %v1147, %v1148
  %v1150 = vrot.slane %v1149, 2
  %v1151 = vadd.f32 %v1149, %v1150
  %v1152 = vrot.slane %v1151, 1
  %v1153 = vadd.f32 %v1151, %v1152
  %v1154 = vsel %vm169, %v1146, 0.0
  %v1155 = vrot.slane %v1154, 4
  %v1156 = vadd.f32 %v1154, %v1155
  %v1157 = vrot.slane %v1156, 2
  %v1158 = vadd.f32 %v1156, %v1157
  %v1159 = vrot.slane %v1158, 1
  %v1160 = vadd.f32 %v1158, %v1159
  %v1163 = vsel %vm279, %v1160, %v1153
  %v1166 = vsel %vm169, %v937, 0
  %1168 = vmatprep.subr.mxu0 0.0
  %1169 = vmatpush1.msra.mxu0 %v464
  %1170 = vmatprep.subr.mxu0 0.0
  %1171 = vmatpush1.msra.mxu0 %v465
  %1172 = vmatprep.subr.mxu0 0.0
  %1173 = vmatpush1.msra.mxu0 0.0
  %1174 = vmatprep.subr.mxu0 0.0
  %1175 = vmatpush1.msra.mxu0 0.0
  %1176 = vmatprep.subr.mxu0 0.0
  %1177 = vmatpush1.msra.mxu0 0.0
  %1178 = vmatprep.subr.mxu0 0.0
  %1179 = vmatpush1.msra.mxu0 0.0
  %1180 = vmatprep.subr.mxu0 0.0
  %1181 = vmatpush1.msra.mxu0 0.0
  %1182 = vmatprep.subr.mxu0 0.0
  %1183 = vmatpush1.msra.mxu0 0.0
  %1184 = vmatprep.subr.mxu0 0.0
  %1185 = vmatpush1.msra.mxu0 0.0
  %1186 = vmatprep.subr.mxu0 0.0
  %1187 = vmatpush1.msra.mxu0 0.0
  %1188 = vmatprep.subr.mxu0 0.0
  %1189 = vmatpush1.msra.mxu0 0.0
  %1190 = vmatprep.subr.mxu0 0.0
  %1191 = vmatpush1.msra.mxu0 0.0
  %1192 = vmatprep.subr.mxu0 0.0
  %1193 = vmatpush1.msra.mxu0 0.0
  %1194 = vmatprep.subr.mxu0 0.0
  %1195 = vmatpush1.msra.mxu0 0.0
  %1196 = vmatprep.subr.mxu0 0.0
  %1197 = vmatpush1.msra.mxu0 0.0
  %1198 = vmatprep.subr.mxu0 0.0
  %1199 = vmatpush1.msra.mxu0 0.0
  %1200 = vmatprep.subr.mxu0 0.0
  %1201 = vmatpush1.msra.mxu0 0.0
  %1202 = vmatprep.subr.mxu0 0.0
  %1203 = vmatpush1.msra.mxu0 0.0
  %1204 = vmatprep.subr.mxu0 0.0
  %1205 = vmatpush1.msra.mxu0 0.0
  %1206 = vmatprep.subr.mxu0 0.0
  %1207 = vmatpush1.msra.mxu0 0.0
  %1208 = vmatprep.subr.mxu0 0.0
  %1209 = vmatpush1.msra.mxu0 0.0
  %1210 = vmatprep.subr.mxu0 0.0
  %1211 = vmatpush1.msra.mxu0 0.0
  %1212 = vmatprep.subr.mxu0 0.0
  %1213 = vmatpush1.msra.mxu0 0.0
  %1214 = vmatprep.subr.mxu0 0.0
  %1215 = vmatpush1.msra.mxu0 0.0
  %1216 = vmatprep.subr.mxu0 0.0
  %1217 = vmatpush1.msra.mxu0 0.0
  %1218 = vmatprep.subr.mxu0 0.0
  %1219 = vmatpush1.msra.mxu0 0.0
  %1220 = vmatprep.subr.mxu0 0.0
  %1221 = vmatpush1.msra.mxu0 0.0
  %1222 = vmatprep.subr.mxu0 0.0
  %1223 = vmatpush1.msra.mxu0 0.0
  %1224 = vmatprep.subr.mxu0 0.0
  %1225 = vmatpush1.msra.mxu0 0.0
  %1226 = vmatprep.subr.mxu0 0.0
  %1227 = vmatpush1.msra.mxu0 0.0
  %1228 = vmatprep.subr.mxu0 0.0
  %1229 = vmatpush1.msra.mxu0 0.0
  %1230 = vmatprep.subr.mxu0 0.0
  %1231 = vmatpush1.msra.mxu0 0.0
  %1232 = vmatprep.mubr.f32.mxu0 0.0
  %1233 = vmatmul.mubr.f32.gmra.mrb[0].mxu0 %v1166
  %v1234 = vpop.f32.mrb[0].mxu0
  %v1235 = vadd.f32 %v1163, %v1234
  %v1236 = vpop.f32.mrb[0].mxu0
  %1237 = vdwg.mxu0
  %1238 = vrot.lane.b32.xlu0 %v831, 48
  %v1239 = vpop.permute.xlu0 %1238
  %v1241 = vsel %vm169, %v1235, %v1239
  %v1243 = vsel %vm734, %v1241, 0
  %1245 = vmatprep.subr.mxu0 0.0
  %1246 = vmatpush1.msra.mxu0 %v452
  %1247 = vmatprep.subr.mxu0 0.0
  %1248 = vmatpush1.msra.mxu0 %v453
  %1249 = vmatprep.subr.mxu0 0.0
  %1250 = vmatpush1.msra.mxu0 %v454
  %1251 = vmatprep.subr.mxu0 0.0
  %1252 = vmatpush1.msra.mxu0 %v455
  %1253 = vmatprep.subr.mxu0 0.0
  %1254 = vmatpush1.msra.mxu0 %v456
  %1255 = vmatprep.subr.mxu0 0.0
  %1256 = vmatpush1.msra.mxu0 %v457
  %1257 = vmatprep.subr.mxu0 0.0
  %1258 = vmatpush1.msra.mxu0 0.0
  %1259 = vmatprep.subr.mxu0 0.0
  %1260 = vmatpush1.msra.mxu0 0.0
  %1261 = vmatprep.subr.mxu0 0.0
  %1262 = vmatpush1.msra.mxu0 0.0
  %1263 = vmatprep.subr.mxu0 0.0
  %1264 = vmatpush1.msra.mxu0 0.0
  %1265 = vmatprep.subr.mxu0 0.0
  %1266 = vmatpush1.msra.mxu0 0.0
  %1267 = vmatprep.subr.mxu0 0.0
  %1268 = vmatpush1.msra.mxu0 0.0
  %1269 = vmatprep.subr.mxu0 0.0
  %1270 = vmatpush1.msra.mxu0 0.0
  %1271 = vmatprep.subr.mxu0 0.0
  %1272 = vmatpush1.msra.mxu0 0.0
  %1273 = vmatprep.subr.mxu0 0.0
  %1274 = vmatpush1.msra.mxu0 0.0
  %1275 = vmatprep.subr.mxu0 0.0
  %1276 = vmatpush1.msra.mxu0 0.0
  %1277 = vmatprep.subr.mxu0 0.0
  %1278 = vmatpush1.msra.mxu0 0.0
  %1279 = vmatprep.subr.mxu0 0.0
  %1280 = vmatpush1.msra.mxu0 0.0
  %1281 = vmatprep.subr.mxu0 0.0
  %1282 = vmatpush1.msra.mxu0 0.0
  %1283 = vmatprep.subr.mxu0 0.0
  %1284 = vmatpush1.msra.mxu0 0.0
  %1285 = vmatprep.subr.mxu0 0.0
  %1286 = vmatpush1.msra.mxu0 0.0
  %1287 = vmatprep.subr.mxu0 0.0
  %1288 = vmatpush1.msra.mxu0 0.0
  %1289 = vmatprep.subr.mxu0 0.0
  %1290 = vmatpush1.msra.mxu0 0.0
  %1291 = vmatprep.subr.mxu0 0.0
  %1292 = vmatpush1.msra.mxu0 0.0
  %1293 = vmatprep.subr.mxu0 0.0
  %1294 = vmatpush1.msra.mxu0 0.0
  %1295 = vmatprep.subr.mxu0 0.0
  %1296 = vmatpush1.msra.mxu0 0.0
  %1297 = vmatprep.subr.mxu0 0.0
  %1298 = vmatpush1.msra.mxu0 0.0
  %1299 = vmatprep.subr.mxu0 0.0
  %1300 = vmatpush1.msra.mxu0 0.0
  %1301 = vmatprep.subr.mxu0 0.0
  %1302 = vmatpush1.msra.mxu0 0.0
  %1303 = vmatprep.subr.mxu0 0.0
  %1304 = vmatpush1.msra.mxu0 0.0
  %1305 = vmatprep.subr.mxu0 0.0
  %1306 = vmatpush1.msra.mxu0 0.0
  %1307 = vmatprep.subr.mxu0 0.0
  %1308 = vmatpush1.msra.mxu0 0.0
  %1309 = vmatprep.mubr.f32.mxu0 0.0
  %1310 = vmatmul.mubr.f32.gmra.mrb[0].mxu0 %v1243
  %v1311 = vpop.f32.mrb[0].mxu0
  %v1312 = vadd.f32 %v732, %v1311
  %v1313 = vpop.f32.mrb[0].mxu0
  %1314 = vdwg.mxu0
  %v1315 = vxor.u32 %v1312, 2147483648
  %v1316 = vmul.f32 %v1315, 1.442695
  %v1317 = vpow.pop %v1316
  %v1318 = vadd.f32 %v1317, 1.0
  %v1319 = vrcp.pop %v1318
  %v1320 = vmul.f32 1.0, %v1319
  %v1321 = vtanh.pop %v1312
  %v1322 = vmul.f32 %v1320, %v825
  %1324 = vrot.lane.b32.xlu0 %v1321, 64
  %v1325 = vpop.permute.xlu0 %1324
  %v1327 = vmul.f32 %v1320, %v1325
  %1329 = vrot.lane.b32.xlu0 %v1327, 32
  %v1330 = vpop.permute.xlu0 %1329
  %v1332 = vadd.f32 %v1322, %v1330
  %v1333 = vtanh.pop %v1332
  %1335 = vrot.lane.b32.xlu0 %v1333, 64
  %v1336 = vpop.permute.xlu0 %1335
  %v1338 = vmul.f32 %v1320, %v1336
  %1340 = vrot.lane.b32.xlu0 %v1338, 32
  %v1341 = vpop.permute.xlu0 %1340
  %v1342 = vsel %vm76, %v1341, 0
  %1344 = vmatprep.subr.mxu0 0.0
  %1345 = vmatpush1.msra.mxu0 %v459
  %1346 = vmatprep.subr.mxu0 0.0
  %1347 = vmatpush1.msra.mxu0 %v460
  %1348 = vmatprep.subr.mxu0 0.0
  %1349 = vmatpush1.msra.mxu0 %v461
  %1350 = vmatprep.subr.mxu0 0.0
  %1351 = vmatpush1.msra.mxu0 %v462
  %1352 = vmatprep.subr.mxu0 0.0
  %1353 = vmatpush1.msra.mxu0 0.0
  %1354 = vmatprep.subr.mxu0 0.0
  %1355 = vmatpush1.msra.mxu0 0.0
  %1356 = vmatprep.subr.mxu0 0.0
  %1357 = vmatpush1.msra.mxu0 0.0
  %1358 = vmatprep.subr.mxu0 0.0
  %1359 = vmatpush1.msra.mxu0 0.0
  %1360 = vmatprep.subr.mxu0 0.0
  %1361 = vmatpush1.msra.mxu0 0.0
  %1362 = vmatprep.subr.mxu0 0.0
  %1363 = vmatpush1.msra.mxu0 0.0
  %1364 = vmatprep.subr.mxu0 0.0
  %1365 = vmatpush1.msra.mxu0 0.0
  %1366 = vmatprep.subr.mxu0 0.0
  %1367 = vmatpush1.msra.mxu0 0.0
  %1368 = vmatprep.subr.mxu0 0.0
  %1369 = vmatpush1.msra.mxu0 0.0
  %1370 = vmatprep.subr.mxu0 0.0
  %1371 = vmatpush1.msra.mxu0 0.0
  %1372 = vmatprep.subr.mxu0 0.0
  %1373 = vmatpush1.msra.mxu0 0.0
  %1374 = vmatprep.subr.mxu0 0.0
  %1375 = vmatpush1.msra.mxu0 0.0
  %1376 = vmatprep.subr.mxu0 0.0
  %1377 = vmatpush1.msra.mxu0 0.0
  %1378 = vmatprep.subr.mxu0 0.0
  %1379 = vmatpush1.msra.mxu0 0.0
  %1380 = vmatprep.subr.mxu0 0.0
  %1381 = vmatpush1.msra.mxu0 0.0
  %1382 = vmatprep.subr.mxu0 0.0
  %1383 = vmatpush1.msra.mxu0 0.0
  %1384 = vmatprep.subr.mxu0 0.0
  %1385 = vmatpush1.msra.mxu0 0.0
  %1386 = vmatprep.subr.mxu0 0.0
  %1387 = vmatpush1.msra.mxu0 0.0
  %1388 = vmatprep.subr.mxu0 0.0
  %1389 = vmatpush1.msra.mxu0 0.0
  %1390 = vmatprep.subr.mxu0 0.0
  %1391 = vmatpush1.msra.mxu0 0.0
  %1392 = vmatprep.subr.mxu0 0.0
  %1393 = vmatpush1.msra.mxu0 0.0
  %1394 = vmatprep.subr.mxu0 0.0
  %1395 = vmatpush1.msra.mxu0 0.0
  %1396 = vmatprep.subr.mxu0 0.0
  %1397 = vmatpush1.msra.mxu0 0.0
  %1398 = vmatprep.subr.mxu0 0.0
  %1399 = vmatpush1.msra.mxu0 0.0
  %1400 = vmatprep.subr.mxu0 0.0
  %1401 = vmatpush1.msra.mxu0 0.0
  %1402 = vmatprep.subr.mxu0 0.0
  %1403 = vmatpush1.msra.mxu0 0.0
  %1404 = vmatprep.subr.mxu0 0.0
  %1405 = vmatpush1.msra.mxu0 0.0
  %1406 = vmatprep.subr.mxu0 0.0
  %1407 = vmatpush1.msra.mxu0 0.0
  %1408 = vmatprep.mubr.f32.mxu0 0.0
  %1409 = vmatmul.mubr.f32.gmra.mrb[0].mxu0 %v1342
  %v1410 = vpop.f32.mrb[0].mxu0
  %v1411 = vadd.f32 %v836, %v1410
  %v1412 = vpop.f32.mrb[0].mxu0
  %1413 = vdwg.mxu0
  %s1414 = scalar_lea.vmem %s18, 2
  %1415 = vst.msk [vmem:[%s1414] sm:$0x3] %vm913, %v1411
  %v1416 = vsel %vm913, %v1411, -inf
  %1417 = vmax.xlane.f32.xlu0 %v1416
  %v1418 = vpop.xlane.xlu0 %1417
  %vm1419 = vcmp.eq.f32.partialorder %v1411, %v1418
  %v1420 = vsel %vm1419, %v471, 16
  %v1421 = vsel %vm913, %v1420, 2147483647
  %v1422 = vand.u32 %v1421, 65535
  %v1423 = vshra.s32 %v1421, 16
  %v1424 = vcvt.s32.f32 %v1422
  %v1425 = vcvt.s32.f32 %v1423
  %1426 = vmin.xlane.f32.xlu0 %v1425
  %v1427 = vpop.xlane.xlu0 %1426
  %vm1428 = vcmp.eq.f32.partialorder %v1425, %v1427
  %v1429 = vsel %vm1428, %v1424, inf
  %1430 = vmin.xlane.f32.xlu0 %v1429
  %v1431 = vpop.xlane.xlu0 %1430
  %v1432 = vcvt.f32.s32 %v1431
  %v1433 = vcvt.f32.s32 %v1427
  %v1434 = vshll.u32 %v1433, 16
  %v1435 = vadd.s32 %v1434, %v1432
  %vm1436 = vcmp.eq.s32.totalorder %v471, %v1435
  %v1437 = vsel %vm1436, 1, 0
  %v1438 = vcvt.s32.f32 %v1437
  %1439 = vmatprep.subr.mxu0 0.0
  %1440 = vmatpush1.msra.mxu0 %v445
  %1441 = vmatprep.subr.mxu0 0.0
  %1442 = vmatpush1.msra.mxu0 %v446
  %1443 = vmatprep.subr.mxu0 0.0
  %1444 = vmatpush1.msra.mxu0 %v447
  %1445 = vmatprep.subr.mxu0 0.0
  %1446 = vmatpush1.msra.mxu0 %v448
  %1447 = vmatprep.subr.mxu0 0.0
  %1448 = vmatpush1.msra.mxu0 0.0
  %1449 = vmatprep.subr.mxu0 0.0
  %1450 = vmatpush1.msra.mxu0 0.0
  %1451 = vmatprep.subr.mxu0 0.0
  %1452 = vmatpush1.msra.mxu0 0.0
  %1453 = vmatprep.subr.mxu0 0.0
  %1454 = vmatpush1.msra.mxu0 0.0
  %1455 = vmatprep.subr.mxu0 0.0
  %1456 = vmatpush1.msra.mxu0 0.0
  %1457 = vmatprep.subr.mxu0 0.0
  %1458 = vmatpush1.msra.mxu0 0.0
  %1459 = vmatprep.subr.mxu0 0.0
  %1460 = vmatpush1.msra.mxu0 0.0
  %1461 = vmatprep.subr.mxu0 0.0
  %1462 = vmatpush1.msra.mxu0 0.0
  %1463 = vmatprep.subr.mxu0 0.0
  %1464 = vmatpush1.msra.mxu0 0.0
  %1465 = vmatprep.subr.mxu0 0.0
  %1466 = vmatpush1.msra.mxu0 0.0
  %1467 = vmatprep.subr.mxu0 0.0
  %1468 = vmatpush1.msra.mxu0 0.0
  %1469 = vmatprep.subr.mxu0 0.0
  %1470 = vmatpush1.msra.mxu0 0.0
  %1471 = vmatprep.subr.mxu0 0.0
  %1472 = vmatpush1.msra.mxu0 0.0
  %1473 = vmatprep.subr.mxu0 0.0
  %1474 = vmatpush1.msra.mxu0 0.0
  %1475 = vmatprep.subr.mxu0 0.0
  %1476 = vmatpush1.msra.mxu0 0.0
  %1477 = vmatprep.subr.mxu0 0.0
  %1478 = vmatpush1.msra.mxu0 0.0
  %1479 = vmatprep.subr.mxu0 0.0
  %1480 = vmatpush1.msra.mxu0 0.0
  %1481 = vmatprep.subr.mxu0 0.0
  %1482 = vmatpush1.msra.mxu0 0.0
  %1483 = vmatprep.subr.mxu0 0.0
  %1484 = vmatpush1.msra.mxu0 0.0
  %1485 = vmatprep.subr.mxu0 0.0
  %1486 = vmatpush1.msra.mxu0 0.0
  %1487 = vmatprep.subr.mxu0 0.0
  %1488 = vmatpush1.msra.mxu0 0.0
  %1489 = vmatprep.subr.mxu0 0.0
  %1490 = vmatpush1.msra.mxu0 0.0
  %1491 = vmatprep.subr.mxu0 0.0
  %1492 = vmatpush1.msra.mxu0 0.0
  %1493 = vmatprep.subr.mxu0 0.0
  %1494 = vmatpush1.msra.mxu0 0.0
  %1495 = vmatprep.subr.mxu0 0.0
  %1496 = vmatpush1.msra.mxu0 0.0
  %1497 = vmatprep.subr.mxu0 0.0
  %1498 = vmatpush1.msra.mxu0 0.0
  %1499 = vmatprep.subr.mxu0 0.0
  %1500 = vmatpush1.msra.mxu0 0.0
  %1501 = vmatprep.subr.mxu0 0.0
  %1502 = vmatpush1.msra.mxu0 0.0
  %1503 = vmatprep.mubr.f32.mxu0 0.0
  %1504 = vmatmul.mubr.f32.gmra.mrb[0].mxu0 %v1342
  %v1505 = vpop.f32.mrb[0].mxu0
  %v1506 = vadd.f32 %v476, %v1505
  %v1507 = vpop.f32.mrb[0].mxu0
  %1508 = vdwg.mxu0
  %v1511 = vunpack.c.l.s4 1966171168
  %v1512 = vunpack.c.0.s8 %v1511
  %v1513 = vlaneseq
  %v1514 = vshrl.u32 %v1513, 7
  %v1515 = vsub.s32 %v1512, %v1514
  %v1516 = vrot.slane %v1506, %v1515
  %v1517 = vcombine.high %v1516, %v1516
  %v1519 = vunpack.c.l.s4 1966171168
  %v1520 = vunpack.c.0.s8 %v1519
  %v1521 = vlaneseq
  %v1522 = vshrl.u32 %v1521, 7
  %v1523 = vsub.s32 %v1520, %v1522
  %v1524 = vrot.slane %v1516, %v1523
  %v1526 = vunpack.c.l.s4 1966171168
  %v1527 = vunpack.c.0.s8 %v1526
  %v1528 = vlaneseq
  %v1529 = vshrl.u32 %v1528, 7
  %v1530 = vsub.s32 %v1527, %v1529
  %v1531 = vrot.slane %v1517, %v1530
  %v1532 = vlaneseq
  %v1533 = vshrl.u32 %v1532, 7
  %v1534 = vsub.s32 0, %v1533
  %v1535 = vrot.slane %v1524, %v1534
  %v1536 = vlaneseq
  %v1537 = vshrl.u32 %v1536, 7
  %v1538 = vsub.s32 0, %v1537
  %v1539 = vrot.slane %v1531, %v1538
  %v1542 = vadd.f32 %v1535, %v243
  %v1543 = vadd.f32 %v1539, %v248
  %v1544 = vtanh.pop %v1542
  %v1545 = vtanh.pop %v1543
  %v1546 = vmul.f32 %v1544, %v592
  %v1547 = vmul.f32 %v1545, %v592
  %v1548 = vsel %vm169, %v1546, 0.0
  %1549 = vadd.xlane.f32.xlu0 %v1548
  %v1550 = vpop.xlane.xlu0 %1549
  %v1551 = vsel %vm169, %v1547, 0.0
  %1552 = vadd.xlane.f32.xlu0 %v1551
  %v1553 = vpop.xlane.xlu0 %1552
  %v1554 = vadd.f32 %v1550, %v609
  %v1555 = vadd.f32 %v1553, %v609
  %v1558 = vlaneseq
  %v1559 = vshrl.u32 %v1558, 7
  %v1560 = vsub.s32 %v471, %v1559
  %v1561 = vrot.slane %v1554, %v1560
  %v1562 = vlaneseq
  %v1563 = vshrl.u32 %v1562, 7
  %v1564 = vsub.s32 %v471, %v1563
  %v1565 = vrot.slane %v1555, %v1564
  %v1566 = vsel %vm279, %v1565, %v1561
  %v1568 = vsel %vm625, %v1566, -inf
  %1569 = vmax.xlane.f32.xlu0 %v1568
  %v1570 = vpop.xlane.xlu0 %1569
  %v1572 = vlaneseq
  %v1573 = vshrl.u32 %v1572, 7
  %v1574 = vsub.s32 0, %v1573
  %v1575 = vrot.slane %v1570, %v1574
  %v1576 = vlaneseq
  %v1577 = vshrl.u32 %v1576, 7
  %v1578 = vsub.s32 1, %v1577
  %v1579 = vrot.slane %v1570, %v1578
  %v1582 = vsub.f32 %v1554, %v1575
  %v1583 = vsub.f32 %v1555, %v1579
  %v1584 = vmul.f32 %v1582, 1.442695
  %v1585 = vpow.pop %v1584
  %v1586 = vmul.f32 %v1583, 1.442695
  %v1587 = vpow.pop %v1586
  %1590 = vset.pattern.permute.xlu0 0
  %1591 = vperm.xlu0 %1590, %v1585
  %v1592 = vpop.permute.xlu0 %1591
  %1593 = vset.pattern.permute.xlu0 0
  %1594 = vperm.xlu0 %1593, %v1587
  %v1595 = vpop.permute.xlu0 %1594
  %v1596 = vlaneseq
  %v1597 = vshrl.u32 %v1596, 7
  %v1598 = vsub.s32 %v471, %v1597
  %v1599 = vrot.slane %v1592, %v1598
  %v1600 = vlaneseq
  %v1601 = vshrl.u32 %v1600, 7
  %v1602 = vsub.s32 %v471, %v1601
  %v1603 = vrot.slane %v1595, %v1602
  %v1604 = vsel %vm279, %v1603, %v1599
  %v1606 = vsel %vm625, %v1604, 0.0
  %1607 = vadd.xlane.f32.xlu0 %v1606
  %v1608 = vpop.xlane.xlu0 %1607
  %v1610 = vlaneseq
  %v1611 = vshrl.u32 %v1610, 7
  %v1612 = vsub.s32 0, %v1611
  %v1613 = vrot.slane %v1608, %v1612
  %v1614 = vlaneseq
  %v1615 = vshrl.u32 %v1614, 7
  %v1616 = vsub.s32 1, %v1615
  %v1617 = vrot.slane %v1608, %v1616
  %v1620 = vrcp.pop %v1613
  %v1621 = vmul.f32 %v1585, %v1620
  %v1622 = vrcp.pop %v1617
  %v1623 = vmul.f32 %v1587, %v1622
  %1626 = vset.pattern.permute.xlu0 0
  %1627 = vperm.xlu0 %1626, %v1621
  %v1628 = vpop.permute.xlu0 %1627
  %1629 = vset.pattern.permute.xlu0 0
  %1630 = vperm.xlu0 %1629, %v1623
  %v1631 = vpop.permute.xlu0 %1630
  %v1632 = vlaneseq
  %v1633 = vshrl.u32 %v1632, 7
  %v1634 = vsub.s32 %v471, %v1633
  %v1635 = vrot.slane %v1628, %v1634
  %v1636 = vlaneseq
  %v1637 = vshrl.u32 %v1636, 7
  %v1638 = vsub.s32 %v471, %v1637
  %v1639 = vrot.slane %v1631, %v1638
  %v1640 = vsel %vm279, %v1639, %v1635
  %s1642 = scalar_lea.vmem %s19, 4
  %1643 = vst.msk [vmem:[%s1642] sm:$0x3] %vm625, %v1640
  %v1646 = vmul.f32 %v1628, %v158
  %v1647 = vmul.f32 %v1631, %v159
  %v1648 = vsel %vm169, %v1646, 0.0
  %v1649 = vrot.slane %v1648, 4
  %v1650 = vadd.f32 %v1648, %v1649
  %v1651 = vrot.slane %v1650, 2
  %v1652 = vadd.f32 %v1650, %v1651
  %v1653 = vrot.slane %v1652, 1
  %v1654 = vadd.f32 %v1652, %v1653
  %v1655 = vsel %vm169, %v1647, 0.0
  %v1656 = vrot.slane %v1655, 4
  %v1657 = vadd.f32 %v1655, %v1656
  %v1658 = vrot.slane %v1657, 2
  %v1659 = vadd.f32 %v1657, %v1658
  %v1660 = vrot.slane %v1659, 1
  %v1661 = vadd.f32 %v1659, %v1660
  %v1664 = vsel %vm279, %v1661, %v1654
  %v1667 = vsel %vm169, %v1438, 0
  %1669 = vmatprep.subr.mxu0 0.0
  %1670 = vmatpush1.msra.mxu0 %v464
  %1671 = vmatprep.subr.mxu0 0.0
  %1672 = vmatpush1.msra.mxu0 %v465
  %1673 = vmatprep.subr.mxu0 0.0
  %1674 = vmatpush1.msra.mxu0 0.0
  %1675 = vmatprep.subr.mxu0 0.0
  %1676 = vmatpush1.msra.mxu0 0.0
  %1677 = vmatprep.subr.mxu0 0.0
  %1678 = vmatpush1.msra.mxu0 0.0
  %1679 = vmatprep.subr.mxu0 0.0
  %1680 = vmatpush1.msra.mxu0 0.0
  %1681 = vmatprep.subr.mxu0 0.0
  %1682 = vmatpush1.msra.mxu0 0.0
  %1683 = vmatprep.subr.mxu0 0.0
  %1684 = vmatpush1.msra.mxu0 0.0
  %1685 = vmatprep.subr.mxu0 0.0
  %1686 = vmatpush1.msra.mxu0 0.0
  %1687 = vmatprep.subr.mxu0 0.0
  %1688 = vmatpush1.msra.mxu0 0.0
  %1689 = vmatprep.subr.mxu0 0.0
  %1690 = vmatpush1.msra.mxu0 0.0
  %1691 = vmatprep.subr.mxu0 0.0
  %1692 = vmatpush1.msra.mxu0 0.0
  %1693 = vmatprep.subr.mxu0 0.0
  %1694 = vmatpush1.msra.mxu0 0.0
  %1695 = vmatprep.subr.mxu0 0.0
  %1696 = vmatpush1.msra.mxu0 0.0
  %1697 = vmatprep.subr.mxu0 0.0
  %1698 = vmatpush1.msra.mxu0 0.0
  %1699 = vmatprep.subr.mxu0 0.0
  %1700 = vmatpush1.msra.mxu0 0.0
  %1701 = vmatprep.subr.mxu0 0.0
  %1702 = vmatpush1.msra.mxu0 0.0
  %1703 = vmatprep.subr.mxu0 0.0
  %1704 = vmatpush1.msra.mxu0 0.0
  %1705 = vmatprep.subr.mxu0 0.0
  %1706 = vmatpush1.msra.mxu0 0.0
  %1707 = vmatprep.subr.mxu0 0.0
  %1708 = vmatpush1.msra.mxu0 0.0
  %1709 = vmatprep.subr.mxu0 0.0
  %1710 = vmatpush1.msra.mxu0 0.0
  %1711 = vmatprep.subr.mxu0 0.0
  %1712 = vmatpush1.msra.mxu0 0.0
  %1713 = vmatprep.subr.mxu0 0.0
  %1714 = vmatpush1.msra.mxu0 0.0
  %1715 = vmatprep.subr.mxu0 0.0
  %1716 = vmatpush1.msra.mxu0 0.0
  %1717 = vmatprep.subr.mxu0 0.0
  %1718 = vmatpush1.msra.mxu0 0.0
  %1719 = vmatprep.subr.mxu0 0.0
  %1720 = vmatpush1.msra.mxu0 0.0
  %1721 = vmatprep.subr.mxu0 0.0
  %1722 = vmatpush1.msra.mxu0 0.0
  %1723 = vmatprep.subr.mxu0 0.0
  %1724 = vmatpush1.msra.mxu0 0.0
  %1725 = vmatprep.subr.mxu0 0.0
  %1726 = vmatpush1.msra.mxu0 0.0
  %1727 = vmatprep.subr.mxu0 0.0
  %1728 = vmatpush1.msra.mxu0 0.0
  %1729 = vmatprep.subr.mxu0 0.0
  %1730 = vmatpush1.msra.mxu0 0.0
  %1731 = vmatprep.subr.mxu0 0.0
  %1732 = vmatpush1.msra.mxu0 0.0
  %1733 = vmatprep.mubr.f32.mxu0 0.0
  %1734 = vmatmul.mubr.f32.gmra.mrb[0].mxu0 %v1667
  %v1735 = vpop.f32.mrb[0].mxu0
  %v1736 = vadd.f32 %v1664, %v1735
  %v1737 = vpop.f32.mrb[0].mxu0
  %1738 = vdwg.mxu0
  %1739 = vrot.lane.b32.xlu0 %v1338, 48
  %v1740 = vpop.permute.xlu0 %1739
  %v1742 = vsel %vm169, %v1736, %v1740
  %v1744 = vsel %vm734, %v1742, 0
  %1746 = vmatprep.subr.mxu0 0.0
  %1747 = vmatpush1.msra.mxu0 %v452
  %1748 = vmatprep.subr.mxu0 0.0
  %1749 = vmatpush1.msra.mxu0 %v453
  %1750 = vmatprep.subr.mxu0 0.0
  %1751 = vmatpush1.msra.mxu0 %v454
  %1752 = vmatprep.subr.mxu0 0.0
  %1753 = vmatpush1.msra.mxu0 %v455
  %1754 = vmatprep.subr.mxu0 0.0
  %1755 = vmatpush1.msra.mxu0 %v456
  %1756 = vmatprep.subr.mxu0 0.0
  %1757 = vmatpush1.msra.mxu0 %v457
  %1758 = vmatprep.subr.mxu0 0.0
  %1759 = vmatpush1.msra.mxu0 0.0
  %1760 = vmatprep.subr.mxu0 0.0
  %1761 = vmatpush1.msra.mxu0 0.0
  %1762 = vmatprep.subr.mxu0 0.0
  %1763 = vmatpush1.msra.mxu0 0.0
  %1764 = vmatprep.subr.mxu0 0.0
  %1765 = vmatpush1.msra.mxu0 0.0
  %1766 = vmatprep.subr.mxu0 0.0
  %1767 = vmatpush1.msra.mxu0 0.0
  %1768 = vmatprep.subr.mxu0 0.0
  %1769 = vmatpush1.msra.mxu0 0.0
  %1770 = vmatprep.subr.mxu0 0.0
  %1771 = vmatpush1.msra.mxu0 0.0
  %1772 = vmatprep.subr.mxu0 0.0
  %1773 = vmatpush1.msra.mxu0 0.0
  %1774 = vmatprep.subr.mxu0 0.0
  %1775 = vmatpush1.msra.mxu0 0.0
  %1776 = vmatprep.subr.mxu0 0.0
  %1777 = vmatpush1.msra.mxu0 0.0
  %1778 = vmatprep.subr.mxu0 0.0
  %1779 = vmatpush1.msra.mxu0 0.0
  %1780 = vmatprep.subr.mxu0 0.0
  %1781 = vmatpush1.msra.mxu0 0.0
  %1782 = vmatprep.subr.mxu0 0.0
  %1783 = vmatpush1.msra.mxu0 0.0
  %1784 = vmatprep.subr.mxu0 0.0
  %1785 = vmatpush1.msra.mxu0 0.0
  %1786 = vmatprep.subr.mxu0 0.0
  %1787 = vmatpush1.msra.mxu0 0.0
  %1788 = vmatprep.subr.mxu0 0.0
  %1789 = vmatpush1.msra.mxu0 0.0
  %1790 = vmatprep.subr.mxu0 0.0
  %1791 = vmatpush1.msra.mxu0 0.0
  %1792 = vmatprep.subr.mxu0 0.0
  %1793 = vmatpush1.msra.mxu0 0.0
  %1794 = vmatprep.subr.mxu0 0.0
  %1795 = vmatpush1.msra.mxu0 0.0
  %1796 = vmatprep.subr.mxu0 0.0
  %1797 = vmatpush1.msra.mxu0 0.0
  %1798 = vmatprep.subr.mxu0 0.0
  %1799 = vmatpush1.msra.mxu0 0.0
  %1800 = vmatprep.subr.mxu0 0.0
  %1801 = vmatpush1.msra.mxu0 0.0
  %1802 = vmatprep.subr.mxu0 0.0
  %1803 = vmatpush1.msra.mxu0 0.0
  %1804 = vmatprep.subr.mxu0 0.0
  %1805 = vmatpush1.msra.mxu0 0.0
  %1806 = vmatprep.subr.mxu0 0.0
  %1807 = vmatpush1.msra.mxu0 0.0
  %1808 = vmatprep.subr.mxu0 0.0
  %1809 = vmatpush1.msra.mxu0 0.0
  %1810 = vmatprep.mubr.f32.mxu0 0.0
  %1811 = vmatmul.mubr.f32.gmra.mrb[0].mxu0 %v1744
  %v1812 = vpop.f32.mrb[0].mxu0
  %v1813 = vadd.f32 %v732, %v1812
  %v1814 = vpop.f32.mrb[0].mxu0
  %1815 = vdwg.mxu0
  %v1816 = vxor.u32 %v1813, 2147483648
  %v1817 = vmul.f32 %v1816, 1.442695
  %v1818 = vpow.pop %v1817
  %v1819 = vadd.f32 %v1818, 1.0
  %v1820 = vrcp.pop %v1819
  %v1821 = vmul.f32 1.0, %v1820
  %v1822 = vtanh.pop %v1813
  %v1823 = vmul.f32 %v1821, %v1332
  %1825 = vrot.lane.b32.xlu0 %v1822, 64
  %v1826 = vpop.permute.xlu0 %1825
  %v1828 = vmul.f32 %v1821, %v1826
  %1830 = vrot.lane.b32.xlu0 %v1828, 32
  %v1831 = vpop.permute.xlu0 %1830
  %v1833 = vadd.f32 %v1823, %v1831
  %v1834 = vtanh.pop %v1833
  %1836 = vrot.lane.b32.xlu0 %v1834, 64
  %v1837 = vpop.permute.xlu0 %1836
  %v1839 = vmul.f32 %v1821, %v1837
  %1841 = vrot.lane.b32.xlu0 %v1839, 32
  %v1842 = vpop.permute.xlu0 %1841
  %v1843 = vsel %vm76, %v1842, 0
  %1845 = vmatprep.subr.mxu0 0.0
  %1846 = vmatpush1.msra.mxu0 %v459
  %1847 = vmatprep.subr.mxu0 0.0
  %1848 = vmatpush1.msra.mxu0 %v460
  %1849 = vmatprep.subr.mxu0 0.0
  %1850 = vmatpush1.msra.mxu0 %v461
  %1851 = vmatprep.subr.mxu0 0.0
  %1852 = vmatpush1.msra.mxu0 %v462
  %1853 = vmatprep.subr.mxu0 0.0
  %1854 = vmatpush1.msra.mxu0 0.0
  %1855 = vmatprep.subr.mxu0 0.0
  %1856 = vmatpush1.msra.mxu0 0.0
  %1857 = vmatprep.subr.mxu0 0.0
  %1858 = vmatpush1.msra.mxu0 0.0
  %1859 = vmatprep.subr.mxu0 0.0
  %1860 = vmatpush1.msra.mxu0 0.0
  %1861 = vmatprep.subr.mxu0 0.0
  %1862 = vmatpush1.msra.mxu0 0.0
  %1863 = vmatprep.subr.mxu0 0.0
  %1864 = vmatpush1.msra.mxu0 0.0
  %1865 = vmatprep.subr.mxu0 0.0
  %1866 = vmatpush1.msra.mxu0 0.0
  %1867 = vmatprep.subr.mxu0 0.0
  %1868 = vmatpush1.msra.mxu0 0.0
  %1869 = vmatprep.subr.mxu0 0.0
  %1870 = vmatpush1.msra.mxu0 0.0
  %1871 = vmatprep.subr.mxu0 0.0
  %1872 = vmatpush1.msra.mxu0 0.0
  %1873 = vmatprep.subr.mxu0 0.0
  %1874 = vmatpush1.msra.mxu0 0.0
  %1875 = vmatprep.subr.mxu0 0.0
  %1876 = vmatpush1.msra.mxu0 0.0
  %1877 = vmatprep.subr.mxu0 0.0
  %1878 = vmatpush1.msra.mxu0 0.0
  %1879 = vmatprep.subr.mxu0 0.0
  %1880 = vmatpush1.msra.mxu0 0.0
  %1881 = vmatprep.subr.mxu0 0.0
  %1882 = vmatpush1.msra.mxu0 0.0
  %1883 = vmatprep.subr.mxu0 0.0
  %1884 = vmatpush1.msra.mxu0 0.0
  %1885 = vmatprep.subr.mxu0 0.0
  %1886 = vmatpush1.msra.mxu0 0.0
  %1887 = vmatprep.subr.mxu0 0.0
  %1888 = vmatpush1.msra.mxu0 0.0
  %1889 = vmatprep.subr.mxu0 0.0
  %1890 = vmatpush1.msra.mxu0 0.0
  %1891 = vmatprep.subr.mxu0 0.0
  %1892 = vmatpush1.msra.mxu0 0.0
  %1893 = vmatprep.subr.mxu0 0.0
  %1894 = vmatpush1.msra.mxu0 0.0
  %1895 = vmatprep.subr.mxu0 0.0
  %1896 = vmatpush1.msra.mxu0 0.0
  %1897 = vmatprep.subr.mxu0 0.0
  %1898 = vmatpush1.msra.mxu0 0.0
  %1899 = vmatprep.subr.mxu0 0.0
  %1900 = vmatpush1.msra.mxu0 0.0
  %1901 = vmatprep.subr.mxu0 0.0
  %1902 = vmatpush1.msra.mxu0 0.0
  %1903 = vmatprep.subr.mxu0 0.0
  %1904 = vmatpush1.msra.mxu0 0.0
  %1905 = vmatprep.subr.mxu0 0.0
  %1906 = vmatpush1.msra.mxu0 0.0
  %1907 = vmatprep.subr.mxu0 0.0
  %1908 = vmatpush1.msra.mxu0 0.0
  %1909 = vmatprep.mubr.f32.mxu0 0.0
  %1910 = vmatmul.mubr.f32.gmra.mrb[0].mxu0 %v1843
  %v1911 = vpop.f32.mrb[0].mxu0
  %v1912 = vadd.f32 %v836, %v1911
  %v1913 = vpop.f32.mrb[0].mxu0
  %1914 = vdwg.mxu0
  %s1915 = scalar_lea.vmem %s18, 4
  %1916 = vst.msk [vmem:[%s1915] sm:$0x3] %vm913, %v1912
  %v1917 = vsel %vm913, %v1912, -inf
  %1918 = vmax.xlane.f32.xlu0 %v1917
  %v1919 = vpop.xlane.xlu0 %1918
  %vm1920 = vcmp.eq.f32.partialorder %v1912, %v1919
  %v1921 = vsel %vm1920, %v471, 16
  %v1922 = vsel %vm913, %v1921, 2147483647
  %v1923 = vand.u32 %v1922, 65535
  %v1924 = vshra.s32 %v1922, 16
  %v1925 = vcvt.s32.f32 %v1923
  %v1926 = vcvt.s32.f32 %v1924
  %1927 = vmin.xlane.f32.xlu0 %v1926
  %v1928 = vpop.xlane.xlu0 %1927
  %vm1929 = vcmp.eq.f32.partialorder %v1926, %v1928
  %v1930 = vsel %vm1929, %v1925, inf
  %1931 = vmin.xlane.f32.xlu0 %v1930
  %v1932 = vpop.xlane.xlu0 %1931
  %v1933 = vcvt.f32.s32 %v1932
  %v1934 = vcvt.f32.s32 %v1928
  %v1935 = vshll.u32 %v1934, 16
  %v1936 = vadd.s32 %v1935, %v1933
  %vm1937 = vcmp.eq.s32.totalorder %v471, %v1936
  %v1938 = vsel %vm1937, 1, 0
  %v1939 = vcvt.s32.f32 %v1938
  %1940 = vmatprep.subr.mxu0 0.0
  %1941 = vmatpush1.msra.mxu0 %v445
  %1942 = vmatprep.subr.mxu0 0.0
  %1943 = vmatpush1.msra.mxu0 %v446
  %1944 = vmatprep.subr.mxu0 0.0
  %1945 = vmatpush1.msra.mxu0 %v447
  %1946 = vmatprep.subr.mxu0 0.0
  %1947 = vmatpush1.msra.mxu0 %v448
  %1948 = vmatprep.subr.mxu0 0.0
  %1949 = vmatpush1.msra.mxu0 0.0
  %1950 = vmatprep.subr.mxu0 0.0
  %1951 = vmatpush1.msra.mxu0 0.0
  %1952 = vmatprep.subr.mxu0 0.0
  %1953 = vmatpush1.msra.mxu0 0.0
  %1954 = vmatprep.subr.mxu0 0.0
  %1955 = vmatpush1.msra.mxu0 0.0
  %1956 = vmatprep.subr.mxu0 0.0
  %1957 = vmatpush1.msra.mxu0 0.0
  %1958 = vmatprep.subr.mxu0 0.0
  %1959 = vmatpush1.msra.mxu0 0.0
  %1960 = vmatprep.subr.mxu0 0.0
  %1961 = vmatpush1.msra.mxu0 0.0
  %1962 = vmatprep.subr.mxu0 0.0
  %1963 = vmatpush1.msra.mxu0 0.0
  %1964 = vmatprep.subr.mxu0 0.0
  %1965 = vmatpush1.msra.mxu0 0.0
  %1966 = vmatprep.subr.mxu0 0.0
  %1967 = vmatpush1.msra.mxu0 0.0
  %1968 = vmatprep.subr.mxu0 0.0
  %1969 = vmatpush1.msra.mxu0 0.0
  %1970 = vmatprep.subr.mxu0 0.0
  %1971 = vmatpush1.msra.mxu0 0.0
  %1972 = vmatprep.subr.mxu0 0.0
  %1973 = vmatpush1.msra.mxu0 0.0
  %1974 = vmatprep.subr.mxu0 0.0
  %1975 = vmatpush1.msra.mxu0 0.0
  %1976 = vmatprep.subr.mxu0 0.0
  %1977 = vmatpush1.msra.mxu0 0.0
  %1978 = vmatprep.subr.mxu0 0.0
  %1979 = vmatpush1.msra.mxu0 0.0
  %1980 = vmatprep.subr.mxu0 0.0
  %1981 = vmatpush1.msra.mxu0 0.0
  %1982 = vmatprep.subr.mxu0 0.0
  %1983 = vmatpush1.msra.mxu0 0.0
  %1984 = vmatprep.subr.mxu0 0.0
  %1985 = vmatpush1.msra.mxu0 0.0
  %1986 = vmatprep.subr.mxu0 0.0
  %1987 = vmatpush1.msra.mxu0 0.0
  %1988 = vmatprep.subr.mxu0 0.0
  %1989 = vmatpush1.msra.mxu0 0.0
  %1990 = vmatprep.subr.mxu0 0.0
  %1991 = vmatpush1.msra.mxu0 0.0
  %1992 = vmatprep.subr.mxu0 0.0
  %1993 = vmatpush1.msra.mxu0 0.0
  %1994 = vmatprep.subr.mxu0 0.0
  %1995 = vmatpush1.msra.mxu0 0.0
  %1996 = vmatprep.subr.mxu0 0.0
  %1997 = vmatpush1.msra.mxu0 0.0
  %1998 = vmatprep.subr.mxu0 0.0
  %1999 = vmatpush1.msra.mxu0 0.0
  %2000 = vmatprep.subr.mxu0 0.0
  %2001 = vmatpush1.msra.mxu0 0.0
  %2002 = vmatprep.subr.mxu0 0.0
  %2003 = vmatpush1.msra.mxu0 0.0
  %2004 = vmatprep.mubr.f32.mxu0 0.0
  %2005 = vmatmul.mubr.f32.gmra.mrb[0].mxu0 %v1843
  %v2006 = vpop.f32.mrb[0].mxu0
  %v2007 = vadd.f32 %v476, %v2006
  %v2008 = vpop.f32.mrb[0].mxu0
  %2009 = vdwg.mxu0
  %v2012 = vunpack.c.l.s4 1966171168
  %v2013 = vunpack.c.0.s8 %v2012
  %v2014 = vlaneseq
  %v2015 = vshrl.u32 %v2014, 7
  %v2016 = vsub.s32 %v2013, %v2015
  %v2017 = vrot.slane %v2007, %v2016
  %v2018 = vcombine.high %v2017, %v2017
  %v2020 = vunpack.c.l.s4 1966171168
  %v2021 = vunpack.c.0.s8 %v2020
  %v2022 = vlaneseq
  %v2023 = vshrl.u32 %v2022, 7
  %v2024 = vsub.s32 %v2021, %v2023
  %v2025 = vrot.slane %v2017, %v2024
  %v2027 = vunpack.c.l.s4 1966171168
  %v2028 = vunpack.c.0.s8 %v2027
  %v2029 = vlaneseq
  %v2030 = vshrl.u32 %v2029, 7
  %v2031 = vsub.s32 %v2028, %v2030
  %v2032 = vrot.slane %v2018, %v2031
  %v2033 = vlaneseq
  %v2034 = vshrl.u32 %v2033, 7
  %v2035 = vsub.s32 0, %v2034
  %v2036 = vrot.slane %v2025, %v2035
  %v2037 = vlaneseq
  %v2038 = vshrl.u32 %v2037, 7
  %v2039 = vsub.s32 0, %v2038
  %v2040 = vrot.slane %v2032, %v2039
  %v2043 = vadd.f32 %v2036, %v243
  %v2044 = vadd.f32 %v2040, %v248
  %v2045 = vtanh.pop %v2043
  %v2046 = vtanh.pop %v2044
  %v2047 = vmul.f32 %v2045, %v592
  %v2048 = vmul.f32 %v2046, %v592
  %v2049 = vsel %vm169, %v2047, 0.0
  %2050 = vadd.xlane.f32.xlu0 %v2049
  %v2051 = vpop.xlane.xlu0 %2050
  %v2052 = vsel %vm169, %v2048, 0.0
  %2053 = vadd.xlane.f32.xlu0 %v2052
  %v2054 = vpop.xlane.xlu0 %2053
  %v2055 = vadd.f32 %v2051, %v609
  %v2056 = vadd.f32 %v2054, %v609
  %v2059 = vlaneseq
  %v2060 = vshrl.u32 %v2059, 7
  %v2061 = vsub.s32 %v471, %v2060
  %v2062 = vrot.slane %v2055, %v2061
  %v2063 = vlaneseq
  %v2064 = vshrl.u32 %v2063, 7
  %v2065 = vsub.s32 %v471, %v2064
  %v2066 = vrot.slane %v2056, %v2065
  %v2067 = vsel %vm279, %v2066, %v2062
  %v2069 = vsel %vm625, %v2067, -inf
  %2070 = vmax.xlane.f32.xlu0 %v2069
  %v2071 = vpop.xlane.xlu0 %2070
  %v2073 = vlaneseq
  %v2074 = vshrl.u32 %v2073, 7
  %v2075 = vsub.s32 0, %v2074
  %v2076 = vrot.slane %v2071, %v2075
  %v2077 = vlaneseq
  %v2078 = vshrl.u32 %v2077, 7
  %v2079 = vsub.s32 1, %v2078
  %v2080 = vrot.slane %v2071, %v2079
  %v2083 = vsub.f32 %v2055, %v2076
  %v2084 = vsub.f32 %v2056, %v2080
  %v2085 = vmul.f32 %v2083, 1.442695
  %v2086 = vpow.pop %v2085
  %v2087 = vmul.f32 %v2084, 1.442695
  %v2088 = vpow.pop %v2087
  %2091 = vset.pattern.permute.xlu0 0
  %2092 = vperm.xlu0 %2091, %v2086
  %v2093 = vpop.permute.xlu0 %2092
  %2094 = vset.pattern.permute.xlu0 0
  %2095 = vperm.xlu0 %2094, %v2088
  %v2096 = vpop.permute.xlu0 %2095
  %v2097 = vlaneseq
  %v2098 = vshrl.u32 %v2097, 7
  %v2099 = vsub.s32 %v471, %v2098
  %v2100 = vrot.slane %v2093, %v2099
  %v2101 = vlaneseq
  %v2102 = vshrl.u32 %v2101, 7
  %v2103 = vsub.s32 %v471, %v2102
  %v2104 = vrot.slane %v2096, %v2103
  %v2105 = vsel %vm279, %v2104, %v2100
  %v2107 = vsel %vm625, %v2105, 0.0
  %2108 = vadd.xlane.f32.xlu0 %v2107
  %v2109 = vpop.xlane.xlu0 %2108
  %v2111 = vlaneseq
  %v2112 = vshrl.u32 %v2111, 7
  %v2113 = vsub.s32 0, %v2112
  %v2114 = vrot.slane %v2109, %v2113
  %v2115 = vlaneseq
  %v2116 = vshrl.u32 %v2115, 7
  %v2117 = vsub.s32 1, %v2116
  %v2118 = vrot.slane %v2109, %v2117
  %v2121 = vrcp.pop %v2114
  %v2122 = vmul.f32 %v2086, %v2121
  %v2123 = vrcp.pop %v2118
  %v2124 = vmul.f32 %v2088, %v2123
  %2127 = vset.pattern.permute.xlu0 0
  %2128 = vperm.xlu0 %2127, %v2122
  %v2129 = vpop.permute.xlu0 %2128
  %2130 = vset.pattern.permute.xlu0 0
  %2131 = vperm.xlu0 %2130, %v2124
  %v2132 = vpop.permute.xlu0 %2131
  %v2133 = vlaneseq
  %v2134 = vshrl.u32 %v2133, 7
  %v2135 = vsub.s32 %v471, %v2134
  %v2136 = vrot.slane %v2129, %v2135
  %v2137 = vlaneseq
  %v2138 = vshrl.u32 %v2137, 7
  %v2139 = vsub.s32 %v471, %v2138
  %v2140 = vrot.slane %v2132, %v2139
  %v2141 = vsel %vm279, %v2140, %v2136
  %s2143 = scalar_lea.vmem %s19, 6
  %2144 = vst.msk [vmem:[%s2143] sm:$0x3] %vm625, %v2141
  %v2147 = vmul.f32 %v2129, %v158
  %v2148 = vmul.f32 %v2132, %v159
  %v2149 = vsel %vm169, %v2147, 0.0
  %v2150 = vrot.slane %v2149, 4
  %v2151 = vadd.f32 %v2149, %v2150
  %v2152 = vrot.slane %v2151, 2
  %v2153 = vadd.f32 %v2151, %v2152
  %v2154 = vrot.slane %v2153, 1
  %v2155 = vadd.f32 %v2153, %v2154
  %v2156 = vsel %vm169, %v2148, 0.0
  %v2157 = vrot.slane %v2156, 4
  %v2158 = vadd.f32 %v2156, %v2157
  %v2159 = vrot.slane %v2158, 2
  %v2160 = vadd.f32 %v2158, %v2159
  %v2161 = vrot.slane %v2160, 1
  %v2162 = vadd.f32 %v2160, %v2161
  %v2165 = vsel %vm279, %v2162, %v2155
  %v2168 = vsel %vm169, %v1939, 0
  %2170 = vmatprep.subr.mxu0 0.0
  %2171 = vmatpush1.msra.mxu0 %v464
  %2172 = vmatprep.subr.mxu0 0.0
  %2173 = vmatpush1.msra.mxu0 %v465
  %2174 = vmatprep.subr.mxu0 0.0
  %2175 = vmatpush1.msra.mxu0 0.0
  %2176 = vmatprep.subr.mxu0 0.0
  %2177 = vmatpush1.msra.mxu0 0.0
  %2178 = vmatprep.subr.mxu0 0.0
  %2179 = vmatpush1.msra.mxu0 0.0
  %2180 = vmatprep.subr.mxu0 0.0
  %2181 = vmatpush1.msra.mxu0 0.0
  %2182 = vmatprep.subr.mxu0 0.0
  %2183 = vmatpush1.msra.mxu0 0.0
  %2184 = vmatprep.subr.mxu0 0.0
  %2185 = vmatpush1.msra.mxu0 0.0
  %2186 = vmatprep.subr.mxu0 0.0
  %2187 = vmatpush1.msra.mxu0 0.0
  %2188 = vmatprep.subr.mxu0 0.0
  %2189 = vmatpush1.msra.mxu0 0.0
  %2190 = vmatprep.subr.mxu0 0.0
  %2191 = vmatpush1.msra.mxu0 0.0
  %2192 = vmatprep.subr.mxu0 0.0
  %2193 = vmatpush1.msra.mxu0 0.0
  %2194 = vmatprep.subr.mxu0 0.0
  %2195 = vmatpush1.msra.mxu0 0.0
  %2196 = vmatprep.subr.mxu0 0.0
  %2197 = vmatpush1.msra.mxu0 0.0
  %2198 = vmatprep.subr.mxu0 0.0
  %2199 = vmatpush1.msra.mxu0 0.0
  %2200 = vmatprep.subr.mxu0 0.0
  %2201 = vmatpush1.msra.mxu0 0.0
  %2202 = vmatprep.subr.mxu0 0.0
  %2203 = vmatpush1.msra.mxu0 0.0
  %2204 = vmatprep.subr.mxu0 0.0
  %2205 = vmatpush1.msra.mxu0 0.0
  %2206 = vmatprep.subr.mxu0 0.0
  %2207 = vmatpush1.msra.mxu0 0.0
  %2208 = vmatprep.subr.mxu0 0.0
  %2209 = vmatpush1.msra.mxu0 0.0
  %2210 = vmatprep.subr.mxu0 0.0
  %2211 = vmatpush1.msra.mxu0 0.0
  %2212 = vmatprep.subr.mxu0 0.0
  %2213 = vmatpush1.msra.mxu0 0.0
  %2214 = vmatprep.subr.mxu0 0.0
  %2215 = vmatpush1.msra.mxu0 0.0
  %2216 = vmatprep.subr.mxu0 0.0
  %2217 = vmatpush1.msra.mxu0 0.0
  %2218 = vmatprep.subr.mxu0 0.0
  %2219 = vmatpush1.msra.mxu0 0.0
  %2220 = vmatprep.subr.mxu0 0.0
  %2221 = vmatpush1.msra.mxu0 0.0
  %2222 = vmatprep.subr.mxu0 0.0
  %2223 = vmatpush1.msra.mxu0 0.0
  %2224 = vmatprep.subr.mxu0 0.0
  %2225 = vmatpush1.msra.mxu0 0.0
  %2226 = vmatprep.subr.mxu0 0.0
  %2227 = vmatpush1.msra.mxu0 0.0
  %2228 = vmatprep.subr.mxu0 0.0
  %2229 = vmatpush1.msra.mxu0 0.0
  %2230 = vmatprep.subr.mxu0 0.0
  %2231 = vmatpush1.msra.mxu0 0.0
  %2232 = vmatprep.subr.mxu0 0.0
  %2233 = vmatpush1.msra.mxu0 0.0
  %2234 = vmatprep.mubr.f32.mxu0 0.0
  %2235 = vmatmul.mubr.f32.gmra.mrb[0].mxu0 %v2168
  %v2236 = vpop.f32.mrb[0].mxu0
  %v2237 = vadd.f32 %v2165, %v2236
  %v2238 = vpop.f32.mrb[0].mxu0
  %2239 = vdwg.mxu0
  %2240 = vrot.lane.b32.xlu0 %v1839, 48
  %v2241 = vpop.permute.xlu0 %2240
  %v2243 = vsel %vm169, %v2237, %v2241
  %v2245 = vsel %vm734, %v2243, 0
  %2247 = vmatprep.subr.mxu0 0.0
  %2248 = vmatpush1.msra.mxu0 %v452
  %2249 = vmatprep.subr.mxu0 0.0
  %2250 = vmatpush1.msra.mxu0 %v453
  %2251 = vmatprep.subr.mxu0 0.0
  %2252 = vmatpush1.msra.mxu0 %v454
  %2253 = vmatprep.subr.mxu0 0.0
  %2254 = vmatpush1.msra.mxu0 %v455
  %2255 = vmatprep.subr.mxu0 0.0
  %2256 = vmatpush1.msra.mxu0 %v456
  %2257 = vmatprep.subr.mxu0 0.0
  %2258 = vmatpush1.msra.mxu0 %v457
  %2259 = vmatprep.subr.mxu0 0.0
  %2260 = vmatpush1.msra.mxu0 0.0
  %2261 = vmatprep.subr.mxu0 0.0
  %2262 = vmatpush1.msra.mxu0 0.0
  %2263 = vmatprep.subr.mxu0 0.0
  %2264 = vmatpush1.msra.mxu0 0.0
  %2265 = vmatprep.subr.mxu0 0.0
  %2266 = vmatpush1.msra.mxu0 0.0
  %2267 = vmatprep.subr.mxu0 0.0
  %2268 = vmatpush1.msra.mxu0 0.0
  %2269 = vmatprep.subr.mxu0 0.0
  %2270 = vmatpush1.msra.mxu0 0.0
  %2271 = vmatprep.subr.mxu0 0.0
  %2272 = vmatpush1.msra.mxu0 0.0
  %2273 = vmatprep.subr.mxu0 0.0
  %2274 = vmatpush1.msra.mxu0 0.0
  %2275 = vmatprep.subr.mxu0 0.0
  %2276 = vmatpush1.msra.mxu0 0.0
  %2277 = vmatprep.subr.mxu0 0.0
  %2278 = vmatpush1.msra.mxu0 0.0
  %2279 = vmatprep.subr.mxu0 0.0
  %2280 = vmatpush1.msra.mxu0 0.0
  %2281 = vmatprep.subr.mxu0 0.0
  %2282 = vmatpush1.msra.mxu0 0.0
  %2283 = vmatprep.subr.mxu0 0.0
  %2284 = vmatpush1.msra.mxu0 0.0
  %2285 = vmatprep.subr.mxu0 0.0
  %2286 = vmatpush1.msra.mxu0 0.0
  %2287 = vmatprep.subr.mxu0 0.0
  %2288 = vmatpush1.msra.mxu0 0.0
  %2289 = vmatprep.subr.mxu0 0.0
  %2290 = vmatpush1.msra.mxu0 0.0
  %2291 = vmatprep.subr.mxu0 0.0
  %2292 = vmatpush1.msra.mxu0 0.0
  %2293 = vmatprep.subr.mxu0 0.0
  %2294 = vmatpush1.msra.mxu0 0.0
  %2295 = vmatprep.subr.mxu0 0.0
  %2296 = vmatpush1.msra.mxu0 0.0
  %2297 = vmatprep.subr.mxu0 0.0
  %2298 = vmatpush1.msra.mxu0 0.0
  %2299 = vmatprep.subr.mxu0 0.0
  %2300 = vmatpush1.msra.mxu0 0.0
  %2301 = vmatprep.subr.mxu0 0.0
  %2302 = vmatpush1.msra.mxu0 0.0
  %2303 = vmatprep.subr.mxu0 0.0
  %2304 = vmatpush1.msra.mxu0 0.0
  %2305 = vmatprep.subr.mxu0 0.0
  %2306 = vmatpush1.msra.mxu0 0.0
  %2307 = vmatprep.subr.mxu0 0.0
  %2308 = vmatpush1.msra.mxu0 0.0
  %2309 = vmatprep.subr.mxu0 0.0
  %2310 = vmatpush1.msra.mxu0 0.0
  %2311 = vmatprep.mubr.f32.mxu0 0.0
  %2312 = vmatmul.mubr.f32.gmra.mrb[0].mxu0 %v2245
  %v2313 = vpop.f32.mrb[0].mxu0
  %v2314 = vadd.f32 %v732, %v2313
  %v2315 = vpop.f32.mrb[0].mxu0
  %2316 = vdwg.mxu0
  %v2317 = vxor.u32 %v2314, 2147483648
  %v2318 = vmul.f32 %v2317, 1.442695
  %v2319 = vpow.pop %v2318
  %v2320 = vadd.f32 %v2319, 1.0
  %v2321 = vrcp.pop %v2320
  %v2322 = vmul.f32 1.0, %v2321
  %v2323 = vtanh.pop %v2314
  %v2324 = vmul.f32 %v2322, %v1833
  %2326 = vrot.lane.b32.xlu0 %v2323, 64
  %v2327 = vpop.permute.xlu0 %2326
  %v2329 = vmul.f32 %v2322, %v2327
  %2331 = vrot.lane.b32.xlu0 %v2329, 32
  %v2332 = vpop.permute.xlu0 %2331
  %v2334 = vadd.f32 %v2324, %v2332
  %v2335 = vtanh.pop %v2334
  %2337 = vrot.lane.b32.xlu0 %v2335, 64
  %v2338 = vpop.permute.xlu0 %2337
  %v2340 = vmul.f32 %v2322, %v2338
  %2342 = vrot.lane.b32.xlu0 %v2340, 32
  %v2343 = vpop.permute.xlu0 %2342
  %v2344 = vsel %vm76, %v2343, 0
  %2346 = vmatprep.subr.mxu0 0.0
  %2347 = vmatpush1.msra.mxu0 %v459
  %2348 = vmatprep.subr.mxu0 0.0
  %2349 = vmatpush1.msra.mxu0 %v460
  %2350 = vmatprep.subr.mxu0 0.0
  %2351 = vmatpush1.msra.mxu0 %v461
  %2352 = vmatprep.subr.mxu0 0.0
  %2353 = vmatpush1.msra.mxu0 %v462
  %2354 = vmatprep.subr.mxu0 0.0
  %2355 = vmatpush1.msra.mxu0 0.0
  %2356 = vmatprep.subr.mxu0 0.0
  %2357 = vmatpush1.msra.mxu0 0.0
  %2358 = vmatprep.subr.mxu0 0.0
  %2359 = vmatpush1.msra.mxu0 0.0
  %2360 = vmatprep.subr.mxu0 0.0
  %2361 = vmatpush1.msra.mxu0 0.0
  %2362 = vmatprep.subr.mxu0 0.0
  %2363 = vmatpush1.msra.mxu0 0.0
  %2364 = vmatprep.subr.mxu0 0.0
  %2365 = vmatpush1.msra.mxu0 0.0
  %2366 = vmatprep.subr.mxu0 0.0
  %2367 = vmatpush1.msra.mxu0 0.0
  %2368 = vmatprep.subr.mxu0 0.0
  %2369 = vmatpush1.msra.mxu0 0.0
  %2370 = vmatprep.subr.mxu0 0.0
  %2371 = vmatpush1.msra.mxu0 0.0
  %2372 = vmatprep.subr.mxu0 0.0
  %2373 = vmatpush1.msra.mxu0 0.0
  %2374 = vmatprep.subr.mxu0 0.0
  %2375 = vmatpush1.msra.mxu0 0.0
  %2376 = vmatprep.subr.mxu0 0.0
  %2377 = vmatpush1.msra.mxu0 0.0
  %2378 = vmatprep.subr.mxu0 0.0
  %2379 = vmatpush1.msra.mxu0 0.0
  %2380 = vmatprep.subr.mxu0 0.0
  %2381 = vmatpush1.msra.mxu0 0.0
  %2382 = vmatprep.subr.mxu0 0.0
  %2383 = vmatpush1.msra.mxu0 0.0
  %2384 = vmatprep.subr.mxu0 0.0
  %2385 = vmatpush1.msra.mxu0 0.0
  %2386 = vmatprep.subr.mxu0 0.0
  %2387 = vmatpush1.msra.mxu0 0.0
  %2388 = vmatprep.subr.mxu0 0.0
  %2389 = vmatpush1.msra.mxu0 0.0
  %2390 = vmatprep.subr.mxu0 0.0
  %2391 = vmatpush1.msra.mxu0 0.0
  %2392 = vmatprep.subr.mxu0 0.0
  %2393 = vmatpush1.msra.mxu0 0.0
  %2394 = vmatprep.subr.mxu0 0.0
  %2395 = vmatpush1.msra.mxu0 0.0
  %2396 = vmatprep.subr.mxu0 0.0
  %2397 = vmatpush1.msra.mxu0 0.0
  %2398 = vmatprep.subr.mxu0 0.0
  %2399 = vmatpush1.msra.mxu0 0.0
  %2400 = vmatprep.subr.mxu0 0.0
  %2401 = vmatpush1.msra.mxu0 0.0
  %2402 = vmatprep.subr.mxu0 0.0
  %2403 = vmatpush1.msra.mxu0 0.0
  %2404 = vmatprep.subr.mxu0 0.0
  %2405 = vmatpush1.msra.mxu0 0.0
  %2406 = vmatprep.subr.mxu0 0.0
  %2407 = vmatpush1.msra.mxu0 0.0
  %2408 = vmatprep.subr.mxu0 0.0
  %2409 = vmatpush1.msra.mxu0 0.0
  %2410 = vmatprep.mubr.f32.mxu0 0.0
  %2411 = vmatmul.mubr.f32.gmra.mrb[0].mxu0 %v2344
  %v2412 = vpop.f32.mrb[0].mxu0
  %v2413 = vadd.f32 %v836, %v2412
  %v2414 = vpop.f32.mrb[0].mxu0
  %2415 = vdwg.mxu0
  %s2416 = scalar_lea.vmem %s18, 6
  %2417 = vst.msk [vmem:[%s2416] sm:$0x3] %vm913, %v2413
  %v2418 = vsel %vm913, %v2413, -inf
  %2419 = vmax.xlane.f32.xlu0 %v2418
  %v2420 = vpop.xlane.xlu0 %2419
  %vm2421 = vcmp.eq.f32.partialorder %v2413, %v2420
  %v2422 = vsel %vm2421, %v471, 16
  %v2423 = vsel %vm913, %v2422, 2147483647
  %v2424 = vand.u32 %v2423, 65535
  %v2425 = vshra.s32 %v2423, 16
  %v2426 = vcvt.s32.f32 %v2424
  %v2427 = vcvt.s32.f32 %v2425
  %2428 = vmin.xlane.f32.xlu0 %v2427
  %v2429 = vpop.xlane.xlu0 %2428
  %vm2430 = vcmp.eq.f32.partialorder %v2427, %v2429
  %v2431 = vsel %vm2430, %v2426, inf
  %2432 = vmin.xlane.f32.xlu0 %v2431
  %v2433 = vpop.xlane.xlu0 %2432
  %v2434 = vcvt.f32.s32 %v2433
  %v2435 = vcvt.f32.s32 %v2429
  %v2436 = vshll.u32 %v2435, 16
  %v2437 = vadd.s32 %v2436, %v2434
  %vm2438 = vcmp.eq.s32.totalorder %v471, %v2437
  %v2439 = vsel %vm2438, 1, 0
  %v2440 = vcvt.s32.f32 %v2439
  %2441 = vmatprep.subr.mxu0 0.0
  %2442 = vmatpush1.msra.mxu0 %v445
  %2443 = vmatprep.subr.mxu0 0.0
  %2444 = vmatpush1.msra.mxu0 %v446
  %2445 = vmatprep.subr.mxu0 0.0
  %2446 = vmatpush1.msra.mxu0 %v447
  %2447 = vmatprep.subr.mxu0 0.0
  %2448 = vmatpush1.msra.mxu0 %v448
  %2449 = vmatprep.subr.mxu0 0.0
  %2450 = vmatpush1.msra.mxu0 0.0
  %2451 = vmatprep.subr.mxu0 0.0
  %2452 = vmatpush1.msra.mxu0 0.0
  %2453 = vmatprep.subr.mxu0 0.0
  %2454 = vmatpush1.msra.mxu0 0.0
  %2455 = vmatprep.subr.mxu0 0.0
  %2456 = vmatpush1.msra.mxu0 0.0
  %2457 = vmatprep.subr.mxu0 0.0
  %2458 = vmatpush1.msra.mxu0 0.0
  %2459 = vmatprep.subr.mxu0 0.0
  %2460 = vmatpush1.msra.mxu0 0.0
  %2461 = vmatprep.subr.mxu0 0.0
  %2462 = vmatpush1.msra.mxu0 0.0
  %2463 = vmatprep.subr.mxu0 0.0
  %2464 = vmatpush1.msra.mxu0 0.0
  %2465 = vmatprep.subr.mxu0 0.0
  %2466 = vmatpush1.msra.mxu0 0.0
  %2467 = vmatprep.subr.mxu0 0.0
  %2468 = vmatpush1.msra.mxu0 0.0
  %2469 = vmatprep.subr.mxu0 0.0
  %2470 = vmatpush1.msra.mxu0 0.0
  %2471 = vmatprep.subr.mxu0 0.0
  %2472 = vmatpush1.msra.mxu0 0.0
  %2473 = vmatprep.subr.mxu0 0.0
  %2474 = vmatpush1.msra.mxu0 0.0
  %2475 = vmatprep.subr.mxu0 0.0
  %2476 = vmatpush1.msra.mxu0 0.0
  %2477 = vmatprep.subr.mxu0 0.0
  %2478 = vmatpush1.msra.mxu0 0.0
  %2479 = vmatprep.subr.mxu0 0.0
  %2480 = vmatpush1.msra.mxu0 0.0
  %2481 = vmatprep.subr.mxu0 0.0
  %2482 = vmatpush1.msra.mxu0 0.0
  %2483 = vmatprep.subr.mxu0 0.0
  %2484 = vmatpush1.msra.mxu0 0.0
  %2485 = vmatprep.subr.mxu0 0.0
  %2486 = vmatpush1.msra.mxu0 0.0
  %2487 = vmatprep.subr.mxu0 0.0
  %2488 = vmatpush1.msra.mxu0 0.0
  %2489 = vmatprep.subr.mxu0 0.0
  %2490 = vmatpush1.msra.mxu0 0.0
  %2491 = vmatprep.subr.mxu0 0.0
  %2492 = vmatpush1.msra.mxu0 0.0
  %2493 = vmatprep.subr.mxu0 0.0
  %2494 = vmatpush1.msra.mxu0 0.0
  %2495 = vmatprep.subr.mxu0 0.0
  %2496 = vmatpush1.msra.mxu0 0.0
  %2497 = vmatprep.subr.mxu0 0.0
  %2498 = vmatpush1.msra.mxu0 0.0
  %2499 = vmatprep.subr.mxu0 0.0
  %2500 = vmatpush1.msra.mxu0 0.0
  %2501 = vmatprep.subr.mxu0 0.0
  %2502 = vmatpush1.msra.mxu0 0.0
  %2503 = vmatprep.subr.mxu0 0.0
  %2504 = vmatpush1.msra.mxu0 0.0
  %2505 = vmatprep.mubr.f32.mxu0 0.0
  %2506 = vmatmul.mubr.f32.gmra.mrb[0].mxu0 %v2344
  %v2507 = vpop.f32.mrb[0].mxu0
  %v2508 = vadd.f32 %v476, %v2507
  %v2509 = vpop.f32.mrb[0].mxu0
  %2510 = vdwg.mxu0
  %v2513 = vunpack.c.l.s4 1966171168
  %v2514 = vunpack.c.0.s8 %v2513
  %v2515 = vlaneseq
  %v2516 = vshrl.u32 %v2515, 7
  %v2517 = vsub.s32 %v2514, %v2516
  %v2518 = vrot.slane %v2508, %v2517
  %v2519 = vcombine.high %v2518, %v2518
  %v2521 = vunpack.c.l.s4 1966171168
  %v2522 = vunpack.c.0.s8 %v2521
  %v2523 = vlaneseq
  %v2524 = vshrl.u32 %v2523, 7
  %v2525 = vsub.s32 %v2522, %v2524
  %v2526 = vrot.slane %v2518, %v2525
  %v2528 = vunpack.c.l.s4 1966171168
  %v2529 = vunpack.c.0.s8 %v2528
  %v2530 = vlaneseq
  %v2531 = vshrl.u32 %v2530, 7
  %v2532 = vsub.s32 %v2529, %v2531
  %v2533 = vrot.slane %v2519, %v2532
  %v2534 = vlaneseq
  %v2535 = vshrl.u32 %v2534, 7
  %v2536 = vsub.s32 0, %v2535
  %v2537 = vrot.slane %v2526, %v2536
  %v2538 = vlaneseq
  %v2539 = vshrl.u32 %v2538, 7
  %v2540 = vsub.s32 0, %v2539
  %v2541 = vrot.slane %v2533, %v2540
  %v2544 = vadd.f32 %v2537, %v243
  %v2545 = vadd.f32 %v2541, %v248
  %v2546 = vtanh.pop %v2544
  %v2547 = vtanh.pop %v2545
  %v2548 = vmul.f32 %v2546, %v592
  %v2549 = vmul.f32 %v2547, %v592
  %v2550 = vsel %vm169, %v2548, 0.0
  %2551 = vadd.xlane.f32.xlu0 %v2550
  %v2552 = vpop.xlane.xlu0 %2551
  %v2553 = vsel %vm169, %v2549, 0.0
  %2554 = vadd.xlane.f32.xlu0 %v2553
  %v2555 = vpop.xlane.xlu0 %2554
  %v2556 = vadd.f32 %v2552, %v609
  %v2557 = vadd.f32 %v2555, %v609
  %v2560 = vlaneseq
  %v2561 = vshrl.u32 %v2560, 7
  %v2562 = vsub.s32 %v471, %v2561
  %v2563 = vrot.slane %v2556, %v2562
  %v2564 = vlaneseq
  %v2565 = vshrl.u32 %v2564, 7
  %v2566 = vsub.s32 %v471, %v2565
  %v2567 = vrot.slane %v2557, %v2566
  %v2568 = vsel %vm279, %v2567, %v2563
  %v2570 = vsel %vm625, %v2568, -inf
  %2571 = vmax.xlane.f32.xlu0 %v2570
  %v2572 = vpop.xlane.xlu0 %2571
  %v2574 = vlaneseq
  %v2575 = vshrl.u32 %v2574, 7
  %v2576 = vsub.s32 0, %v2575
  %v2577 = vrot.slane %v2572, %v2576
  %v2578 = vlaneseq
  %v2579 = vshrl.u32 %v2578, 7
  %v2580 = vsub.s32 1, %v2579
  %v2581 = vrot.slane %v2572, %v2580
  %v2584 = vsub.f32 %v2556, %v2577
  %v2585 = vsub.f32 %v2557, %v2581
  %v2586 = vmul.f32 %v2584, 1.442695
  %v2587 = vpow.pop %v2586
  %v2588 = vmul.f32 %v2585, 1.442695
  %v2589 = vpow.pop %v2588
  %2592 = vset.pattern.permute.xlu0 0
  %2593 = vperm.xlu0 %2592, %v2587
  %v2594 = vpop.permute.xlu0 %2593
  %2595 = vset.pattern.permute.xlu0 0
  %2596 = vperm.xlu0 %2595, %v2589
  %v2597 = vpop.permute.xlu0 %2596
  %v2598 = vlaneseq
  %v2599 = vshrl.u32 %v2598, 7
  %v2600 = vsub.s32 %v471, %v2599
  %v2601 = vrot.slane %v2594, %v2600
  %v2602 = vlaneseq
  %v2603 = vshrl.u32 %v2602, 7
  %v2604 = vsub.s32 %v471, %v2603
  %v2605 = vrot.slane %v2597, %v2604
  %v2606 = vsel %vm279, %v2605, %v2601
  %v2608 = vsel %vm625, %v2606, 0.0
  %2609 = vadd.xlane.f32.xlu0 %v2608
  %v2610 = vpop.xlane.xlu0 %2609
  %v2612 = vlaneseq
  %v2613 = vshrl.u32 %v2612, 7
  %v2614 = vsub.s32 0, %v2613
  %v2615 = vrot.slane %v2610, %v2614
  %v2616 = vlaneseq
  %v2617 = vshrl.u32 %v2616, 7
  %v2618 = vsub.s32 1, %v2617
  %v2619 = vrot.slane %v2610, %v2618
  %v2622 = vrcp.pop %v2615
  %v2623 = vmul.f32 %v2587, %v2622
  %v2624 = vrcp.pop %v2619
  %v2625 = vmul.f32 %v2589, %v2624
  %2628 = vset.pattern.permute.xlu0 0
  %2629 = vperm.xlu0 %2628, %v2623
  %v2630 = vpop.permute.xlu0 %2629
  %2631 = vset.pattern.permute.xlu0 0
  %2632 = vperm.xlu0 %2631, %v2625
  %v2633 = vpop.permute.xlu0 %2632
  %v2634 = vlaneseq
  %v2635 = vshrl.u32 %v2634, 7
  %v2636 = vsub.s32 %v471, %v2635
  %v2637 = vrot.slane %v2630, %v2636
  %v2638 = vlaneseq
  %v2639 = vshrl.u32 %v2638, 7
  %v2640 = vsub.s32 %v471, %v2639
  %v2641 = vrot.slane %v2633, %v2640
  %v2642 = vsel %vm279, %v2641, %v2637
  %s2644 = scalar_lea.vmem %s19, 8
  %2645 = vst.msk [vmem:[%s2644] sm:$0x3] %vm625, %v2642
  %v2648 = vmul.f32 %v2630, %v158
  %v2649 = vmul.f32 %v2633, %v159
  %v2650 = vsel %vm169, %v2648, 0.0
  %v2651 = vrot.slane %v2650, 4
  %v2652 = vadd.f32 %v2650, %v2651
  %v2653 = vrot.slane %v2652, 2
  %v2654 = vadd.f32 %v2652, %v2653
  %v2655 = vrot.slane %v2654, 1
  %v2656 = vadd.f32 %v2654, %v2655
  %v2657 = vsel %vm169, %v2649, 0.0
  %v2658 = vrot.slane %v2657, 4
  %v2659 = vadd.f32 %v2657, %v2658
  %v2660 = vrot.slane %v2659, 2
  %v2661 = vadd.f32 %v2659, %v2660
  %v2662 = vrot.slane %v2661, 1
  %v2663 = vadd.f32 %v2661, %v2662
  %v2666 = vsel %vm279, %v2663, %v2656
  %v2669 = vsel %vm169, %v2440, 0
  %2671 = vmatprep.subr.mxu0 0.0
  %2672 = vmatpush1.msra.mxu0 %v464
  %2673 = vmatprep.subr.mxu0 0.0
  %2674 = vmatpush1.msra.mxu0 %v465
  %2675 = vmatprep.subr.mxu0 0.0
  %2676 = vmatpush1.msra.mxu0 0.0
  %2677 = vmatprep.subr.mxu0 0.0
  %2678 = vmatpush1.msra.mxu0 0.0
  %2679 = vmatprep.subr.mxu0 0.0
  %2680 = vmatpush1.msra.mxu0 0.0
  %2681 = vmatprep.subr.mxu0 0.0
  %2682 = vmatpush1.msra.mxu0 0.0
  %2683 = vmatprep.subr.mxu0 0.0
  %2684 = vmatpush1.msra.mxu0 0.0
  %2685 = vmatprep.subr.mxu0 0.0
  %2686 = vmatpush1.msra.mxu0 0.0
  %2687 = vmatprep.subr.mxu0 0.0
  %2688 = vmatpush1.msra.mxu0 0.0
  %2689 = vmatprep.subr.mxu0 0.0
  %2690 = vmatpush1.msra.mxu0 0.0
  %2691 = vmatprep.subr.mxu0 0.0
  %2692 = vmatpush1.msra.mxu0 0.0
  %2693 = vmatprep.subr.mxu0 0.0
  %2694 = vmatpush1.msra.mxu0 0.0
  %2695 = vmatprep.subr.mxu0 0.0
  %2696 = vmatpush1.msra.mxu0 0.0
  %2697 = vmatprep.subr.mxu0 0.0
  %2698 = vmatpush1.msra.mxu0 0.0
  %2699 = vmatprep.subr.mxu0 0.0
  %2700 = vmatpush1.msra.mxu0 0.0
  %2701 = vmatprep.subr.mxu0 0.0
  %2702 = vmatpush1.msra.mxu0 0.0
  %2703 = vmatprep.subr.mxu0 0.0
  %2704 = vmatpush1.msra.mxu0 0.0
  %2705 = vmatprep.subr.mxu0 0.0
  %2706 = vmatpush1.msra.mxu0 0.0
  %2707 = vmatprep.subr.mxu0 0.0
  %2708 = vmatpush1.msra.mxu0 0.0
  %2709 = vmatprep.subr.mxu0 0.0
  %2710 = vmatpush1.msra.mxu0 0.0
  %2711 = vmatprep.subr.mxu0 0.0
  %2712 = vmatpush1.msra.mxu0 0.0
  %2713 = vmatprep.subr.mxu0 0.0
  %2714 = vmatpush1.msra.mxu0 0.0
  %2715 = vmatprep.subr.mxu0 0.0
  %2716 = vmatpush1.msra.mxu0 0.0
  %2717 = vmatprep.subr.mxu0 0.0
  %2718 = vmatpush1.msra.mxu0 0.0
  %2719 = vmatprep.subr.mxu0 0.0
  %2720 = vmatpush1.msra.mxu0 0.0
  %2721 = vmatprep.subr.mxu0 0.0
  %2722 = vmatpush1.msra.mxu0 0.0
  %2723 = vmatprep.subr.mxu0 0.0
  %2724 = vmatpush1.msra.mxu0 0.0
  %2725 = vmatprep.subr.mxu0 0.0
  %2726 = vmatpush1.msra.mxu0 0.0
  %2727 = vmatprep.subr.mxu0 0.0
  %2728 = vmatpush1.msra.mxu0 0.0
  %2729 = vmatprep.subr.mxu0 0.0
  %2730 = vmatpush1.msra.mxu0 0.0
  %2731 = vmatprep.subr.mxu0 0.0
  %2732 = vmatpush1.msra.mxu0 0.0
  %2733 = vmatprep.subr.mxu0 0.0
  %2734 = vmatpush1.msra.mxu0 0.0
  %2735 = vmatprep.mubr.f32.mxu0 0.0
  %2736 = vmatmul.mubr.f32.gmra.mrb[0].mxu0 %v2669
  %v2737 = vpop.f32.mrb[0].mxu0
  %v2738 = vadd.f32 %v2666, %v2737
  %v2739 = vpop.f32.mrb[0].mxu0
  %2740 = vdwg.mxu0
  %2741 = vrot.lane.b32.xlu0 %v2340, 48
  %v2742 = vpop.permute.xlu0 %2741
  %v2744 = vsel %vm169, %v2738, %v2742
  %v2746 = vsel %vm734, %v2744, 0
  %2748 = vmatprep.subr.mxu0 0.0
  %2749 = vmatpush1.msra.mxu0 %v452
  %2750 = vmatprep.subr.mxu0 0.0
  %2751 = vmatpush1.msra.mxu0 %v453
  %2752 = vmatprep.subr.mxu0 0.0
  %2753 = vmatpush1.msra.mxu0 %v454
  %2754 = vmatprep.subr.mxu0 0.0
  %2755 = vmatpush1.msra.mxu0 %v455
  %2756 = vmatprep.subr.mxu0 0.0
  %2757 = vmatpush1.msra.mxu0 %v456
  %2758 = vmatprep.subr.mxu0 0.0
  %2759 = vmatpush1.msra.mxu0 %v457
  %2760 = vmatprep.subr.mxu0 0.0
  %2761 = vmatpush1.msra.mxu0 0.0
  %2762 = vmatprep.subr.mxu0 0.0
  %2763 = vmatpush1.msra.mxu0 0.0
  %2764 = vmatprep.subr.mxu0 0.0
  %2765 = vmatpush1.msra.mxu0 0.0
  %2766 = vmatprep.subr.mxu0 0.0
  %2767 = vmatpush1.msra.mxu0 0.0
  %2768 = vmatprep.subr.mxu0 0.0
  %2769 = vmatpush1.msra.mxu0 0.0
  %2770 = vmatprep.subr.mxu0 0.0
  %2771 = vmatpush1.msra.mxu0 0.0
  %2772 = vmatprep.subr.mxu0 0.0
  %2773 = vmatpush1.msra.mxu0 0.0
  %2774 = vmatprep.subr.mxu0 0.0
  %2775 = vmatpush1.msra.mxu0 0.0
  %2776 = vmatprep.subr.mxu0 0.0
  %2777 = vmatpush1.msra.mxu0 0.0
  %2778 = vmatprep.subr.mxu0 0.0
  %2779 = vmatpush1.msra.mxu0 0.0
  %2780 = vmatprep.subr.mxu0 0.0
  %2781 = vmatpush1.msra.mxu0 0.0
  %2782 = vmatprep.subr.mxu0 0.0
  %2783 = vmatpush1.msra.mxu0 0.0
  %2784 = vmatprep.subr.mxu0 0.0
  %2785 = vmatpush1.msra.mxu0 0.0
  %2786 = vmatprep.subr.mxu0 0.0
  %2787 = vmatpush1.msra.mxu0 0.0
  %2788 = vmatprep.subr.mxu0 0.0
  %2789 = vmatpush1.msra.mxu0 0.0
  %2790 = vmatprep.subr.mxu0 0.0
  %2791 = vmatpush1.msra.mxu0 0.0
  %2792 = vmatprep.subr.mxu0 0.0
  %2793 = vmatpush1.msra.mxu0 0.0
  %2794 = vmatprep.subr.mxu0 0.0
  %2795 = vmatpush1.msra.mxu0 0.0
  %2796 = vmatprep.subr.mxu0 0.0
  %2797 = vmatpush1.msra.mxu0 0.0
  %2798 = vmatprep.subr.mxu0 0.0
  %2799 = vmatpush1.msra.mxu0 0.0
  %2800 = vmatprep.subr.mxu0 0.0
  %2801 = vmatpush1.msra.mxu0 0.0
  %2802 = vmatprep.subr.mxu0 0.0
  %2803 = vmatpush1.msra.mxu0 0.0
  %2804 = vmatprep.subr.mxu0 0.0
  %2805 = vmatpush1.msra.mxu0 0.0
  %2806 = vmatprep.subr.mxu0 0.0
  %2807 = vmatpush1.msra.mxu0 0.0
  %2808 = vmatprep.subr.mxu0 0.0
  %2809 = vmatpush1.msra.mxu0 0.0
  %2810 = vmatprep.subr.mxu0 0.0
  %2811 = vmatpush1.msra.mxu0 0.0
  %2812 = vmatprep.mubr.f32.mxu0 0.0
  %2813 = vmatmul.mubr.f32.gmra.mrb[0].mxu0 %v2746
  %v2814 = vpop.f32.mrb[0].mxu0
  %v2815 = vadd.f32 %v732, %v2814
  %v2816 = vpop.f32.mrb[0].mxu0
  %2817 = vdwg.mxu0
  %v2818 = vxor.u32 %v2815, 2147483648
  %v2819 = vmul.f32 %v2818, 1.442695
  %v2820 = vpow.pop %v2819
  %v2821 = vadd.f32 %v2820, 1.0
  %v2822 = vrcp.pop %v2821
  %v2823 = vmul.f32 1.0, %v2822
  %v2824 = vtanh.pop %v2815
  %v2825 = vmul.f32 %v2823, %v2334
  %2827 = vrot.lane.b32.xlu0 %v2824, 64
  %v2828 = vpop.permute.xlu0 %2827
  %v2830 = vmul.f32 %v2823, %v2828
  %2832 = vrot.lane.b32.xlu0 %v2830, 32
  %v2833 = vpop.permute.xlu0 %2832
  %v2835 = vadd.f32 %v2825, %v2833
  %v2836 = vtanh.pop %v2835
  %2838 = vrot.lane.b32.xlu0 %v2836, 64
  %v2839 = vpop.permute.xlu0 %2838
  %v2841 = vmul.f32 %v2823, %v2839
  %2843 = vrot.lane.b32.xlu0 %v2841, 32
  %v2844 = vpop.permute.xlu0 %2843
  %v2845 = vsel %vm76, %v2844, 0
  %2847 = vmatprep.subr.mxu0 0.0
  %2848 = vmatpush1.msra.mxu0 %v459
  %2849 = vmatprep.subr.mxu0 0.0
  %2850 = vmatpush1.msra.mxu0 %v460
  %2851 = vmatprep.subr.mxu0 0.0
  %2852 = vmatpush1.msra.mxu0 %v461
  %2853 = vmatprep.subr.mxu0 0.0
  %2854 = vmatpush1.msra.mxu0 %v462
  %2855 = vmatprep.subr.mxu0 0.0
  %2856 = vmatpush1.msra.mxu0 0.0
  %2857 = vmatprep.subr.mxu0 0.0
  %2858 = vmatpush1.msra.mxu0 0.0
  %2859 = vmatprep.subr.mxu0 0.0
  %2860 = vmatpush1.msra.mxu0 0.0
  %2861 = vmatprep.subr.mxu0 0.0
  %2862 = vmatpush1.msra.mxu0 0.0
  %2863 = vmatprep.subr.mxu0 0.0
  %2864 = vmatpush1.msra.mxu0 0.0
  %2865 = vmatprep.subr.mxu0 0.0
  %2866 = vmatpush1.msra.mxu0 0.0
  %2867 = vmatprep.subr.mxu0 0.0
  %2868 = vmatpush1.msra.mxu0 0.0
  %2869 = vmatprep.subr.mxu0 0.0
  %2870 = vmatpush1.msra.mxu0 0.0
  %2871 = vmatprep.subr.mxu0 0.0
  %2872 = vmatpush1.msra.mxu0 0.0
  %2873 = vmatprep.subr.mxu0 0.0
  %2874 = vmatpush1.msra.mxu0 0.0
  %2875 = vmatprep.subr.mxu0 0.0
  %2876 = vmatpush1.msra.mxu0 0.0
  %2877 = vmatprep.subr.mxu0 0.0
  %2878 = vmatpush1.msra.mxu0 0.0
  %2879 = vmatprep.subr.mxu0 0.0
  %2880 = vmatpush1.msra.mxu0 0.0
  %2881 = vmatprep.subr.mxu0 0.0
  %2882 = vmatpush1.msra.mxu0 0.0
  %2883 = vmatprep.subr.mxu0 0.0
  %2884 = vmatpush1.msra.mxu0 0.0
  %2885 = vmatprep.subr.mxu0 0.0
  %2886 = vmatpush1.msra.mxu0 0.0
  %2887 = vmatprep.subr.mxu0 0.0
  %2888 = vmatpush1.msra.mxu0 0.0
  %2889 = vmatprep.subr.mxu0 0.0
  %2890 = vmatpush1.msra.mxu0 0.0
  %2891 = vmatprep.subr.mxu0 0.0
  %2892 = vmatpush1.msra.mxu0 0.0
  %2893 = vmatprep.subr.mxu0 0.0
  %2894 = vmatpush1.msra.mxu0 0.0
  %2895 = vmatprep.subr.mxu0 0.0
  %2896 = vmatpush1.msra.mxu0 0.0
  %2897 = vmatprep.subr.mxu0 0.0
  %2898 = vmatpush1.msra.mxu0 0.0
  %2899 = vmatprep.subr.mxu0 0.0
  %2900 = vmatpush1.msra.mxu0 0.0
  %2901 = vmatprep.subr.mxu0 0.0
  %2902 = vmatpush1.msra.mxu0 0.0
  %2903 = vmatprep.subr.mxu0 0.0
  %2904 = vmatpush1.msra.mxu0 0.0
  %2905 = vmatprep.subr.mxu0 0.0
  %2906 = vmatpush1.msra.mxu0 0.0
  %2907 = vmatprep.subr.mxu0 0.0
  %2908 = vmatpush1.msra.mxu0 0.0
  %2909 = vmatprep.subr.mxu0 0.0
  %2910 = vmatpush1.msra.mxu0 0.0
  %2911 = vmatprep.mubr.f32.mxu0 0.0
  %2912 = vmatmul.mubr.f32.gmra.mrb[0].mxu0 %v2845
  %v2913 = vpop.f32.mrb[0].mxu0
  %v2914 = vadd.f32 %v836, %v2913
  %v2915 = vpop.f32.mrb[0].mxu0
  %2916 = vdwg.mxu0
  %s2917 = scalar_lea.vmem %s18, 8
  %2918 = vst.msk [vmem:[%s2917] sm:$0x3] %vm913, %v2914
  %v2919 = vsel %vm913, %v2914, -inf
  %2920 = vmax.xlane.f32.xlu0 %v2919
  %v2921 = vpop.xlane.xlu0 %2920
  %vm2922 = vcmp.eq.f32.partialorder %v2914, %v2921
  %v2923 = vsel %vm2922, %v471, 16
  %v2924 = vsel %vm913, %v2923, 2147483647
  %v2925 = vand.u32 %v2924, 65535
  %v2926 = vshra.s32 %v2924, 16
  %v2927 = vcvt.s32.f32 %v2925
  %v2928 = vcvt.s32.f32 %v2926
  %2929 = vmin.xlane.f32.xlu0 %v2928
  %v2930 = vpop.xlane.xlu0 %2929
  %vm2931 = vcmp.eq.f32.partialorder %v2928, %v2930
  %v2932 = vsel %vm2931, %v2927, inf
  %2933 = vmin.xlane.f32.xlu0 %v2932
  %v2934 = vpop.xlane.xlu0 %2933
  %v2935 = vcvt.f32.s32 %v2934
  %v2936 = vcvt.f32.s32 %v2930
  %v2937 = vshll.u32 %v2936, 16
  %v2938 = vadd.s32 %v2937, %v2935
  %vm2939 = vcmp.eq.s32.totalorder %v471, %v2938
  %v2940 = vsel %vm2939, 1, 0
  %v2941 = vcvt.s32.f32 %v2940
  %2942 = vmatprep.subr.mxu0 0.0
  %2943 = vmatpush1.msra.mxu0 %v445
  %2944 = vmatprep.subr.mxu0 0.0
  %2945 = vmatpush1.msra.mxu0 %v446
  %2946 = vmatprep.subr.mxu0 0.0
  %2947 = vmatpush1.msra.mxu0 %v447
  %2948 = vmatprep.subr.mxu0 0.0
  %2949 = vmatpush1.msra.mxu0 %v448
  %2950 = vmatprep.subr.mxu0 0.0
  %2951 = vmatpush1.msra.mxu0 0.0
  %2952 = vmatprep.subr.mxu0 0.0
  %2953 = vmatpush1.msra.mxu0 0.0
  %2954 = vmatprep.subr.mxu0 0.0
  %2955 = vmatpush1.msra.mxu0 0.0
  %2956 = vmatprep.subr.mxu0 0.0
  %2957 = vmatpush1.msra.mxu0 0.0
  %2958 = vmatprep.subr.mxu0 0.0
  %2959 = vmatpush1.msra.mxu0 0.0
  %2960 = vmatprep.subr.mxu0 0.0
  %2961 = vmatpush1.msra.mxu0 0.0
  %2962 = vmatprep.subr.mxu0 0.0
  %2963 = vmatpush1.msra.mxu0 0.0
  %2964 = vmatprep.subr.mxu0 0.0
  %2965 = vmatpush1.msra.mxu0 0.0
  %2966 = vmatprep.subr.mxu0 0.0
  %2967 = vmatpush1.msra.mxu0 0.0
  %2968 = vmatprep.subr.mxu0 0.0
  %2969 = vmatpush1.msra.mxu0 0.0
  %2970 = vmatprep.subr.mxu0 0.0
  %2971 = vmatpush1.msra.mxu0 0.0
  %2972 = vmatprep.subr.mxu0 0.0
  %2973 = vmatpush1.msra.mxu0 0.0
  %2974 = vmatprep.subr.mxu0 0.0
  %2975 = vmatpush1.msra.mxu0 0.0
  %2976 = vmatprep.subr.mxu0 0.0
  %2977 = vmatpush1.msra.mxu0 0.0
  %2978 = vmatprep.subr.mxu0 0.0
  %2979 = vmatpush1.msra.mxu0 0.0
  %2980 = vmatprep.subr.mxu0 0.0
  %2981 = vmatpush1.msra.mxu0 0.0
  %2982 = vmatprep.subr.mxu0 0.0
  %2983 = vmatpush1.msra.mxu0 0.0
  %2984 = vmatprep.subr.mxu0 0.0
  %2985 = vmatpush1.msra.mxu0 0.0
  %2986 = vmatprep.subr.mxu0 0.0
  %2987 = vmatpush1.msra.mxu0 0.0
  %2988 = vmatprep.subr.mxu0 0.0
  %2989 = vmatpush1.msra.mxu0 0.0
  %2990 = vmatprep.subr.mxu0 0.0
  %2991 = vmatpush1.msra.mxu0 0.0
  %2992 = vmatprep.subr.mxu0 0.0
  %2993 = vmatpush1.msra.mxu0 0.0
  %2994 = vmatprep.subr.mxu0 0.0
  %2995 = vmatpush1.msra.mxu0 0.0
  %2996 = vmatprep.subr.mxu0 0.0
  %2997 = vmatpush1.msra.mxu0 0.0
  %2998 = vmatprep.subr.mxu0 0.0
  %2999 = vmatpush1.msra.mxu0 0.0
  %3000 = vmatprep.subr.mxu0 0.0
  %3001 = vmatpush1.msra.mxu0 0.0
  %3002 = vmatprep.subr.mxu0 0.0
  %3003 = vmatpush1.msra.mxu0 0.0
  %3004 = vmatprep.subr.mxu0 0.0
  %3005 = vmatpush1.msra.mxu0 0.0
  %3006 = vmatprep.mubr.f32.mxu0 0.0
  %3007 = vmatmul.mubr.f32.gmra.mrb[0].mxu0 %v2845
  %v3008 = vpop.f32.mrb[0].mxu0
  %v3009 = vadd.f32 %v476, %v3008
  %v3010 = vpop.f32.mrb[0].mxu0
  %3011 = vdwg.mxu0
  %v3014 = vunpack.c.l.s4 1966171168
  %v3015 = vunpack.c.0.s8 %v3014
  %v3016 = vlaneseq
  %v3017 = vshrl.u32 %v3016, 7
  %v3018 = vsub.s32 %v3015, %v3017
  %v3019 = vrot.slane %v3009, %v3018
  %v3020 = vcombine.high %v3019, %v3019
  %v3022 = vunpack.c.l.s4 1966171168
  %v3023 = vunpack.c.0.s8 %v3022
  %v3024 = vlaneseq
  %v3025 = vshrl.u32 %v3024, 7
  %v3026 = vsub.s32 %v3023, %v3025
  %v3027 = vrot.slane %v3019, %v3026
  %v3029 = vunpack.c.l.s4 1966171168
  %v3030 = vunpack.c.0.s8 %v3029
  %v3031 = vlaneseq
  %v3032 = vshrl.u32 %v3031, 7
  %v3033 = vsub.s32 %v3030, %v3032
  %v3034 = vrot.slane %v3020, %v3033
  %v3035 = vlaneseq
  %v3036 = vshrl.u32 %v3035, 7
  %v3037 = vsub.s32 0, %v3036
  %v3038 = vrot.slane %v3027, %v3037
  %v3039 = vlaneseq
  %v3040 = vshrl.u32 %v3039, 7
  %v3041 = vsub.s32 0, %v3040
  %v3042 = vrot.slane %v3034, %v3041
  %v3045 = vadd.f32 %v3038, %v243
  %v3046 = vadd.f32 %v3042, %v248
  %v3047 = vtanh.pop %v3045
  %v3048 = vtanh.pop %v3046
  %v3049 = vmul.f32 %v3047, %v592
  %v3050 = vmul.f32 %v3048, %v592
  %v3051 = vsel %vm169, %v3049, 0.0
  %3052 = vadd.xlane.f32.xlu0 %v3051
  %v3053 = vpop.xlane.xlu0 %3052
  %v3054 = vsel %vm169, %v3050, 0.0
  %3055 = vadd.xlane.f32.xlu0 %v3054
  %v3056 = vpop.xlane.xlu0 %3055
  %v3057 = vadd.f32 %v3053, %v609
  %v3058 = vadd.f32 %v3056, %v609
  %v3061 = vlaneseq
  %v3062 = vshrl.u32 %v3061, 7
  %v3063 = vsub.s32 %v471, %v3062
  %v3064 = vrot.slane %v3057, %v3063
  %v3065 = vlaneseq
  %v3066 = vshrl.u32 %v3065, 7
  %v3067 = vsub.s32 %v471, %v3066
  %v3068 = vrot.slane %v3058, %v3067
  %v3069 = vsel %vm279, %v3068, %v3064
  %v3071 = vsel %vm625, %v3069, -inf
  %3072 = vmax.xlane.f32.xlu0 %v3071
  %v3073 = vpop.xlane.xlu0 %3072
  %v3075 = vlaneseq
  %v3076 = vshrl.u32 %v3075, 7
  %v3077 = vsub.s32 0, %v3076
  %v3078 = vrot.slane %v3073, %v3077
  %v3079 = vlaneseq
  %v3080 = vshrl.u32 %v3079, 7
  %v3081 = vsub.s32 1, %v3080
  %v3082 = vrot.slane %v3073, %v3081
  %v3085 = vsub.f32 %v3057, %v3078
  %v3086 = vsub.f32 %v3058, %v3082
  %v3087 = vmul.f32 %v3085, 1.442695
  %v3088 = vpow.pop %v3087
  %v3089 = vmul.f32 %v3086, 1.442695
  %v3090 = vpow.pop %v3089
  %3093 = vset.pattern.permute.xlu0 0
  %3094 = vperm.xlu0 %3093, %v3088
  %v3095 = vpop.permute.xlu0 %3094
  %3096 = vset.pattern.permute.xlu0 0
  %3097 = vperm.xlu0 %3096, %v3090
  %v3098 = vpop.permute.xlu0 %3097
  %v3099 = vlaneseq
  %v3100 = vshrl.u32 %v3099, 7
  %v3101 = vsub.s32 %v471, %v3100
  %v3102 = vrot.slane %v3095, %v3101
  %v3103 = vlaneseq
  %v3104 = vshrl.u32 %v3103, 7
  %v3105 = vsub.s32 %v471, %v3104
  %v3106 = vrot.slane %v3098, %v3105
  %v3107 = vsel %vm279, %v3106, %v3102
  %v3109 = vsel %vm625, %v3107, 0.0
  %3110 = vadd.xlane.f32.xlu0 %v3109
  %v3111 = vpop.xlane.xlu0 %3110
  %v3113 = vlaneseq
  %v3114 = vshrl.u32 %v3113, 7
  %v3115 = vsub.s32 0, %v3114
  %v3116 = vrot.slane %v3111, %v3115
  %v3117 = vlaneseq
  %v3118 = vshrl.u32 %v3117, 7
  %v3119 = vsub.s32 1, %v3118
  %v3120 = vrot.slane %v3111, %v3119
  %v3123 = vrcp.pop %v3116
  %v3124 = vmul.f32 %v3088, %v3123
  %v3125 = vrcp.pop %v3120
  %v3126 = vmul.f32 %v3090, %v3125
  %3129 = vset.pattern.permute.xlu0 0
  %3130 = vperm.xlu0 %3129, %v3124
  %v3131 = vpop.permute.xlu0 %3130
  %3132 = vset.pattern.permute.xlu0 0
  %3133 = vperm.xlu0 %3132, %v3126
  %v3134 = vpop.permute.xlu0 %3133
  %v3135 = vlaneseq
  %v3136 = vshrl.u32 %v3135, 7
  %v3137 = vsub.s32 %v471, %v3136
  %v3138 = vrot.slane %v3131, %v3137
  %v3139 = vlaneseq
  %v3140 = vshrl.u32 %v3139, 7
  %v3141 = vsub.s32 %v471, %v3140
  %v3142 = vrot.slane %v3134, %v3141
  %v3143 = vsel %vm279, %v3142, %v3138
  %s3145 = scalar_lea.vmem %s19, 10
  %3146 = vst.msk [vmem:[%s3145] sm:$0x3] %vm625, %v3143
  %v3149 = vmul.f32 %v3131, %v158
  %v3150 = vmul.f32 %v3134, %v159
  %v3151 = vsel %vm169, %v3149, 0.0
  %v3152 = vrot.slane %v3151, 4
  %v3153 = vadd.f32 %v3151, %v3152
  %v3154 = vrot.slane %v3153, 2
  %v3155 = vadd.f32 %v3153, %v3154
  %v3156 = vrot.slane %v3155, 1
  %v3157 = vadd.f32 %v3155, %v3156
  %v3158 = vsel %vm169, %v3150, 0.0
  %v3159 = vrot.slane %v3158, 4
  %v3160 = vadd.f32 %v3158, %v3159
  %v3161 = vrot.slane %v3160, 2
  %v3162 = vadd.f32 %v3160, %v3161
  %v3163 = vrot.slane %v3162, 1
  %v3164 = vadd.f32 %v3162, %v3163
  %v3167 = vsel %vm279, %v3164, %v3157
  %v3170 = vsel %vm169, %v2941, 0
  %3172 = vmatprep.subr.mxu0 0.0
  %3173 = vmatpush1.msra.mxu0 %v464
  %3174 = vmatprep.subr.mxu0 0.0
  %3175 = vmatpush1.msra.mxu0 %v465
  %3176 = vmatprep.subr.mxu0 0.0
  %3177 = vmatpush1.msra.mxu0 0.0
  %3178 = vmatprep.subr.mxu0 0.0
  %3179 = vmatpush1.msra.mxu0 0.0
  %3180 = vmatprep.subr.mxu0 0.0
  %3181 = vmatpush1.msra.mxu0 0.0
  %3182 = vmatprep.subr.mxu0 0.0
  %3183 = vmatpush1.msra.mxu0 0.0
  %3184 = vmatprep.subr.mxu0 0.0
  %3185 = vmatpush1.msra.mxu0 0.0
  %3186 = vmatprep.subr.mxu0 0.0
  %3187 = vmatpush1.msra.mxu0 0.0
  %3188 = vmatprep.subr.mxu0 0.0
  %3189 = vmatpush1.msra.mxu0 0.0
  %3190 = vmatprep.subr.mxu0 0.0
  %3191 = vmatpush1.msra.mxu0 0.0
  %3192 = vmatprep.subr.mxu0 0.0
  %3193 = vmatpush1.msra.mxu0 0.0
  %3194 = vmatprep.subr.mxu0 0.0
  %3195 = vmatpush1.msra.mxu0 0.0
  %3196 = vmatprep.subr.mxu0 0.0
  %3197 = vmatpush1.msra.mxu0 0.0
  %3198 = vmatprep.subr.mxu0 0.0
  %3199 = vmatpush1.msra.mxu0 0.0
  %3200 = vmatprep.subr.mxu0 0.0
  %3201 = vmatpush1.msra.mxu0 0.0
  %3202 = vmatprep.subr.mxu0 0.0
  %3203 = vmatpush1.msra.mxu0 0.0
  %3204 = vmatprep.subr.mxu0 0.0
  %3205 = vmatpush1.msra.mxu0 0.0
  %3206 = vmatprep.subr.mxu0 0.0
  %3207 = vmatpush1.msra.mxu0 0.0
  %3208 = vmatprep.subr.mxu0 0.0
  %3209 = vmatpush1.msra.mxu0 0.0
  %3210 = vmatprep.subr.mxu0 0.0
  %3211 = vmatpush1.msra.mxu0 0.0
  %3212 = vmatprep.subr.mxu0 0.0
  %3213 = vmatpush1.msra.mxu0 0.0
  %3214 = vmatprep.subr.mxu0 0.0
  %3215 = vmatpush1.msra.mxu0 0.0
  %3216 = vmatprep.subr.mxu0 0.0
  %3217 = vmatpush1.msra.mxu0 0.0
  %3218 = vmatprep.subr.mxu0 0.0
  %3219 = vmatpush1.msra.mxu0 0.0
  %3220 = vmatprep.subr.mxu0 0.0
  %3221 = vmatpush1.msra.mxu0 0.0
  %3222 = vmatprep.subr.mxu0 0.0
  %3223 = vmatpush1.msra.mxu0 0.0
  %3224 = vmatprep.subr.mxu0 0.0
  %3225 = vmatpush1.msra.mxu0 0.0
  %3226 = vmatprep.subr.mxu0 0.0
  %3227 = vmatpush1.msra.mxu0 0.0
  %3228 = vmatprep.subr.mxu0 0.0
  %3229 = vmatpush1.msra.mxu0 0.0
  %3230 = vmatprep.subr.mxu0 0.0
  %3231 = vmatpush1.msra.mxu0 0.0
  %3232 = vmatprep.subr.mxu0 0.0
  %3233 = vmatpush1.msra.mxu0 0.0
  %3234 = vmatprep.subr.mxu0 0.0
  %3235 = vmatpush1.msra.mxu0 0.0
  %3236 = vmatprep.mubr.f32.mxu0 0.0
  %3237 = vmatmul.mubr.f32.gmra.mrb[0].mxu0 %v3170
  %v3238 = vpop.f32.mrb[0].mxu0
  %v3239 = vadd.f32 %v3167, %v3238
  %v3240 = vpop.f32.mrb[0].mxu0
  %3241 = vdwg.mxu0
  %3242 = vrot.lane.b32.xlu0 %v2841, 48
  %v3243 = vpop.permute.xlu0 %3242
  %v3245 = vsel %vm169, %v3239, %v3243
  %v3247 = vsel %vm734, %v3245, 0
  %3249 = vmatprep.subr.mxu0 0.0
  %3250 = vmatpush1.msra.mxu0 %v452
  %3251 = vmatprep.subr.mxu0 0.0
  %3252 = vmatpush1.msra.mxu0 %v453
  %3253 = vmatprep.subr.mxu0 0.0
  %3254 = vmatpush1.msra.mxu0 %v454
  %3255 = vmatprep.subr.mxu0 0.0
  %3256 = vmatpush1.msra.mxu0 %v455
  %3257 = vmatprep.subr.mxu0 0.0
  %3258 = vmatpush1.msra.mxu0 %v456
  %3259 = vmatprep.subr.mxu0 0.0
  %3260 = vmatpush1.msra.mxu0 %v457
  %3261 = vmatprep.subr.mxu0 0.0
  %3262 = vmatpush1.msra.mxu0 0.0
  %3263 = vmatprep.subr.mxu0 0.0
  %3264 = vmatpush1.msra.mxu0 0.0
  %3265 = vmatprep.subr.mxu0 0.0
  %3266 = vmatpush1.msra.mxu0 0.0
  %3267 = vmatprep.subr.mxu0 0.0
  %3268 = vmatpush1.msra.mxu0 0.0
  %3269 = vmatprep.subr.mxu0 0.0
  %3270 = vmatpush1.msra.mxu0 0.0
  %3271 = vmatprep.subr.mxu0 0.0
  %3272 = vmatpush1.msra.mxu0 0.0
  %3273 = vmatprep.subr.mxu0 0.0
  %3274 = vmatpush1.msra.mxu0 0.0
  %3275 = vmatprep.subr.mxu0 0.0
  %3276 = vmatpush1.msra.mxu0 0.0
  %3277 = vmatprep.subr.mxu0 0.0
  %3278 = vmatpush1.msra.mxu0 0.0
  %3279 = vmatprep.subr.mxu0 0.0
  %3280 = vmatpush1.msra.mxu0 0.0
  %3281 = vmatprep.subr.mxu0 0.0
  %3282 = vmatpush1.msra.mxu0 0.0
  %3283 = vmatprep.subr.mxu0 0.0
  %3284 = vmatpush1.msra.mxu0 0.0
  %3285 = vmatprep.subr.mxu0 0.0
  %3286 = vmatpush1.msra.mxu0 0.0
  %3287 = vmatprep.subr.mxu0 0.0
  %3288 = vmatpush1.msra.mxu0 0.0
  %3289 = vmatprep.subr.mxu0 0.0
  %3290 = vmatpush1.msra.mxu0 0.0
  %3291 = vmatprep.subr.mxu0 0.0
  %3292 = vmatpush1.msra.mxu0 0.0
  %3293 = vmatprep.subr.mxu0 0.0
  %3294 = vmatpush1.msra.mxu0 0.0
  %3295 = vmatprep.subr.mxu0 0.0
  %3296 = vmatpush1.msra.mxu0 0.0
  %3297 = vmatprep.subr.mxu0 0.0
  %3298 = vmatpush1.msra.mxu0 0.0
  %3299 = vmatprep.subr.mxu0 0.0
  %3300 = vmatpush1.msra.mxu0 0.0
  %3301 = vmatprep.subr.mxu0 0.0
  %3302 = vmatpush1.msra.mxu0 0.0
  %3303 = vmatprep.subr.mxu0 0.0
  %3304 = vmatpush1.msra.mxu0 0.0
  %3305 = vmatprep.subr.mxu0 0.0
  %3306 = vmatpush1.msra.mxu0 0.0
  %3307 = vmatprep.subr.mxu0 0.0
  %3308 = vmatpush1.msra.mxu0 0.0
  %3309 = vmatprep.subr.mxu0 0.0
  %3310 = vmatpush1.msra.mxu0 0.0
  %3311 = vmatprep.subr.mxu0 0.0
  %3312 = vmatpush1.msra.mxu0 0.0
  %3313 = vmatprep.mubr.f32.mxu0 0.0
  %3314 = vmatmul.mubr.f32.gmra.mrb[0].mxu0 %v3247
  %v3315 = vpop.f32.mrb[0].mxu0
  %v3316 = vadd.f32 %v732, %v3315
  %v3317 = vpop.f32.mrb[0].mxu0
  %3318 = vdwg.mxu0
  %v3319 = vxor.u32 %v3316, 2147483648
  %v3320 = vmul.f32 %v3319, 1.442695
  %v3321 = vpow.pop %v3320
  %v3322 = vadd.f32 %v3321, 1.0
  %v3323 = vrcp.pop %v3322
  %v3324 = vmul.f32 1.0, %v3323
  %v3325 = vtanh.pop %v3316
  %v3326 = vmul.f32 %v3324, %v2835
  %3328 = vrot.lane.b32.xlu0 %v3325, 64
  %v3329 = vpop.permute.xlu0 %3328
  %v3331 = vmul.f32 %v3324, %v3329
  %3333 = vrot.lane.b32.xlu0 %v3331, 32
  %v3334 = vpop.permute.xlu0 %3333
  %v3336 = vadd.f32 %v3326, %v3334
  %v3337 = vtanh.pop %v3336
  %3339 = vrot.lane.b32.xlu0 %v3337, 64
  %v3340 = vpop.permute.xlu0 %3339
  %v3342 = vmul.f32 %v3324, %v3340
  %3344 = vrot.lane.b32.xlu0 %v3342, 32
  %v3345 = vpop.permute.xlu0 %3344
  %v3346 = vsel %vm76, %v3345, 0
  %3348 = vmatprep.subr.mxu0 0.0
  %3349 = vmatpush1.msra.mxu0 %v459
  %3350 = vmatprep.subr.mxu0 0.0
  %3351 = vmatpush1.msra.mxu0 %v460
  %3352 = vmatprep.subr.mxu0 0.0
  %3353 = vmatpush1.msra.mxu0 %v461
  %3354 = vmatprep.subr.mxu0 0.0
  %3355 = vmatpush1.msra.mxu0 %v462
  %3356 = vmatprep.subr.mxu0 0.0
  %3357 = vmatpush1.msra.mxu0 0.0
  %3358 = vmatprep.subr.mxu0 0.0
  %3359 = vmatpush1.msra.mxu0 0.0
  %3360 = vmatprep.subr.mxu0 0.0
  %3361 = vmatpush1.msra.mxu0 0.0
  %3362 = vmatprep.subr.mxu0 0.0
  %3363 = vmatpush1.msra.mxu0 0.0
  %3364 = vmatprep.subr.mxu0 0.0
  %3365 = vmatpush1.msra.mxu0 0.0
  %3366 = vmatprep.subr.mxu0 0.0
  %3367 = vmatpush1.msra.mxu0 0.0
  %3368 = vmatprep.subr.mxu0 0.0
  %3369 = vmatpush1.msra.mxu0 0.0
  %3370 = vmatprep.subr.mxu0 0.0
  %3371 = vmatpush1.msra.mxu0 0.0
  %3372 = vmatprep.subr.mxu0 0.0
  %3373 = vmatpush1.msra.mxu0 0.0
  %3374 = vmatprep.subr.mxu0 0.0
  %3375 = vmatpush1.msra.mxu0 0.0
  %3376 = vmatprep.subr.mxu0 0.0
  %3377 = vmatpush1.msra.mxu0 0.0
  %3378 = vmatprep.subr.mxu0 0.0
  %3379 = vmatpush1.msra.mxu0 0.0
  %3380 = vmatprep.subr.mxu0 0.0
  %3381 = vmatpush1.msra.mxu0 0.0
  %3382 = vmatprep.subr.mxu0 0.0
  %3383 = vmatpush1.msra.mxu0 0.0
  %3384 = vmatprep.subr.mxu0 0.0
  %3385 = vmatpush1.msra.mxu0 0.0
  %3386 = vmatprep.subr.mxu0 0.0
  %3387 = vmatpush1.msra.mxu0 0.0
  %3388 = vmatprep.subr.mxu0 0.0
  %3389 = vmatpush1.msra.mxu0 0.0
  %3390 = vmatprep.subr.mxu0 0.0
  %3391 = vmatpush1.msra.mxu0 0.0
  %3392 = vmatprep.subr.mxu0 0.0
  %3393 = vmatpush1.msra.mxu0 0.0
  %3394 = vmatprep.subr.mxu0 0.0
  %3395 = vmatpush1.msra.mxu0 0.0
  %3396 = vmatprep.subr.mxu0 0.0
  %3397 = vmatpush1.msra.mxu0 0.0
  %3398 = vmatprep.subr.mxu0 0.0
  %3399 = vmatpush1.msra.mxu0 0.0
  %3400 = vmatprep.subr.mxu0 0.0
  %3401 = vmatpush1.msra.mxu0 0.0
  %3402 = vmatprep.subr.mxu0 0.0
  %3403 = vmatpush1.msra.mxu0 0.0
  %3404 = vmatprep.subr.mxu0 0.0
  %3405 = vmatpush1.msra.mxu0 0.0
  %3406 = vmatprep.subr.mxu0 0.0
  %3407 = vmatpush1.msra.mxu0 0.0
  %3408 = vmatprep.subr.mxu0 0.0
  %3409 = vmatpush1.msra.mxu0 0.0
  %3410 = vmatprep.subr.mxu0 0.0
  %3411 = vmatpush1.msra.mxu0 0.0
  %3412 = vmatprep.mubr.f32.mxu0 0.0
  %3413 = vmatmul.mubr.f32.gmra.mrb[0].mxu0 %v3346
  %v3414 = vpop.f32.mrb[0].mxu0
  %v3415 = vadd.f32 %v836, %v3414
  %v3416 = vpop.f32.mrb[0].mxu0
  %3417 = vdwg.mxu0
  %s3418 = scalar_lea.vmem %s18, 10
  %3419 = vst.msk [vmem:[%s3418] sm:$0x3] %vm913, %v3415
  %v3420 = vsel %vm913, %v3415, -inf
  %3421 = vmax.xlane.f32.xlu0 %v3420
  %v3422 = vpop.xlane.xlu0 %3421
  %vm3423 = vcmp.eq.f32.partialorder %v3415, %v3422
  %v3424 = vsel %vm3423, %v471, 16
  %v3425 = vsel %vm913, %v3424, 2147483647
  %v3426 = vand.u32 %v3425, 65535
  %v3427 = vshra.s32 %v3425, 16
  %v3428 = vcvt.s32.f32 %v3426
  %v3429 = vcvt.s32.f32 %v3427
  %3430 = vmin.xlane.f32.xlu0 %v3429
  %v3431 = vpop.xlane.xlu0 %3430
  %vm3432 = vcmp.eq.f32.partialorder %v3429, %v3431
  %v3433 = vsel %vm3432, %v3428, inf
  %3434 = vmin.xlane.f32.xlu0 %v3433
  %v3435 = vpop.xlane.xlu0 %3434
  %v3436 = vcvt.f32.s32 %v3435
  %v3437 = vcvt.f32.s32 %v3431
  %v3438 = vshll.u32 %v3437, 16
  %v3439 = vadd.s32 %v3438, %v3436
  %vm3440 = vcmp.eq.s32.totalorder %v471, %v3439
  %v3441 = vsel %vm3440, 1, 0
  %v3442 = vcvt.s32.f32 %v3441
  %3443 = vmatprep.subr.mxu0 0.0
  %3444 = vmatpush1.msra.mxu0 %v445
  %3445 = vmatprep.subr.mxu0 0.0
  %3446 = vmatpush1.msra.mxu0 %v446
  %3447 = vmatprep.subr.mxu0 0.0
  %3448 = vmatpush1.msra.mxu0 %v447
  %3449 = vmatprep.subr.mxu0 0.0
  %3450 = vmatpush1.msra.mxu0 %v448
  %3451 = vmatprep.subr.mxu0 0.0
  %3452 = vmatpush1.msra.mxu0 0.0
  %3453 = vmatprep.subr.mxu0 0.0
  %3454 = vmatpush1.msra.mxu0 0.0
  %3455 = vmatprep.subr.mxu0 0.0
  %3456 = vmatpush1.msra.mxu0 0.0
  %3457 = vmatprep.subr.mxu0 0.0
  %3458 = vmatpush1.msra.mxu0 0.0
  %3459 = vmatprep.subr.mxu0 0.0
  %3460 = vmatpush1.msra.mxu0 0.0
  %3461 = vmatprep.subr.mxu0 0.0
  %3462 = vmatpush1.msra.mxu0 0.0
  %3463 = vmatprep.subr.mxu0 0.0
  %3464 = vmatpush1.msra.mxu0 0.0
  %3465 = vmatprep.subr.mxu0 0.0
  %3466 = vmatpush1.msra.mxu0 0.0
  %3467 = vmatprep.subr.mxu0 0.0
  %3468 = vmatpush1.msra.mxu0 0.0
  %3469 = vmatprep.subr.mxu0 0.0
  %3470 = vmatpush1.msra.mxu0 0.0
  %3471 = vmatprep.subr.mxu0 0.0
  %3472 = vmatpush1.msra.mxu0 0.0
  %3473 = vmatprep.subr.mxu0 0.0
  %3474 = vmatpush1.msra.mxu0 0.0
  %3475 = vmatprep.subr.mxu0 0.0
  %3476 = vmatpush1.msra.mxu0 0.0
  %3477 = vmatprep.subr.mxu0 0.0
  %3478 = vmatpush1.msra.mxu0 0.0
  %3479 = vmatprep.subr.mxu0 0.0
  %3480 = vmatpush1.msra.mxu0 0.0
  %3481 = vmatprep.subr.mxu0 0.0
  %3482 = vmatpush1.msra.mxu0 0.0
  %3483 = vmatprep.subr.mxu0 0.0
  %3484 = vmatpush1.msra.mxu0 0.0
  %3485 = vmatprep.subr.mxu0 0.0
  %3486 = vmatpush1.msra.mxu0 0.0
  %3487 = vmatprep.subr.mxu0 0.0
  %3488 = vmatpush1.msra.mxu0 0.0
  %3489 = vmatprep.subr.mxu0 0.0
  %3490 = vmatpush1.msra.mxu0 0.0
  %3491 = vmatprep.subr.mxu0 0.0
  %3492 = vmatpush1.msra.mxu0 0.0
  %3493 = vmatprep.subr.mxu0 0.0
  %3494 = vmatpush1.msra.mxu0 0.0
  %3495 = vmatprep.subr.mxu0 0.0
  %3496 = vmatpush1.msra.mxu0 0.0
  %3497 = vmatprep.subr.mxu0 0.0
  %3498 = vmatpush1.msra.mxu0 0.0
  %3499 = vmatprep.subr.mxu0 0.0
  %3500 = vmatpush1.msra.mxu0 0.0
  %3501 = vmatprep.subr.mxu0 0.0
  %3502 = vmatpush1.msra.mxu0 0.0
  %3503 = vmatprep.subr.mxu0 0.0
  %3504 = vmatpush1.msra.mxu0 0.0
  %3505 = vmatprep.subr.mxu0 0.0
  %3506 = vmatpush1.msra.mxu0 0.0
  %3507 = vmatprep.mubr.f32.mxu0 0.0
  %3508 = vmatmul.mubr.f32.gmra.mrb[0].mxu0 %v3346
  %v3509 = vpop.f32.mrb[0].mxu0
  %v3510 = vadd.f32 %v476, %v3509
  %v3511 = vpop.f32.mrb[0].mxu0
  %3512 = vdwg.mxu0
  %v3515 = vunpack.c.l.s4 1966171168
  %v3516 = vunpack.c.0.s8 %v3515
  %v3517 = vlaneseq
  %v3518 = vshrl.u32 %v3517, 7
  %v3519 = vsub.s32 %v3516, %v3518
  %v3520 = vrot.slane %v3510, %v3519
  %v3521 = vcombine.high %v3520, %v3520
  %v3523 = vunpack.c.l.s4 1966171168
  %v3524 = vunpack.c.0.s8 %v3523
  %v3525 = vlaneseq
  %v3526 = vshrl.u32 %v3525, 7
  %v3527 = vsub.s32 %v3524, %v3526
  %v3528 = vrot.slane %v3520, %v3527
  %v3530 = vunpack.c.l.s4 1966171168
  %v3531 = vunpack.c.0.s8 %v3530
  %v3532 = vlaneseq
  %v3533 = vshrl.u32 %v3532, 7
  %v3534 = vsub.s32 %v3531, %v3533
  %v3535 = vrot.slane %v3521, %v3534
  %v3536 = vlaneseq
  %v3537 = vshrl.u32 %v3536, 7
  %v3538 = vsub.s32 0, %v3537
  %v3539 = vrot.slane %v3528, %v3538
  %v3540 = vlaneseq
  %v3541 = vshrl.u32 %v3540, 7
  %v3542 = vsub.s32 0, %v3541
  %v3543 = vrot.slane %v3535, %v3542
  %v3546 = vadd.f32 %v3539, %v243
  %v3547 = vadd.f32 %v3543, %v248
  %v3548 = vtanh.pop %v3546
  %v3549 = vtanh.pop %v3547
  %v3550 = vmul.f32 %v3548, %v592
  %v3551 = vmul.f32 %v3549, %v592
  %v3552 = vsel %vm169, %v3550, 0.0
  %3553 = vadd.xlane.f32.xlu0 %v3552
  %v3554 = vpop.xlane.xlu0 %3553
  %v3555 = vsel %vm169, %v3551, 0.0
  %3556 = vadd.xlane.f32.xlu0 %v3555
  %v3557 = vpop.xlane.xlu0 %3556
  %v3558 = vadd.f32 %v3554, %v609
  %v3559 = vadd.f32 %v3557, %v609
  %v3562 = vlaneseq
  %v3563 = vshrl.u32 %v3562, 7
  %v3564 = vsub.s32 %v471, %v3563
  %v3565 = vrot.slane %v3558, %v3564
  %v3566 = vlaneseq
  %v3567 = vshrl.u32 %v3566, 7
  %v3568 = vsub.s32 %v471, %v3567
  %v3569 = vrot.slane %v3559, %v3568
  %v3570 = vsel %vm279, %v3569, %v3565
  %v3572 = vsel %vm625, %v3570, -inf
  %3573 = vmax.xlane.f32.xlu0 %v3572
  %v3574 = vpop.xlane.xlu0 %3573
  %v3576 = vlaneseq
  %v3577 = vshrl.u32 %v3576, 7
  %v3578 = vsub.s32 0, %v3577
  %v3579 = vrot.slane %v3574, %v3578
  %v3580 = vlaneseq
  %v3581 = vshrl.u32 %v3580, 7
  %v3582 = vsub.s32 1, %v3581
  %v3583 = vrot.slane %v3574, %v3582
  %v3586 = vsub.f32 %v3558, %v3579
  %v3587 = vsub.f32 %v3559, %v3583
  %v3588 = vmul.f32 %v3586, 1.442695
  %v3589 = vpow.pop %v3588
  %v3590 = vmul.f32 %v3587, 1.442695
  %v3591 = vpow.pop %v3590
  %3594 = vset.pattern.permute.xlu0 0
  %3595 = vperm.xlu0 %3594, %v3589
  %v3596 = vpop.permute.xlu0 %3595
  %3597 = vset.pattern.permute.xlu0 0
  %3598 = vperm.xlu0 %3597, %v3591
  %v3599 = vpop.permute.xlu0 %3598
  %v3600 = vlaneseq
  %v3601 = vshrl.u32 %v3600, 7
  %v3602 = vsub.s32 %v471, %v3601
  %v3603 = vrot.slane %v3596, %v3602
  %v3604 = vlaneseq
  %v3605 = vshrl.u32 %v3604, 7
  %v3606 = vsub.s32 %v471, %v3605
  %v3607 = vrot.slane %v3599, %v3606
  %v3608 = vsel %vm279, %v3607, %v3603
  %v3610 = vsel %vm625, %v3608, 0.0
  %3611 = vadd.xlane.f32.xlu0 %v3610
  %v3612 = vpop.xlane.xlu0 %3611
  %v3614 = vlaneseq
  %v3615 = vshrl.u32 %v3614, 7
  %v3616 = vsub.s32 0, %v3615
  %v3617 = vrot.slane %v3612, %v3616
  %v3618 = vlaneseq
  %v3619 = vshrl.u32 %v3618, 7
  %v3620 = vsub.s32 1, %v3619
  %v3621 = vrot.slane %v3612, %v3620
  %v3624 = vrcp.pop %v3617
  %v3625 = vmul.f32 %v3589, %v3624
  %v3626 = vrcp.pop %v3621
  %v3627 = vmul.f32 %v3591, %v3626
  %3630 = vset.pattern.permute.xlu0 0
  %3631 = vperm.xlu0 %3630, %v3625
  %v3632 = vpop.permute.xlu0 %3631
  %3633 = vset.pattern.permute.xlu0 0
  %3634 = vperm.xlu0 %3633, %v3627
  %v3635 = vpop.permute.xlu0 %3634
  %v3636 = vlaneseq
  %v3637 = vshrl.u32 %v3636, 7
  %v3638 = vsub.s32 %v471, %v3637
  %v3639 = vrot.slane %v3632, %v3638
  %v3640 = vlaneseq
  %v3641 = vshrl.u32 %v3640, 7
  %v3642 = vsub.s32 %v471, %v3641
  %v3643 = vrot.slane %v3635, %v3642
  %v3644 = vsel %vm279, %v3643, %v3639
  %s3646 = scalar_lea.vmem %s19, 12
  %3647 = vst.msk [vmem:[%s3646] sm:$0x3] %vm625, %v3644
  %v3650 = vmul.f32 %v3632, %v158
  %v3651 = vmul.f32 %v3635, %v159
  %v3652 = vsel %vm169, %v3650, 0.0
  %v3653 = vrot.slane %v3652, 4
  %v3654 = vadd.f32 %v3652, %v3653
  %v3655 = vrot.slane %v3654, 2
  %v3656 = vadd.f32 %v3654, %v3655
  %v3657 = vrot.slane %v3656, 1
  %v3658 = vadd.f32 %v3656, %v3657
  %v3659 = vsel %vm169, %v3651, 0.0
  %v3660 = vrot.slane %v3659, 4
  %v3661 = vadd.f32 %v3659, %v3660
  %v3662 = vrot.slane %v3661, 2
  %v3663 = vadd.f32 %v3661, %v3662
  %v3664 = vrot.slane %v3663, 1
  %v3665 = vadd.f32 %v3663, %v3664
  %v3668 = vsel %vm279, %v3665, %v3658
  %v3671 = vsel %vm169, %v3442, 0
  %3673 = vmatprep.subr.mxu0 0.0
  %3674 = vmatpush1.msra.mxu0 %v464
  %3675 = vmatprep.subr.mxu0 0.0
  %3676 = vmatpush1.msra.mxu0 %v465
  %3677 = vmatprep.subr.mxu0 0.0
  %3678 = vmatpush1.msra.mxu0 0.0
  %3679 = vmatprep.subr.mxu0 0.0
  %3680 = vmatpush1.msra.mxu0 0.0
  %3681 = vmatprep.subr.mxu0 0.0
  %3682 = vmatpush1.msra.mxu0 0.0
  %3683 = vmatprep.subr.mxu0 0.0
  %3684 = vmatpush1.msra.mxu0 0.0
  %3685 = vmatprep.subr.mxu0 0.0
  %3686 = vmatpush1.msra.mxu0 0.0
  %3687 = vmatprep.subr.mxu0 0.0
  %3688 = vmatpush1.msra.mxu0 0.0
  %3689 = vmatprep.subr.mxu0 0.0
  %3690 = vmatpush1.msra.mxu0 0.0
  %3691 = vmatprep.subr.mxu0 0.0
  %3692 = vmatpush1.msra.mxu0 0.0
  %3693 = vmatprep.subr.mxu0 0.0
  %3694 = vmatpush1.msra.mxu0 0.0
  %3695 = vmatprep.subr.mxu0 0.0
  %3696 = vmatpush1.msra.mxu0 0.0
  %3697 = vmatprep.subr.mxu0 0.0
  %3698 = vmatpush1.msra.mxu0 0.0
  %3699 = vmatprep.subr.mxu0 0.0
  %3700 = vmatpush1.msra.mxu0 0.0
  %3701 = vmatprep.subr.mxu0 0.0
  %3702 = vmatpush1.msra.mxu0 0.0
  %3703 = vmatprep.subr.mxu0 0.0
  %3704 = vmatpush1.msra.mxu0 0.0
  %3705 = vmatprep.subr.mxu0 0.0
  %3706 = vmatpush1.msra.mxu0 0.0
  %3707 = vmatprep.subr.mxu0 0.0
  %3708 = vmatpush1.msra.mxu0 0.0
  %3709 = vmatprep.subr.mxu0 0.0
  %3710 = vmatpush1.msra.mxu0 0.0
  %3711 = vmatprep.subr.mxu0 0.0
  %3712 = vmatpush1.msra.mxu0 0.0
  %3713 = vmatprep.subr.mxu0 0.0
  %3714 = vmatpush1.msra.mxu0 0.0
  %3715 = vmatprep.subr.mxu0 0.0
  %3716 = vmatpush1.msra.mxu0 0.0
  %3717 = vmatprep.subr.mxu0 0.0
  %3718 = vmatpush1.msra.mxu0 0.0
  %3719 = vmatprep.subr.mxu0 0.0
  %3720 = vmatpush1.msra.mxu0 0.0
  %3721 = vmatprep.subr.mxu0 0.0
  %3722 = vmatpush1.msra.mxu0 0.0
  %3723 = vmatprep.subr.mxu0 0.0
  %3724 = vmatpush1.msra.mxu0 0.0
  %3725 = vmatprep.subr.mxu0 0.0
  %3726 = vmatpush1.msra.mxu0 0.0
  %3727 = vmatprep.subr.mxu0 0.0
  %3728 = vmatpush1.msra.mxu0 0.0
  %3729 = vmatprep.subr.mxu0 0.0
  %3730 = vmatpush1.msra.mxu0 0.0
  %3731 = vmatprep.subr.mxu0 0.0
  %3732 = vmatpush1.msra.mxu0 0.0
  %3733 = vmatprep.subr.mxu0 0.0
  %3734 = vmatpush1.msra.mxu0 0.0
  %3735 = vmatprep.subr.mxu0 0.0
  %3736 = vmatpush1.msra.mxu0 0.0
  %3737 = vmatprep.mubr.f32.mxu0 0.0
  %3738 = vmatmul.mubr.f32.gmra.mrb[0].mxu0 %v3671
  %v3739 = vpop.f32.mrb[0].mxu0
  %v3740 = vadd.f32 %v3668, %v3739
  %v3741 = vpop.f32.mrb[0].mxu0
  %3742 = vdwg.mxu0
  %3743 = vrot.lane.b32.xlu0 %v3342, 48
  %v3744 = vpop.permute.xlu0 %3743
  %v3746 = vsel %vm169, %v3740, %v3744
  %v3748 = vsel %vm734, %v3746, 0
  %3750 = vmatprep.subr.mxu0 0.0
  %3751 = vmatpush1.msra.mxu0 %v452
  %3752 = vmatprep.subr.mxu0 0.0
  %3753 = vmatpush1.msra.mxu0 %v453
  %3754 = vmatprep.subr.mxu0 0.0
  %3755 = vmatpush1.msra.mxu0 %v454
  %3756 = vmatprep.subr.mxu0 0.0
  %3757 = vmatpush1.msra.mxu0 %v455
  %3758 = vmatprep.subr.mxu0 0.0
  %3759 = vmatpush1.msra.mxu0 %v456
  %3760 = vmatprep.subr.mxu0 0.0
  %3761 = vmatpush1.msra.mxu0 %v457
  %3762 = vmatprep.subr.mxu0 0.0
  %3763 = vmatpush1.msra.mxu0 0.0
  %3764 = vmatprep.subr.mxu0 0.0
  %3765 = vmatpush1.msra.mxu0 0.0
  %3766 = vmatprep.subr.mxu0 0.0
  %3767 = vmatpush1.msra.mxu0 0.0
  %3768 = vmatprep.subr.mxu0 0.0
  %3769 = vmatpush1.msra.mxu0 0.0
  %3770 = vmatprep.subr.mxu0 0.0
  %3771 = vmatpush1.msra.mxu0 0.0
  %3772 = vmatprep.subr.mxu0 0.0
  %3773 = vmatpush1.msra.mxu0 0.0
  %3774 = vmatprep.subr.mxu0 0.0
  %3775 = vmatpush1.msra.mxu0 0.0
  %3776 = vmatprep.subr.mxu0 0.0
  %3777 = vmatpush1.msra.mxu0 0.0
  %3778 = vmatprep.subr.mxu0 0.0
  %3779 = vmatpush1.msra.mxu0 0.0
  %3780 = vmatprep.subr.mxu0 0.0
  %3781 = vmatpush1.msra.mxu0 0.0
  %3782 = vmatprep.subr.mxu0 0.0
  %3783 = vmatpush1.msra.mxu0 0.0
  %3784 = vmatprep.subr.mxu0 0.0
  %3785 = vmatpush1.msra.mxu0 0.0
  %3786 = vmatprep.subr.mxu0 0.0
  %3787 = vmatpush1.msra.mxu0 0.0
  %3788 = vmatprep.subr.mxu0 0.0
  %3789 = vmatpush1.msra.mxu0 0.0
  %3790 = vmatprep.subr.mxu0 0.0
  %3791 = vmatpush1.msra.mxu0 0.0
  %3792 = vmatprep.subr.mxu0 0.0
  %3793 = vmatpush1.msra.mxu0 0.0
  %3794 = vmatprep.subr.mxu0 0.0
  %3795 = vmatpush1.msra.mxu0 0.0
  %3796 = vmatprep.subr.mxu0 0.0
  %3797 = vmatpush1.msra.mxu0 0.0
  %3798 = vmatprep.subr.mxu0 0.0
  %3799 = vmatpush1.msra.mxu0 0.0
  %3800 = vmatprep.subr.mxu0 0.0
  %3801 = vmatpush1.msra.mxu0 0.0
  %3802 = vmatprep.subr.mxu0 0.0
  %3803 = vmatpush1.msra.mxu0 0.0
  %3804 = vmatprep.subr.mxu0 0.0
  %3805 = vmatpush1.msra.mxu0 0.0
  %3806 = vmatprep.subr.mxu0 0.0
  %3807 = vmatpush1.msra.mxu0 0.0
  %3808 = vmatprep.subr.mxu0 0.0
  %3809 = vmatpush1.msra.mxu0 0.0
  %3810 = vmatprep.subr.mxu0 0.0
  %3811 = vmatpush1.msra.mxu0 0.0
  %3812 = vmatprep.subr.mxu0 0.0
  %3813 = vmatpush1.msra.mxu0 0.0
  %3814 = vmatprep.mubr.f32.mxu0 0.0
  %3815 = vmatmul.mubr.f32.gmra.mrb[0].mxu0 %v3748
  %v3816 = vpop.f32.mrb[0].mxu0
  %v3817 = vadd.f32 %v732, %v3816
  %v3818 = vpop.f32.mrb[0].mxu0
  %3819 = vdwg.mxu0
  %v3820 = vxor.u32 %v3817, 2147483648
  %v3821 = vmul.f32 %v3820, 1.442695
  %v3822 = vpow.pop %v3821
  %v3823 = vadd.f32 %v3822, 1.0
  %v3824 = vrcp.pop %v3823
  %v3825 = vmul.f32 1.0, %v3824
  %v3826 = vtanh.pop %v3817
  %v3827 = vmul.f32 %v3825, %v3336
  %3829 = vrot.lane.b32.xlu0 %v3826, 64
  %v3830 = vpop.permute.xlu0 %3829
  %v3832 = vmul.f32 %v3825, %v3830
  %3834 = vrot.lane.b32.xlu0 %v3832, 32
  %v3835 = vpop.permute.xlu0 %3834
  %v3837 = vadd.f32 %v3827, %v3835
  %v3838 = vtanh.pop %v3837
  %3840 = vrot.lane.b32.xlu0 %v3838, 64
  %v3841 = vpop.permute.xlu0 %3840
  %v3843 = vmul.f32 %v3825, %v3841
  %3845 = vrot.lane.b32.xlu0 %v3843, 32
  %v3846 = vpop.permute.xlu0 %3845
  %v3847 = vsel %vm76, %v3846, 0
  %3849 = vmatprep.subr.mxu0 0.0
  %3850 = vmatpush1.msra.mxu0 %v459
  %3851 = vmatprep.subr.mxu0 0.0
  %3852 = vmatpush1.msra.mxu0 %v460
  %3853 = vmatprep.subr.mxu0 0.0
  %3854 = vmatpush1.msra.mxu0 %v461
  %3855 = vmatprep.subr.mxu0 0.0
  %3856 = vmatpush1.msra.mxu0 %v462
  %3857 = vmatprep.subr.mxu0 0.0
  %3858 = vmatpush1.msra.mxu0 0.0
  %3859 = vmatprep.subr.mxu0 0.0
  %3860 = vmatpush1.msra.mxu0 0.0
  %3861 = vmatprep.subr.mxu0 0.0
  %3862 = vmatpush1.msra.mxu0 0.0
  %3863 = vmatprep.subr.mxu0 0.0
  %3864 = vmatpush1.msra.mxu0 0.0
  %3865 = vmatprep.subr.mxu0 0.0
  %3866 = vmatpush1.msra.mxu0 0.0
  %3867 = vmatprep.subr.mxu0 0.0
  %3868 = vmatpush1.msra.mxu0 0.0
  %3869 = vmatprep.subr.mxu0 0.0
  %3870 = vmatpush1.msra.mxu0 0.0
  %3871 = vmatprep.subr.mxu0 0.0
  %3872 = vmatpush1.msra.mxu0 0.0
  %3873 = vmatprep.subr.mxu0 0.0
  %3874 = vmatpush1.msra.mxu0 0.0
  %3875 = vmatprep.subr.mxu0 0.0
  %3876 = vmatpush1.msra.mxu0 0.0
  %3877 = vmatprep.subr.mxu0 0.0
  %3878 = vmatpush1.msra.mxu0 0.0
  %3879 = vmatprep.subr.mxu0 0.0
  %3880 = vmatpush1.msra.mxu0 0.0
  %3881 = vmatprep.subr.mxu0 0.0
  %3882 = vmatpush1.msra.mxu0 0.0
  %3883 = vmatprep.subr.mxu0 0.0
  %3884 = vmatpush1.msra.mxu0 0.0
  %3885 = vmatprep.subr.mxu0 0.0
  %3886 = vmatpush1.msra.mxu0 0.0
  %3887 = vmatprep.subr.mxu0 0.0
  %3888 = vmatpush1.msra.mxu0 0.0
  %3889 = vmatprep.subr.mxu0 0.0
  %3890 = vmatpush1.msra.mxu0 0.0
  %3891 = vmatprep.subr.mxu0 0.0
  %3892 = vmatpush1.msra.mxu0 0.0
  %3893 = vmatprep.subr.mxu0 0.0
  %3894 = vmatpush1.msra.mxu0 0.0
  %3895 = vmatprep.subr.mxu0 0.0
  %3896 = vmatpush1.msra.mxu0 0.0
  %3897 = vmatprep.subr.mxu0 0.0
  %3898 = vmatpush1.msra.mxu0 0.0
  %3899 = vmatprep.subr.mxu0 0.0
  %3900 = vmatpush1.msra.mxu0 0.0
  %3901 = vmatprep.subr.mxu0 0.0
  %3902 = vmatpush1.msra.mxu0 0.0
  %3903 = vmatprep.subr.mxu0 0.0
  %3904 = vmatpush1.msra.mxu0 0.0
  %3905 = vmatprep.subr.mxu0 0.0
  %3906 = vmatpush1.msra.mxu0 0.0
  %3907 = vmatprep.subr.mxu0 0.0
  %3908 = vmatpush1.msra.mxu0 0.0
  %3909 = vmatprep.subr.mxu0 0.0
  %3910 = vmatpush1.msra.mxu0 0.0
  %3911 = vmatprep.subr.mxu0 0.0
  %3912 = vmatpush1.msra.mxu0 0.0
  %3913 = vmatprep.mubr.f32.mxu0 0.0
  %3914 = vmatmul.mubr.f32.gmra.mrb[0].mxu0 %v3847
  %v3915 = vpop.f32.mrb[0].mxu0
  %v3916 = vadd.f32 %v836, %v3915
  %v3917 = vpop.f32.mrb[0].mxu0
  %3918 = vdwg.mxu0
  %s3919 = scalar_lea.vmem %s18, 12
  %3920 = vst.msk [vmem:[%s3919] sm:$0x3] %vm913, %v3916
  %v3921 = vsel %vm913, %v3916, -inf
  %3922 = vmax.xlane.f32.xlu0 %v3921
  %v3923 = vpop.xlane.xlu0 %3922
  %vm3924 = vcmp.eq.f32.partialorder %v3916, %v3923
  %v3925 = vsel %vm3924, %v471, 16
  %v3926 = vsel %vm913, %v3925, 2147483647
  %v3927 = vand.u32 %v3926, 65535
  %v3928 = vshra.s32 %v3926, 16
  %v3929 = vcvt.s32.f32 %v3927
  %v3930 = vcvt.s32.f32 %v3928
  %3931 = vmin.xlane.f32.xlu0 %v3930
  %v3932 = vpop.xlane.xlu0 %3931
  %vm3933 = vcmp.eq.f32.partialorder %v3930, %v3932
  %v3934 = vsel %vm3933, %v3929, inf
  %3935 = vmin.xlane.f32.xlu0 %v3934
  %v3936 = vpop.xlane.xlu0 %3935
  %v3937 = vcvt.f32.s32 %v3936
  %v3938 = vcvt.f32.s32 %v3932
  %v3939 = vshll.u32 %v3938, 16
  %v3940 = vadd.s32 %v3939, %v3937
  %vm3941 = vcmp.eq.s32.totalorder %v471, %v3940
  %v3942 = vsel %vm3941, 1, 0
  %v3943 = vcvt.s32.f32 %v3942
  %3944 = vmatprep.subr.mxu0 0.0
  %3945 = vmatpush1.msra.mxu0 %v445
  %3946 = vmatprep.subr.mxu0 0.0
  %3947 = vmatpush1.msra.mxu0 %v446
  %3948 = vmatprep.subr.mxu0 0.0
  %3949 = vmatpush1.msra.mxu0 %v447
  %3950 = vmatprep.subr.mxu0 0.0
  %3951 = vmatpush1.msra.mxu0 %v448
  %3952 = vmatprep.subr.mxu0 0.0
  %3953 = vmatpush1.msra.mxu0 0.0
  %3954 = vmatprep.subr.mxu0 0.0
  %3955 = vmatpush1.msra.mxu0 0.0
  %3956 = vmatprep.subr.mxu0 0.0
  %3957 = vmatpush1.msra.mxu0 0.0
  %3958 = vmatprep.subr.mxu0 0.0
  %3959 = vmatpush1.msra.mxu0 0.0
  %3960 = vmatprep.subr.mxu0 0.0
  %3961 = vmatpush1.msra.mxu0 0.0
  %3962 = vmatprep.subr.mxu0 0.0
  %3963 = vmatpush1.msra.mxu0 0.0
  %3964 = vmatprep.subr.mxu0 0.0
  %3965 = vmatpush1.msra.mxu0 0.0
  %3966 = vmatprep.subr.mxu0 0.0
  %3967 = vmatpush1.msra.mxu0 0.0
  %3968 = vmatprep.subr.mxu0 0.0
  %3969 = vmatpush1.msra.mxu0 0.0
  %3970 = vmatprep.subr.mxu0 0.0
  %3971 = vmatpush1.msra.mxu0 0.0
  %3972 = vmatprep.subr.mxu0 0.0
  %3973 = vmatpush1.msra.mxu0 0.0
  %3974 = vmatprep.subr.mxu0 0.0
  %3975 = vmatpush1.msra.mxu0 0.0
  %3976 = vmatprep.subr.mxu0 0.0
  %3977 = vmatpush1.msra.mxu0 0.0
  %3978 = vmatprep.subr.mxu0 0.0
  %3979 = vmatpush1.msra.mxu0 0.0
  %3980 = vmatprep.subr.mxu0 0.0
  %3981 = vmatpush1.msra.mxu0 0.0
  %3982 = vmatprep.subr.mxu0 0.0
  %3983 = vmatpush1.msra.mxu0 0.0
  %3984 = vmatprep.subr.mxu0 0.0
  %3985 = vmatpush1.msra.mxu0 0.0
  %3986 = vmatprep.subr.mxu0 0.0
  %3987 = vmatpush1.msra.mxu0 0.0
  %3988 = vmatprep.subr.mxu0 0.0
  %3989 = vmatpush1.msra.mxu0 0.0
  %3990 = vmatprep.subr.mxu0 0.0
  %3991 = vmatpush1.msra.mxu0 0.0
  %3992 = vmatprep.subr.mxu0 0.0
  %3993 = vmatpush1.msra.mxu0 0.0
  %3994 = vmatprep.subr.mxu0 0.0
  %3995 = vmatpush1.msra.mxu0 0.0
  %3996 = vmatprep.subr.mxu0 0.0
  %3997 = vmatpush1.msra.mxu0 0.0
  %3998 = vmatprep.subr.mxu0 0.0
  %3999 = vmatpush1.msra.mxu0 0.0
  %4000 = vmatprep.subr.mxu0 0.0
  %4001 = vmatpush1.msra.mxu0 0.0
  %4002 = vmatprep.subr.mxu0 0.0
  %4003 = vmatpush1.msra.mxu0 0.0
  %4004 = vmatprep.subr.mxu0 0.0
  %4005 = vmatpush1.msra.mxu0 0.0
  %4006 = vmatprep.subr.mxu0 0.0
  %4007 = vmatpush1.msra.mxu0 0.0
  %4008 = vmatprep.mubr.f32.mxu0 0.0
  %4009 = vmatmul.mubr.f32.gmra.mrb[0].mxu0 %v3847
  %v4010 = vpop.f32.mrb[0].mxu0
  %v4011 = vadd.f32 %v476, %v4010
  %v4012 = vpop.f32.mrb[0].mxu0
  %4013 = vdwg.mxu0
  %v4016 = vunpack.c.l.s4 1966171168
  %v4017 = vunpack.c.0.s8 %v4016
  %v4018 = vlaneseq
  %v4019 = vshrl.u32 %v4018, 7
  %v4020 = vsub.s32 %v4017, %v4019
  %v4021 = vrot.slane %v4011, %v4020
  %v4022 = vcombine.high %v4021, %v4021
  %v4024 = vunpack.c.l.s4 1966171168
  %v4025 = vunpack.c.0.s8 %v4024
  %v4026 = vlaneseq
  %v4027 = vshrl.u32 %v4026, 7
  %v4028 = vsub.s32 %v4025, %v4027
  %v4029 = vrot.slane %v4021, %v4028
  %v4031 = vunpack.c.l.s4 1966171168
  %v4032 = vunpack.c.0.s8 %v4031
  %v4033 = vlaneseq
  %v4034 = vshrl.u32 %v4033, 7
  %v4035 = vsub.s32 %v4032, %v4034
  %v4036 = vrot.slane %v4022, %v4035
  %v4037 = vlaneseq
  %v4038 = vshrl.u32 %v4037, 7
  %v4039 = vsub.s32 0, %v4038
  %v4040 = vrot.slane %v4029, %v4039
  %v4041 = vlaneseq
  %v4042 = vshrl.u32 %v4041, 7
  %v4043 = vsub.s32 0, %v4042
  %v4044 = vrot.slane %v4036, %v4043
  %v4047 = vadd.f32 %v4040, %v243
  %v4048 = vadd.f32 %v4044, %v248
  %v4049 = vtanh.pop %v4047
  %v4050 = vtanh.pop %v4048
  %v4051 = vmul.f32 %v4049, %v592
  %v4052 = vmul.f32 %v4050, %v592
  %v4053 = vsel %vm169, %v4051, 0.0
  %4054 = vadd.xlane.f32.xlu0 %v4053
  %v4055 = vpop.xlane.xlu0 %4054
  %v4056 = vsel %vm169, %v4052, 0.0
  %4057 = vadd.xlane.f32.xlu0 %v4056
  %v4058 = vpop.xlane.xlu0 %4057
  %v4059 = vadd.f32 %v4055, %v609
  %v4060 = vadd.f32 %v4058, %v609
  %v4063 = vlaneseq
  %v4064 = vshrl.u32 %v4063, 7
  %v4065 = vsub.s32 %v471, %v4064
  %v4066 = vrot.slane %v4059, %v4065
  %v4067 = vlaneseq
  %v4068 = vshrl.u32 %v4067, 7
  %v4069 = vsub.s32 %v471, %v4068
  %v4070 = vrot.slane %v4060, %v4069
  %v4071 = vsel %vm279, %v4070, %v4066
  %v4073 = vsel %vm625, %v4071, -inf
  %4074 = vmax.xlane.f32.xlu0 %v4073
  %v4075 = vpop.xlane.xlu0 %4074
  %v4077 = vlaneseq
  %v4078 = vshrl.u32 %v4077, 7
  %v4079 = vsub.s32 0, %v4078
  %v4080 = vrot.slane %v4075, %v4079
  %v4081 = vlaneseq
  %v4082 = vshrl.u32 %v4081, 7
  %v4083 = vsub.s32 1, %v4082
  %v4084 = vrot.slane %v4075, %v4083
  %v4087 = vsub.f32 %v4059, %v4080
  %v4088 = vsub.f32 %v4060, %v4084
  %v4089 = vmul.f32 %v4087, 1.442695
  %v4090 = vpow.pop %v4089
  %v4091 = vmul.f32 %v4088, 1.442695
  %v4092 = vpow.pop %v4091
  %4095 = vset.pattern.permute.xlu0 0
  %4096 = vperm.xlu0 %4095, %v4090
  %v4097 = vpop.permute.xlu0 %4096
  %4098 = vset.pattern.permute.xlu0 0
  %4099 = vperm.xlu0 %4098, %v4092
  %v4100 = vpop.permute.xlu0 %4099
  %v4101 = vlaneseq
  %v4102 = vshrl.u32 %v4101, 7
  %v4103 = vsub.s32 %v471, %v4102
  %v4104 = vrot.slane %v4097, %v4103
  %v4105 = vlaneseq
  %v4106 = vshrl.u32 %v4105, 7
  %v4107 = vsub.s32 %v471, %v4106
  %v4108 = vrot.slane %v4100, %v4107
  %v4109 = vsel %vm279, %v4108, %v4104
  %v4111 = vsel %vm625, %v4109, 0.0
  %4112 = vadd.xlane.f32.xlu0 %v4111
  %v4113 = vpop.xlane.xlu0 %4112
  %v4115 = vlaneseq
  %v4116 = vshrl.u32 %v4115, 7
  %v4117 = vsub.s32 0, %v4116
  %v4118 = vrot.slane %v4113, %v4117
  %v4119 = vlaneseq
  %v4120 = vshrl.u32 %v4119, 7
  %v4121 = vsub.s32 1, %v4120
  %v4122 = vrot.slane %v4113, %v4121
  %v4125 = vrcp.pop %v4118
  %v4126 = vmul.f32 %v4090, %v4125
  %v4127 = vrcp.pop %v4122
  %v4128 = vmul.f32 %v4092, %v4127
  %4131 = vset.pattern.permute.xlu0 0
  %4132 = vperm.xlu0 %4131, %v4126
  %v4133 = vpop.permute.xlu0 %4132
  %4134 = vset.pattern.permute.xlu0 0
  %4135 = vperm.xlu0 %4134, %v4128
  %v4136 = vpop.permute.xlu0 %4135
  %v4137 = vlaneseq
  %v4138 = vshrl.u32 %v4137, 7
  %v4139 = vsub.s32 %v471, %v4138
  %v4140 = vrot.slane %v4133, %v4139
  %v4141 = vlaneseq
  %v4142 = vshrl.u32 %v4141, 7
  %v4143 = vsub.s32 %v471, %v4142
  %v4144 = vrot.slane %v4136, %v4143
  %v4145 = vsel %vm279, %v4144, %v4140
  %s4147 = scalar_lea.vmem %s19, 14
  %4148 = vst.msk [vmem:[%s4147] sm:$0x3] %vm625, %v4145
  %v4151 = vmul.f32 %v4133, %v158
  %v4152 = vmul.f32 %v4136, %v159
  %v4153 = vsel %vm169, %v4151, 0.0
  %v4154 = vrot.slane %v4153, 4
  %v4155 = vadd.f32 %v4153, %v4154
  %v4156 = vrot.slane %v4155, 2
  %v4157 = vadd.f32 %v4155, %v4156
  %v4158 = vrot.slane %v4157, 1
  %v4159 = vadd.f32 %v4157, %v4158
  %v4160 = vsel %vm169, %v4152, 0.0
  %v4161 = vrot.slane %v4160, 4
  %v4162 = vadd.f32 %v4160, %v4161
  %v4163 = vrot.slane %v4162, 2
  %v4164 = vadd.f32 %v4162, %v4163
  %v4165 = vrot.slane %v4164, 1
  %v4166 = vadd.f32 %v4164, %v4165
  %v4169 = vsel %vm279, %v4166, %v4159
  %v4172 = vsel %vm169, %v3943, 0
  %4174 = vmatprep.subr.mxu0 0.0
  %4175 = vmatpush1.msra.mxu0 %v464
  %4176 = vmatprep.subr.mxu0 0.0
  %4177 = vmatpush1.msra.mxu0 %v465
  %4178 = vmatprep.subr.mxu0 0.0
  %4179 = vmatpush1.msra.mxu0 0.0
  %4180 = vmatprep.subr.mxu0 0.0
  %4181 = vmatpush1.msra.mxu0 0.0
  %4182 = vmatprep.subr.mxu0 0.0
  %4183 = vmatpush1.msra.mxu0 0.0
  %4184 = vmatprep.subr.mxu0 0.0
  %4185 = vmatpush1.msra.mxu0 0.0
  %4186 = vmatprep.subr.mxu0 0.0
  %4187 = vmatpush1.msra.mxu0 0.0
  %4188 = vmatprep.subr.mxu0 0.0
  %4189 = vmatpush1.msra.mxu0 0.0
  %4190 = vmatprep.subr.mxu0 0.0
  %4191 = vmatpush1.msra.mxu0 0.0
  %4192 = vmatprep.subr.mxu0 0.0
  %4193 = vmatpush1.msra.mxu0 0.0
  %4194 = vmatprep.subr.mxu0 0.0
  %4195 = vmatpush1.msra.mxu0 0.0
  %4196 = vmatprep.subr.mxu0 0.0
  %4197 = vmatpush1.msra.mxu0 0.0
  %4198 = vmatprep.subr.mxu0 0.0
  %4199 = vmatpush1.msra.mxu0 0.0
  %4200 = vmatprep.subr.mxu0 0.0
  %4201 = vmatpush1.msra.mxu0 0.0
  %4202 = vmatprep.subr.mxu0 0.0
  %4203 = vmatpush1.msra.mxu0 0.0
  %4204 = vmatprep.subr.mxu0 0.0
  %4205 = vmatpush1.msra.mxu0 0.0
  %4206 = vmatprep.subr.mxu0 0.0
  %4207 = vmatpush1.msra.mxu0 0.0
  %4208 = vmatprep.subr.mxu0 0.0
  %4209 = vmatpush1.msra.mxu0 0.0
  %4210 = vmatprep.subr.mxu0 0.0
  %4211 = vmatpush1.msra.mxu0 0.0
  %4212 = vmatprep.subr.mxu0 0.0
  %4213 = vmatpush1.msra.mxu0 0.0
  %4214 = vmatprep.subr.mxu0 0.0
  %4215 = vmatpush1.msra.mxu0 0.0
  %4216 = vmatprep.subr.mxu0 0.0
  %4217 = vmatpush1.msra.mxu0 0.0
  %4218 = vmatprep.subr.mxu0 0.0
  %4219 = vmatpush1.msra.mxu0 0.0
  %4220 = vmatprep.subr.mxu0 0.0
  %4221 = vmatpush1.msra.mxu0 0.0
  %4222 = vmatprep.subr.mxu0 0.0
  %4223 = vmatpush1.msra.mxu0 0.0
  %4224 = vmatprep.subr.mxu0 0.0
  %4225 = vmatpush1.msra.mxu0 0.0
  %4226 = vmatprep.subr.mxu0 0.0
  %4227 = vmatpush1.msra.mxu0 0.0
  %4228 = vmatprep.subr.mxu0 0.0
  %4229 = vmatpush1.msra.mxu0 0.0
  %4230 = vmatprep.subr.mxu0 0.0
  %4231 = vmatpush1.msra.mxu0 0.0
  %4232 = vmatprep.subr.mxu0 0.0
  %4233 = vmatpush1.msra.mxu0 0.0
  %4234 = vmatprep.subr.mxu0 0.0
  %4235 = vmatpush1.msra.mxu0 0.0
  %4236 = vmatprep.subr.mxu0 0.0
  %4237 = vmatpush1.msra.mxu0 0.0
  %4238 = vmatprep.mubr.f32.mxu0 0.0
  %4239 = vmatmul.mubr.f32.gmra.mrb[0].mxu0 %v4172
  %v4240 = vpop.f32.mrb[0].mxu0
  %v4241 = vadd.f32 %v4169, %v4240
  %v4242 = vpop.f32.mrb[0].mxu0
  %4243 = vdwg.mxu0
  %4244 = vrot.lane.b32.xlu0 %v3843, 48
  %v4245 = vpop.permute.xlu0 %4244
  %v4247 = vsel %vm169, %v4241, %v4245
  %v4249 = vsel %vm734, %v4247, 0
  %4251 = vmatprep.subr.mxu0 0.0
  %4252 = vmatpush1.msra.mxu0 %v452
  %4253 = vmatprep.subr.mxu0 0.0
  %4254 = vmatpush1.msra.mxu0 %v453
  %4255 = vmatprep.subr.mxu0 0.0
  %4256 = vmatpush1.msra.mxu0 %v454
  %4257 = vmatprep.subr.mxu0 0.0
  %4258 = vmatpush1.msra.mxu0 %v455
  %4259 = vmatprep.subr.mxu0 0.0
  %4260 = vmatpush1.msra.mxu0 %v456
  %4261 = vmatprep.subr.mxu0 0.0
  %4262 = vmatpush1.msra.mxu0 %v457
  %4263 = vmatprep.subr.mxu0 0.0
  %4264 = vmatpush1.msra.mxu0 0.0
  %4265 = vmatprep.subr.mxu0 0.0
  %4266 = vmatpush1.msra.mxu0 0.0
  %4267 = vmatprep.subr.mxu0 0.0
  %4268 = vmatpush1.msra.mxu0 0.0
  %4269 = vmatprep.subr.mxu0 0.0
  %4270 = vmatpush1.msra.mxu0 0.0
  %4271 = vmatprep.subr.mxu0 0.0
  %4272 = vmatpush1.msra.mxu0 0.0
  %4273 = vmatprep.subr.mxu0 0.0
  %4274 = vmatpush1.msra.mxu0 0.0
  %4275 = vmatprep.subr.mxu0 0.0
  %4276 = vmatpush1.msra.mxu0 0.0
  %4277 = vmatprep.subr.mxu0 0.0
  %4278 = vmatpush1.msra.mxu0 0.0
  %4279 = vmatprep.subr.mxu0 0.0
  %4280 = vmatpush1.msra.mxu0 0.0
  %4281 = vmatprep.subr.mxu0 0.0
  %4282 = vmatpush1.msra.mxu0 0.0
  %4283 = vmatprep.subr.mxu0 0.0
  %4284 = vmatpush1.msra.mxu0 0.0
  %4285 = vmatprep.subr.mxu0 0.0
  %4286 = vmatpush1.msra.mxu0 0.0
  %4287 = vmatprep.subr.mxu0 0.0
  %4288 = vmatpush1.msra.mxu0 0.0
  %4289 = vmatprep.subr.mxu0 0.0
  %4290 = vmatpush1.msra.mxu0 0.0
  %4291 = vmatprep.subr.mxu0 0.0
  %4292 = vmatpush1.msra.mxu0 0.0
  %4293 = vmatprep.subr.mxu0 0.0
  %4294 = vmatpush1.msra.mxu0 0.0
  %4295 = vmatprep.subr.mxu0 0.0
  %4296 = vmatpush1.msra.mxu0 0.0
  %4297 = vmatprep.subr.mxu0 0.0
  %4298 = vmatpush1.msra.mxu0 0.0
  %4299 = vmatprep.subr.mxu0 0.0
  %4300 = vmatpush1.msra.mxu0 0.0
  %4301 = vmatprep.subr.mxu0 0.0
  %4302 = vmatpush1.msra.mxu0 0.0
  %4303 = vmatprep.subr.mxu0 0.0
  %4304 = vmatpush1.msra.mxu0 0.0
  %4305 = vmatprep.subr.mxu0 0.0
  %4306 = vmatpush1.msra.mxu0 0.0
  %4307 = vmatprep.subr.mxu0 0.0
  %4308 = vmatpush1.msra.mxu0 0.0
  %4309 = vmatprep.subr.mxu0 0.0
  %4310 = vmatpush1.msra.mxu0 0.0
  %4311 = vmatprep.subr.mxu0 0.0
  %4312 = vmatpush1.msra.mxu0 0.0
  %4313 = vmatprep.subr.mxu0 0.0
  %4314 = vmatpush1.msra.mxu0 0.0
  %4315 = vmatprep.mubr.f32.mxu0 0.0
  %4316 = vmatmul.mubr.f32.gmra.mrb[0].mxu0 %v4249
  %v4317 = vpop.f32.mrb[0].mxu0
  %v4318 = vadd.f32 %v732, %v4317
  %v4319 = vpop.f32.mrb[0].mxu0
  %4320 = vdwg.mxu0
  %v4321 = vxor.u32 %v4318, 2147483648
  %v4322 = vmul.f32 %v4321, 1.442695
  %v4323 = vpow.pop %v4322
  %v4324 = vadd.f32 %v4323, 1.0
  %v4325 = vrcp.pop %v4324
  %v4326 = vmul.f32 1.0, %v4325
  %v4327 = vtanh.pop %v4318
  %v4328 = vmul.f32 %v4326, %v3837
  %4330 = vrot.lane.b32.xlu0 %v4327, 64
  %v4331 = vpop.permute.xlu0 %4330
  %v4333 = vmul.f32 %v4326, %v4331
  %4335 = vrot.lane.b32.xlu0 %v4333, 32
  %v4336 = vpop.permute.xlu0 %4335
  %v4338 = vadd.f32 %v4328, %v4336
  %v4339 = vtanh.pop %v4338
  %4341 = vrot.lane.b32.xlu0 %v4339, 64
  %v4342 = vpop.permute.xlu0 %4341
  %v4344 = vmul.f32 %v4326, %v4342
  %4346 = vrot.lane.b32.xlu0 %v4344, 32
  %v4347 = vpop.permute.xlu0 %4346
  %v4348 = vsel %vm76, %v4347, 0
  %4350 = vmatprep.subr.mxu0 0.0
  %4351 = vmatpush1.msra.mxu0 %v459
  %4352 = vmatprep.subr.mxu0 0.0
  %4353 = vmatpush1.msra.mxu0 %v460
  %4354 = vmatprep.subr.mxu0 0.0
  %4355 = vmatpush1.msra.mxu0 %v461
  %4356 = vmatprep.subr.mxu0 0.0
  %4357 = vmatpush1.msra.mxu0 %v462
  %4358 = vmatprep.subr.mxu0 0.0
  %4359 = vmatpush1.msra.mxu0 0.0
  %4360 = vmatprep.subr.mxu0 0.0
  %4361 = vmatpush1.msra.mxu0 0.0
  %4362 = vmatprep.subr.mxu0 0.0
  %4363 = vmatpush1.msra.mxu0 0.0
  %4364 = vmatprep.subr.mxu0 0.0
  %4365 = vmatpush1.msra.mxu0 0.0
  %4366 = vmatprep.subr.mxu0 0.0
  %4367 = vmatpush1.msra.mxu0 0.0
  %4368 = vmatprep.subr.mxu0 0.0
  %4369 = vmatpush1.msra.mxu0 0.0
  %4370 = vmatprep.subr.mxu0 0.0
  %4371 = vmatpush1.msra.mxu0 0.0
  %4372 = vmatprep.subr.mxu0 0.0
  %4373 = vmatpush1.msra.mxu0 0.0
  %4374 = vmatprep.subr.mxu0 0.0
  %4375 = vmatpush1.msra.mxu0 0.0
  %4376 = vmatprep.subr.mxu0 0.0
  %4377 = vmatpush1.msra.mxu0 0.0
  %4378 = vmatprep.subr.mxu0 0.0
  %4379 = vmatpush1.msra.mxu0 0.0
  %4380 = vmatprep.subr.mxu0 0.0
  %4381 = vmatpush1.msra.mxu0 0.0
  %4382 = vmatprep.subr.mxu0 0.0
  %4383 = vmatpush1.msra.mxu0 0.0
  %4384 = vmatprep.subr.mxu0 0.0
  %4385 = vmatpush1.msra.mxu0 0.0
  %4386 = vmatprep.subr.mxu0 0.0
  %4387 = vmatpush1.msra.mxu0 0.0
  %4388 = vmatprep.subr.mxu0 0.0
  %4389 = vmatpush1.msra.mxu0 0.0
  %4390 = vmatprep.subr.mxu0 0.0
  %4391 = vmatpush1.msra.mxu0 0.0
  %4392 = vmatprep.subr.mxu0 0.0
  %4393 = vmatpush1.msra.mxu0 0.0
  %4394 = vmatprep.subr.mxu0 0.0
  %4395 = vmatpush1.msra.mxu0 0.0
  %4396 = vmatprep.subr.mxu0 0.0
  %4397 = vmatpush1.msra.mxu0 0.0
  %4398 = vmatprep.subr.mxu0 0.0
  %4399 = vmatpush1.msra.mxu0 0.0
  %4400 = vmatprep.subr.mxu0 0.0
  %4401 = vmatpush1.msra.mxu0 0.0
  %4402 = vmatprep.subr.mxu0 0.0
  %4403 = vmatpush1.msra.mxu0 0.0
  %4404 = vmatprep.subr.mxu0 0.0
  %4405 = vmatpush1.msra.mxu0 0.0
  %4406 = vmatprep.subr.mxu0 0.0
  %4407 = vmatpush1.msra.mxu0 0.0
  %4408 = vmatprep.subr.mxu0 0.0
  %4409 = vmatpush1.msra.mxu0 0.0
  %4410 = vmatprep.subr.mxu0 0.0
  %4411 = vmatpush1.msra.mxu0 0.0
  %4412 = vmatprep.subr.mxu0 0.0
  %4413 = vmatpush1.msra.mxu0 0.0
  %4414 = vmatprep.mubr.f32.mxu0 0.0
  %4415 = vmatmul.mubr.f32.gmra.mrb[0].mxu0 %v4348
  %v4416 = vpop.f32.mrb[0].mxu0
  %v4417 = vadd.f32 %v836, %v4416
  %v4418 = vpop.f32.mrb[0].mxu0
  %4419 = vdwg.mxu0
  %s4420 = scalar_lea.vmem %s18, 14
  %4421 = vst.msk [vmem:[%s4420] sm:$0x3] %vm913, %v4417
  // Predicated region
  $region74: #{language_model_forward.1} parent=0 // pred_check
    _
  $region75: #{language_model_forward.1} parent=0 // pred_check_branch
    %4423 = sbr.rel (0) target = $region77
  $region76: #{language_model_forward.1} parent=0 // pred_region
    _
  $region77: #{language_model_forward.1} parent=0 // pred_fallthru
    _
  // Predicated region
  $region78: #{language_model_forward.1} parent=0 // pred_check
    _
  $region79: #{language_model_forward.1} parent=0 // pred_check_branch
    %4425 = sbr.rel (0) target = $region81
  $region80: #{language_model_forward.1} parent=0 // pred_region
    _
  $region81: #{language_model_forward.1} parent=0 // pred_fallthru
    _
  // Predicated region
  $region82: #{language_model_forward.1} parent=0 // pred_check
    _
  $region83: #{language_model_forward.1} parent=0 // pred_check_branch
    %4427 = sbr.rel (0) target = $region85
  $region84: #{language_model_forward.1} parent=0 // pred_region
    _
  $region85: #{language_model_forward.1} parent=0 // pred_fallthru
    _
  // Predicated region
  $region86: #{language_model_forward.1} parent=0 // pred_check
    _
  $region87: #{language_model_forward.1} parent=0 // pred_check_branch
    %4429 = sbr.rel (0) target = $region89
  $region88: #{language_model_forward.1} parent=0 // pred_region
    _
  $region89: #{language_model_forward.1} parent=0 // pred_fallthru
    _

</llo_original>
